<compile_context>
chip_gen: v7x
topology: tpu7x:2x2x1
jax: 0.10.0
libtpu: 0.0.40
codegen_flags: <defaults>
</compile_context>

<pallas_src>
import functools

import jax
import jax.numpy as jnp
import numpy as np
from jax import lax
from jax.experimental import pallas as pl
from jax.experimental.pallas import tpu as pltpu


def _round_up(x, m):
    return ((x + m - 1) // m) * m


# ------------------------------ fused kernel ---------------------------------
def _make_fused_kernel(L, T, Bp, H, HP, IP, GS, GW):
    """Kernel closed over static sizes.

    Ref order: tok, h0, [w_ih, w_hh, b_gates, b_hh_n] * L, fc_w, fc_b,
               out, h_final, gibuf, buf0, buf1 (scratch).

    GS = gate lane stride inside the packed gate dim (gate g occupies lanes
    [g*GS, g*GS + H)); GW = padded width of the packed gate dim.
    """
    TB = T * Bp

    def kernel(*refs):
        tok_ref, h0_ref = refs[0], refs[1]
        layer_refs = [refs[2 + 4 * l: 6 + 4 * l] for l in range(L)]
        fc_w_ref = refs[2 + 4 * L]
        fc_b_ref = refs[3 + 4 * L]
        out_ref = refs[4 + 4 * L]
        hfin_ref = refs[5 + 4 * L]
        gibuf = refs[6 + 4 * L]                 # (TB, GW) VMEM scratch
        bufs = [refs[7 + 4 * L], refs[8 + 4 * L]]   # ping-pong (TB, HP) scratch

        zpad = (jnp.zeros((Bp, HP - H), jnp.float32) if HP > H else None)

        for l in range(L):
            w_ih_ref, w_hh_ref, bg_ref, bhn_ref = layer_refs[l]
            out_buf = bufs[l % 2]

            if l == 0:
                # Layer-0 input: one_hot(tokens) built in-register, never in HBM.
                tok = tok_ref[...]                                   # (TB, 1) i32
                cols = lax.broadcasted_iota(jnp.int32, (TB, IP), 1)
                x_in = jnp.where(tok == cols, 1.0, 0.0).astype(jnp.float32)
            else:
                x_in = bufs[(l - 1) % 2][...]                        # (TB, HP)

            # Hoisted input->gates matmul for the whole sequence, spilled to
            # VMEM scratch (bounds live ranges across the unrolled time loop).
            gibuf[...] = jnp.dot(x_in, w_ih_ref[...],
                                 preferred_element_type=jnp.float32) + bg_ref[...]

            bhn = jnp.broadcast_to(bhn_ref[...], (Bp, H))            # hoisted
            hmat = h0_ref[l]                                         # (Bp, HP) zero-padded
            h = hmat[:, 0:H]                                         # (Bp, H)

            for t in range(T):                                       # unrolled
                # One 128-lane MXU push per step (gates packed along lanes).
                gh = jnp.dot(hmat, w_hh_ref[...],
                             preferred_element_type=jnp.float32)     # (Bp, GW)
                gi = gibuf[t * Bp:(t + 1) * Bp, :]                   # (Bp, GW)
                s = jax.nn.sigmoid(gi + gh)      # one EUP pass covers r and z
                r = s[:, 0:H]
                z = s[:, GS:GS + H]
                n = jnp.tanh(gi[:, 2 * GS:2 * GS + H]
                             + r * (gh[:, 2 * GS:2 * GS + H] + bhn))
                h = n + z * (h - n)                                  # == (1-z)*n + z*h
                hmat = h if zpad is None else jnp.concatenate([h, zpad], axis=-1)
                out_buf[t * Bp:(t + 1) * Bp, :] = hmat               # (8,128) store
            hfin_ref[l] = hmat

        # FC head on the whole sequence: one lane-dense (TB, OP) store.
        x_last = bufs[(L - 1) % 2][...]
        out_ref[...] = jnp.dot(x_last, fc_w_ref[...],
                               preferred_element_type=jnp.float32) + fc_b_ref[...]

    return kernel


# ------------------------------ param prep -----------------------------------
def prepare_params(params, input_size, hidden_size, num_layers, output_size):
    """Pre-transpose / pad / bias-fold PyTorch-layout params for the kernel."""
    H = hidden_size
    HP = _round_up(H, 128)
    # Pack r/z/n at lane offsets 0/H/2H when all three fit in one 128-lane
    # block (one MXU push per step); otherwise fall back to per-gate HP blocks.
    GS = H if 3 * H <= 128 else HP
    GW = _round_up(3 * GS, 128)
    I = input_size
    IP = _round_up(I, 128)
    O = output_size
    OP = _round_up(O, 128)

    layers = []
    for l in range(num_layers):
        w_ih, w_hh, b_ih, b_hh = params["gru"][l]   # (3H,in), (3H,H), (3H,), (3H,)
        in_dim = w_ih.shape[1]
        INP = IP if l == 0 else HP
        w_ih_p = jnp.zeros((INP, GW), jnp.float32)
        w_hh_p = jnp.zeros((HP, GW), jnp.float32)
        for g in range(3):
            w_ih_p = w_ih_p.at[:in_dim, g * GS:g * GS + H].set(
                jnp.transpose(w_ih[g * H:(g + 1) * H, :]))
            w_hh_p = w_hh_p.at[:H, g * GS:g * GS + H].set(
                jnp.transpose(w_hh[g * H:(g + 1) * H, :]))
        # Folded biases: r,z gates get b_ih+b_hh; n gate gets b_ih only;
        # b_hh_n stays separate (applied inside r*(...) like nn.GRU).
        bg_p = jnp.zeros((1, GW), jnp.float32)
        bg_p = bg_p.at[0, 0 * GS:0 * GS + H].set(b_ih[0:H] + b_hh[0:H])
        bg_p = bg_p.at[0, 1 * GS:1 * GS + H].set(b_ih[H:2 * H] + b_hh[H:2 * H])
        bg_p = bg_p.at[0, 2 * GS:2 * GS + H].set(b_ih[2 * H:3 * H])
        bhn_p = jnp.reshape(b_hh[2 * H:3 * H].astype(jnp.float32), (1, H))
        layers.append((w_ih_p, w_hh_p, bg_p, bhn_p))

    fc_w_p = jnp.zeros((HP, OP), jnp.float32).at[:H, :O].set(
        jnp.transpose(params["fc_w"]))
    fc_b_p = jnp.zeros((1, OP), jnp.float32).at[0, :O].set(params["fc_b"])

    kparams = {"layers": layers, "fc_w": fc_w_p, "fc_b": fc_b_p}
    dims = {"L": num_layers, "H": H, "HP": HP, "I": I, "IP": IP,
            "O": O, "OP": OP, "GS": GS, "GW": GW}
    return kparams, dims


# ------------------------------ full forward ----------------------------------
def gru_forward(tokens, kparams, dims, h0=None):
    """tokens: (B, T) int32 -> (output (T, B, O), H (num_layers, B, hidden))."""
    B, T = tokens.shape
    L, H, HP = dims["L"], dims["H"], dims["HP"]
    IP, O, OP = dims["IP"], dims["O"], dims["OP"]
    GS, GW = dims["GS"], dims["GW"]
    Bp = _round_up(B, 8)                         # sublane-align the batch

    # Time-major token rows, batch padded to Bp (pad rows use token 0; their
    # outputs are sliced away below and never mix with real rows).
    tokp = jnp.zeros((T, Bp), jnp.int32).at[:, :B].set(tokens.T.astype(jnp.int32))
    tok2 = tokp.reshape(T * Bp, 1)

    h0p = jnp.zeros((L, Bp, HP), jnp.float32)
    if h0 is not None:
        h0p = h0p.at[:, :B, :H].set(h0.astype(jnp.float32))

    flat = []
    for lp in kparams["layers"]:
        flat.extend(lp)

    y_flat, hfin = pl.pallas_call(
        _make_fused_kernel(L, T, Bp, H, HP, IP, GS, GW),
        out_shape=(jax.ShapeDtypeStruct((T * Bp, OP), jnp.float32),
                   jax.ShapeDtypeStruct((L, Bp, HP), jnp.float32)),
        scratch_shapes=[pltpu.VMEM((T * Bp, GW), jnp.float32),   # gi spill
                        pltpu.VMEM((T * Bp, HP), jnp.float32),   # ping buffer
                        pltpu.VMEM((T * Bp, HP), jnp.float32)],  # pong buffer
    )(tok2, h0p, *flat, kparams["fc_w"], kparams["fc_b"])

    out = y_flat.reshape(T, Bp, OP)[:, :B, :O]                   # (T, B, O)
    H_final = hfin[:, :B, :H]                                    # (L, B, H)
    return out, H_final


# ---------------------------- Pure-JAX reference ------------------------------
def gru_forward_ref(tokens, params, num_layers, hidden_size):
    B, T = tokens.shape
    h0 = jnp.zeros((num_layers, B, hidden_size), jnp.float32)
    x = jax.nn.one_hot(tokens.T, 28, dtype=jnp.float32)
    layer_in = x
    finals = []
    for l in range(num_layers):
        w_ih, w_hh, b_ih, b_hh = params["gru"][l]
        Hd = hidden_size

        def step(h, xt):
            gi = xt @ w_ih.T + b_ih
            gh = h @ w_hh.T + b_hh
            r = jax.nn.sigmoid(gi[:, :Hd] + gh[:, :Hd])
            z = jax.nn.sigmoid(gi[:, Hd:2 * Hd] + gh[:, Hd:2 * Hd])
            n = jnp.tanh(gi[:, 2 * Hd:] + r * gh[:, 2 * Hd:])
            h_new = (1.0 - z) * n + z * h
            return h_new, h_new

        h_last, ys = lax.scan(step, h0[l], layer_in)
        finals.append(h_last)
        layer_in = ys
    y = layer_in @ params["fc_w"].T + params["fc_b"]
    return y, jnp.stack(finals, axis=0)


# -------------------------------- Param init ----------------------------------
def init_params(key, input_size, hidden_size, num_layers, output_size):
    k = 1.0 / np.sqrt(hidden_size)
    params = {"gru": []}
    for l in range(num_layers):
        in_dim = input_size if l == 0 else hidden_size
        key, k1, k2, k3, k4 = jax.random.split(key, 5)
        w_ih = jax.random.uniform(k1, (3 * hidden_size, in_dim), jnp.float32, -k, k)
        w_hh = jax.random.uniform(k2, (3 * hidden_size, hidden_size), jnp.float32, -k, k)
        b_ih = jax.random.uniform(k3, (3 * hidden_size,), jnp.float32, -k, k)
        b_hh = jax.random.uniform(k4, (3 * hidden_size,), jnp.float32, -k, k)
        params["gru"].append((w_ih, w_hh, b_ih, b_hh))
    key, k5, k6 = jax.random.split(key, 3)
    params["fc_w"] = jax.random.uniform(k5, (output_size, hidden_size), jnp.float32, -k, k)
    params["fc_b"] = jax.random.uniform(k6, (output_size,), jnp.float32, -k, k)
    return params


if __name__ == "__main__":
    INPUT_SIZE = 28      # forced by one_hot(..., 28) in the PyTorch forward
    HIDDEN_SIZE = 32
    NUM_LAYERS = 2
    OUTPUT_SIZE = 28
    B, T = 2, 8

    root = jax.random.PRNGKey(0)
    k_params, k_tok = jax.random.split(root)
    params = init_params(k_params, INPUT_SIZE, HIDDEN_SIZE, NUM_LAYERS, OUTPUT_SIZE)
    tokens = jax.random.randint(k_tok, (B, T), 0, INPUT_SIZE, dtype=jnp.int32)

    kparams, dims = prepare_params(params, INPUT_SIZE, HIDDEN_SIZE,
                                   NUM_LAYERS, OUTPUT_SIZE)

    fwd = jax.jit(functools.partial(gru_forward, kparams=kparams, dims=dims))
    out, H = fwd(tokens)
    out, H = jax.block_until_ready((out, H))

    out_ref, H_ref = gru_forward_ref(tokens, params, NUM_LAYERS, HIDDEN_SIZE)
    np.testing.assert_allclose(np.asarray(out), np.asarray(out_ref), rtol=2e-3, atol=2e-3)
    np.testing.assert_allclose(np.asarray(H), np.asarray(H_ref), rtol=2e-3, atol=2e-3)

    assert out.shape == (T, B, OUTPUT_SIZE) and H.shape == (NUM_LAYERS, B, HIDDEN_SIZE)
    print("KERNEL_OK")
</pallas_src>

<mosaic_0001>
module attributes {stable_mosaic.version = 11 : i64} {
  func.func @kernel(%arg0: memref<64x1xi32, #tpu.memory_space<vmem>>, %arg1: memref<2x8x128xf32, #tpu.memory_space<vmem>>, %arg2: memref<128x128xf32, #tpu.memory_space<vmem>>, %arg3: memref<128x128xf32, #tpu.memory_space<vmem>>, %arg4: memref<1x128xf32, #tpu.memory_space<vmem>>, %arg5: memref<1x32xf32, #tpu.memory_space<vmem>>, %arg6: memref<128x128xf32, #tpu.memory_space<vmem>>, %arg7: memref<128x128xf32, #tpu.memory_space<vmem>>, %arg8: memref<1x128xf32, #tpu.memory_space<vmem>>, %arg9: memref<1x32xf32, #tpu.memory_space<vmem>>, %arg10: memref<128x128xf32, #tpu.memory_space<vmem>>, %arg11: memref<1x128xf32, #tpu.memory_space<vmem>>, %arg12: memref<64x128xf32, #tpu.memory_space<vmem>>, %arg13: memref<2x8x128xf32, #tpu.memory_space<vmem>>, %arg14: memref<64x128xf32, #tpu.memory_space<vmem>>, %arg15: memref<64x128xf32, #tpu.memory_space<vmem>>, %arg16: memref<64x128xf32, #tpu.memory_space<vmem>>) attributes {dimension_semantics = [], scalar_prefetch = 0 : i64, scratch_operands = 3 : i64, tpu.core_type = #tpu.core_type<tc>} {
    %cst = arith.constant 0.000000e+00 : f32
    %0 = vector.broadcast %cst : f32 to vector<8x96xf32>
    %c0 = arith.constant 0 : index
    %c0_0 = arith.constant 0 : index
    %1 = vector.load %arg0[%c0, %c0_0] : memref<64x1xi32, #tpu.memory_space<vmem>>, vector<64x1xi32>
    %2 = tpu.iota {dimensions = array<i32: 1>} : vector<64x128xi32>
    %3 = vector.broadcast %1 : vector<64x1xi32> to vector<64x128xi32>
    %4 = arith.cmpi eq, %3, %2 : vector<64x128xi32>
    %cst_1 = arith.constant 1.000000e+00 : f32
    %cst_2 = arith.constant 0.000000e+00 : f32
    %5 = vector.broadcast %cst_1 : f32 to vector<64x128xf32>
    %6 = vector.broadcast %cst_2 : f32 to vector<64x128xf32>
    %7 = arith.select %4, %5, %6 : vector<64x128xi1>, vector<64x128xf32>
    %c0_3 = arith.constant 0 : index
    %c0_4 = arith.constant 0 : index
    %8 = vector.load %arg2[%c0_3, %c0_4] : memref<128x128xf32, #tpu.memory_space<vmem>>, vector<128x128xf32>
    %cst_5 = arith.constant dense<0.000000e+00> : vector<64x128xf32>
    %9 = tpu.matmul %7, %8, %cst_5 {dimension_numbers = #tpu.dot_dimension_numbers<[1], [0], [0], [1], [0, 0, 1, 1], [], []>} : vector<64x128xf32>, vector<128x128xf32>, vector<64x128xf32> -> vector<64x128xf32>
    %c0_6 = arith.constant 0 : index
    %c0_7 = arith.constant 0 : index
    %10 = vector.load %arg4[%c0_6, %c0_7] : memref<1x128xf32, #tpu.memory_space<vmem>>, vector<1x128xf32>
    %11 = vector.broadcast %10 : vector<1x128xf32> to vector<64x128xf32>
    %12 = arith.addf %9, %11 : vector<64x128xf32>
    %c0_8 = arith.constant 0 : index
    %c0_9 = arith.constant 0 : index
    %13 = vector.load %arg14[%c0_8, %c0_9] : memref<64x128xf32, #tpu.memory_space<vmem>>, vector<64x128xf32>
    tpu.vector_store %arg14[%c0_8, %c0_9], %12 {strides = array<i32>} : memref<64x128xf32, #tpu.memory_space<vmem>>, vector<64x128xf32>,
    %c0_10 = arith.constant 0 : index
    %c0_11 = arith.constant 0 : index
    %14 = vector.load %arg5[%c0_10, %c0_11] : memref<1x32xf32, #tpu.memory_space<vmem>>, vector<1x32xf32>
    %15 = vector.shape_cast %14 : vector<1x32xf32> to vector<1x32xf32>
    %16 = vector.broadcast %15 : vector<1x32xf32> to vector<8x32xf32>
    %c0_12 = arith.constant 0 : index
    %c0_13 = arith.constant 0 : index
    %c0_14 = arith.constant 0 : index
    %17 = vector.load %arg1[%c0_12, %c0_13, %c0_14] : memref<2x8x128xf32, #tpu.memory_space<vmem>>, vector<1x8x128xf32>
    %18 = vector.shape_cast %17 : vector<1x8x128xf32> to vector<8x128xf32>
    %19 = vector.extract_strided_slice %18 {offsets = [0, 0], sizes = [8, 32], strides = [1, 1]} : vector<8x128xf32> to vector<8x32xf32>
    %c0_15 = arith.constant 0 : index
    %c0_16 = arith.constant 0 : index
    %20 = vector.load %arg3[%c0_15, %c0_16] : memref<128x128xf32, #tpu.memory_space<vmem>>, vector<128x128xf32>
    %cst_17 = arith.constant dense<0.000000e+00> : vector<8x128xf32>
    %21 = tpu.matmul %18, %20, %cst_17 {dimension_numbers = #tpu.dot_dimension_numbers<[1], [0], [0], [1], [0, 0, 1, 1], [], []>} : vector<8x128xf32>, vector<128x128xf32>, vector<8x128xf32> -> vector<8x128xf32>
    %c0_18 = arith.constant 0 : index
    %c0_19 = arith.constant 0 : index
    %22 = vector.load %arg14[%c0_18, %c0_19] : memref<64x128xf32, #tpu.memory_space<vmem>>, vector<8x128xf32>
    %23 = arith.addf %22, %21 : vector<8x128xf32>
    %24 = arith.negf %23 : vector<8x128xf32>
    %25 = math.exp %24 : vector<8x128xf32>
    %cst_20 = arith.constant 1.000000e+00 : f32
    %26 = vector.broadcast %cst_20 : f32 to vector<8x128xf32>
    %27 = arith.addf %26, %25 : vector<8x128xf32>
    %28 = arith.divf %26, %27 : vector<8x128xf32>
    %29 = vector.extract_strided_slice %28 {offsets = [0, 0], sizes = [8, 32], strides = [1, 1]} : vector<8x128xf32> to vector<8x32xf32>
    %30 = vector.extract_strided_slice %28 {offsets = [0, 32], sizes = [8, 32], strides = [1, 1]} : vector<8x128xf32> to vector<8x32xf32>
    %31 = vector.extract_strided_slice %22 {offsets = [0, 64], sizes = [8, 32], strides = [1, 1]} : vector<8x128xf32> to vector<8x32xf32>
    %32 = vector.extract_strided_slice %21 {offsets = [0, 64], sizes = [8, 32], strides = [1, 1]} : vector<8x128xf32> to vector<8x32xf32>
    %33 = arith.addf %32, %16 : vector<8x32xf32>
    %34 = arith.mulf %29, %33 : vector<8x32xf32>
    %35 = arith.addf %31, %34 : vector<8x32xf32>
    %36 = math.tanh %35 : vector<8x32xf32>
    %37 = arith.subf %19, %36 : vector<8x32xf32>
    %38 = arith.mulf %30, %37 : vector<8x32xf32>
    %39 = arith.addf %36, %38 : vector<8x32xf32>
    %40 = tpu.concatenate %39, %0 in 1 : vector<8x32xf32>, vector<8x96xf32> -> vector<8x128xf32>
    %c0_21 = arith.constant 0 : index
    %c0_22 = arith.constant 0 : index
    %41 = vector.load %arg15[%c0_21, %c0_22] : memref<64x128xf32, #tpu.memory_space<vmem>>, vector<8x128xf32>
    tpu.vector_store %arg15[%c0_21, %c0_22], %40 {strides = array<i32>} : memref<64x128xf32, #tpu.memory_space<vmem>>, vector<8x128xf32>,
    %c0_23 = arith.constant 0 : index
    %c0_24 = arith.constant 0 : index
    %42 = vector.load %arg3[%c0_23, %c0_24] : memref<128x128xf32, #tpu.memory_space<vmem>>, vector<128x128xf32>
    %cst_25 = arith.constant dense<0.000000e+00> : vector<8x128xf32>
    %43 = tpu.matmul %40, %42, %cst_25 {dimension_numbers = #tpu.dot_dimension_numbers<[1], [0], [0], [1], [0, 0, 1, 1], [], []>} : vector<8x128xf32>, vector<128x128xf32>, vector<8x128xf32> -> vector<8x128xf32>
    %c8 = arith.constant 8 : index
    %c0_26 = arith.constant 0 : index
    %44 = vector.load %arg14[%c8, %c0_26] : memref<64x128xf32, #tpu.memory_space<vmem>>, vector<8x128xf32>
    %45 = arith.addf %44, %43 : vector<8x128xf32>
    %46 = arith.negf %45 : vector<8x128xf32>
    %47 = math.exp %46 : vector<8x128xf32>
    %cst_27 = arith.constant 1.000000e+00 : f32
    %48 = vector.broadcast %cst_27 : f32 to vector<8x128xf32>
    %49 = arith.addf %48, %47 : vector<8x128xf32>
    %50 = arith.divf %48, %49 : vector<8x128xf32>
    %51 = vector.extract_strided_slice %50 {offsets = [0, 0], sizes = [8, 32], strides = [1, 1]} : vector<8x128xf32> to vector<8x32xf32>
    %52 = vector.extract_strided_slice %50 {offsets = [0, 32], sizes = [8, 32], strides = [1, 1]} : vector<8x128xf32> to vector<8x32xf32>
    %53 = vector.extract_strided_slice %44 {offsets = [0, 64], sizes = [8, 32], strides = [1, 1]} : vector<8x128xf32> to vector<8x32xf32>
    %54 = vector.extract_strided_slice %43 {offsets = [0, 64], sizes = [8, 32], strides = [1, 1]} : vector<8x128xf32> to vector<8x32xf32>
    %55 = arith.addf %54, %16 : vector<8x32xf32>
    %56 = arith.mulf %51, %55 : vector<8x32xf32>
    %57 = arith.addf %53, %56 : vector<8x32xf32>
    %58 = math.tanh %57 : vector<8x32xf32>
    %59 = arith.subf %39, %58 : vector<8x32xf32>
    %60 = arith.mulf %52, %59 : vector<8x32xf32>
    %61 = arith.addf %58, %60 : vector<8x32xf32>
    %62 = tpu.concatenate %61, %0 in 1 : vector<8x32xf32>, vector<8x96xf32> -> vector<8x128xf32>
    %c8_28 = arith.constant 8 : index
    %c0_29 = arith.constant 0 : index
    %63 = vector.load %arg15[%c8_28, %c0_29] : memref<64x128xf32, #tpu.memory_space<vmem>>, vector<8x128xf32>
    tpu.vector_store %arg15[%c8_28, %c0_29], %62 {strides = array<i32>} : memref<64x128xf32, #tpu.memory_space<vmem>>, vector<8x128xf32>,
    %c0_30 = arith.constant 0 : index
    %c0_31 = arith.constant 0 : index
    %64 = vector.load %arg3[%c0_30, %c0_31] : memref<128x128xf32, #tpu.memory_space<vmem>>, vector<128x128xf32>
    %cst_32 = arith.constant dense<0.000000e+00> : vector<8x128xf32>
    %65 = tpu.matmul %62, %64, %cst_32 {dimension_numbers = #tpu.dot_dimension_numbers<[1], [0], [0], [1], [0, 0, 1, 1], [], []>} : vector<8x128xf32>, vector<128x128xf32>, vector<8x128xf32> -> vector<8x128xf32>
    %c16 = arith.constant 16 : index
    %c0_33 = arith.constant 0 : index
    %66 = vector.load %arg14[%c16, %c0_33] : memref<64x128xf32, #tpu.memory_space<vmem>>, vector<8x128xf32>
    %67 = arith.addf %66, %65 : vector<8x128xf32>
    %68 = arith.negf %67 : vector<8x128xf32>
    %69 = math.exp %68 : vector<8x128xf32>
    %cst_34 = arith.constant 1.000000e+00 : f32
    %70 = vector.broadcast %cst_34 : f32 to vector<8x128xf32>
    %71 = arith.addf %70, %69 : vector<8x128xf32>
    %72 = arith.divf %70, %71 : vector<8x128xf32>
    %73 = vector.extract_strided_slice %72 {offsets = [0, 0], sizes = [8, 32], strides = [1, 1]} : vector<8x128xf32> to vector<8x32xf32>
    %74 = vector.extract_strided_slice %72 {offsets = [0, 32], sizes = [8, 32], strides = [1, 1]} : vector<8x128xf32> to vector<8x32xf32>
    %75 = vector.extract_strided_slice %66 {offsets = [0, 64], sizes = [8, 32], strides = [1, 1]} : vector<8x128xf32> to vector<8x32xf32>
    %76 = vector.extract_strided_slice %65 {offsets = [0, 64], sizes = [8, 32], strides = [1, 1]} : vector<8x128xf32> to vector<8x32xf32>
    %77 = arith.addf %76, %16 : vector<8x32xf32>
    %78 = arith.mulf %73, %77 : vector<8x32xf32>
    %79 = arith.addf %75, %78 : vector<8x32xf32>
    %80 = math.tanh %79 : vector<8x32xf32>
    %81 = arith.subf %61, %80 : vector<8x32xf32>
    %82 = arith.mulf %74, %81 : vector<8x32xf32>
    %83 = arith.addf %80, %82 : vector<8x32xf32>
    %84 = tpu.concatenate %83, %0 in 1 : vector<8x32xf32>, vector<8x96xf32> -> vector<8x128xf32>
    %c16_35 = arith.constant 16 : index
    %c0_36 = arith.constant 0 : index
    %85 = vector.load %arg15[%c16_35, %c0_36] : memref<64x128xf32, #tpu.memory_space<vmem>>, vector<8x128xf32>
    tpu.vector_store %arg15[%c16_35, %c0_36], %84 {strides = array<i32>} : memref<64x128xf32, #tpu.memory_space<vmem>>, vector<8x128xf32>,
    %c0_37 = arith.constant 0 : index
    %c0_38 = arith.constant 0 : index
    %86 = vector.load %arg3[%c0_37, %c0_38] : memref<128x128xf32, #tpu.memory_space<vmem>>, vector<128x128xf32>
    %cst_39 = arith.constant dense<0.000000e+00> : vector<8x128xf32>
    %87 = tpu.matmul %84, %86, %cst_39 {dimension_numbers = #tpu.dot_dimension_numbers<[1], [0], [0], [1], [0, 0, 1, 1], [], []>} : vector<8x128xf32>, vector<128x128xf32>, vector<8x128xf32> -> vector<8x128xf32>
    %c24 = arith.constant 24 : index
    %c0_40 = arith.constant 0 : index
    %88 = vector.load %arg14[%c24, %c0_40] : memref<64x128xf32, #tpu.memory_space<vmem>>, vector<8x128xf32>
    %89 = arith.addf %88, %87 : vector<8x128xf32>
    %90 = arith.negf %89 : vector<8x128xf32>
    %91 = math.exp %90 : vector<8x128xf32>
    %cst_41 = arith.constant 1.000000e+00 : f32
    %92 = vector.broadcast %cst_41 : f32 to vector<8x128xf32>
    %93 = arith.addf %92, %91 : vector<8x128xf32>
    %94 = arith.divf %92, %93 : vector<8x128xf32>
    %95 = vector.extract_strided_slice %94 {offsets = [0, 0], sizes = [8, 32], strides = [1, 1]} : vector<8x128xf32> to vector<8x32xf32>
    %96 = vector.extract_strided_slice %94 {offsets = [0, 32], sizes = [8, 32], strides = [1, 1]} : vector<8x128xf32> to vector<8x32xf32>
    %97 = vector.extract_strided_slice %88 {offsets = [0, 64], sizes = [8, 32], strides = [1, 1]} : vector<8x128xf32> to vector<8x32xf32>
    %98 = vector.extract_strided_slice %87 {offsets = [0, 64], sizes = [8, 32], strides = [1, 1]} : vector<8x128xf32> to vector<8x32xf32>
    %99 = arith.addf %98, %16 : vector<8x32xf32>
    %100 = arith.mulf %95, %99 : vector<8x32xf32>
    %101 = arith.addf %97, %100 : vector<8x32xf32>
    %102 = math.tanh %101 : vector<8x32xf32>
    %103 = arith.subf %83, %102 : vector<8x32xf32>
    %104 = arith.mulf %96, %103 : vector<8x32xf32>
    %105 = arith.addf %102, %104 : vector<8x32xf32>
    %106 = tpu.concatenate %105, %0 in 1 : vector<8x32xf32>, vector<8x96xf32> -> vector<8x128xf32>
    %c24_42 = arith.constant 24 : index
    %c0_43 = arith.constant 0 : index
    %107 = vector.load %arg15[%c24_42, %c0_43] : memref<64x128xf32, #tpu.memory_space<vmem>>, vector<8x128xf32>
    tpu.vector_store %arg15[%c24_42, %c0_43], %106 {strides = array<i32>} : memref<64x128xf32, #tpu.memory_space<vmem>>, vector<8x128xf32>,
    %c0_44 = arith.constant 0 : index
    %c0_45 = arith.constant 0 : index
    %108 = vector.load %arg3[%c0_44, %c0_45] : memref<128x128xf32, #tpu.memory_space<vmem>>, vector<128x128xf32>
    %cst_46 = arith.constant dense<0.000000e+00> : vector<8x128xf32>
    %109 = tpu.matmul %106, %108, %cst_46 {dimension_numbers = #tpu.dot_dimension_numbers<[1], [0], [0], [1], [0, 0, 1, 1], [], []>} : vector<8x128xf32>, vector<128x128xf32>, vector<8x128xf32> -> vector<8x128xf32>
    %c32 = arith.constant 32 : index
    %c0_47 = arith.constant 0 : index
    %110 = vector.load %arg14[%c32, %c0_47] : memref<64x128xf32, #tpu.memory_space<vmem>>, vector<8x128xf32>
    %111 = arith.addf %110, %109 : vector<8x128xf32>
    %112 = arith.negf %111 : vector<8x128xf32>
    %113 = math.exp %112 : vector<8x128xf32>
    %cst_48 = arith.constant 1.000000e+00 : f32
    %114 = vector.broadcast %cst_48 : f32 to vector<8x128xf32>
    %115 = arith.addf %114, %113 : vector<8x128xf32>
    %116 = arith.divf %114, %115 : vector<8x128xf32>
    %117 = vector.extract_strided_slice %116 {offsets = [0, 0], sizes = [8, 32], strides = [1, 1]} : vector<8x128xf32> to vector<8x32xf32>
    %118 = vector.extract_strided_slice %116 {offsets = [0, 32], sizes = [8, 32], strides = [1, 1]} : vector<8x128xf32> to vector<8x32xf32>
    %119 = vector.extract_strided_slice %110 {offsets = [0, 64], sizes = [8, 32], strides = [1, 1]} : vector<8x128xf32> to vector<8x32xf32>
    %120 = vector.extract_strided_slice %109 {offsets = [0, 64], sizes = [8, 32], strides = [1, 1]} : vector<8x128xf32> to vector<8x32xf32>
    %121 = arith.addf %120, %16 : vector<8x32xf32>
    %122 = arith.mulf %117, %121 : vector<8x32xf32>
    %123 = arith.addf %119, %122 : vector<8x32xf32>
    %124 = math.tanh %123 : vector<8x32xf32>
    %125 = arith.subf %105, %124 : vector<8x32xf32>
    %126 = arith.mulf %118, %125 : vector<8x32xf32>
    %127 = arith.addf %124, %126 : vector<8x32xf32>
    %128 = tpu.concatenate %127, %0 in 1 : vector<8x32xf32>, vector<8x96xf32> -> vector<8x128xf32>
    %c32_49 = arith.constant 32 : index
    %c0_50 = arith.constant 0 : index
    %129 = vector.load %arg15[%c32_49, %c0_50] : memref<64x128xf32, #tpu.memory_space<vmem>>, vector<8x128xf32>
    tpu.vector_store %arg15[%c32_49, %c0_50], %128 {strides = array<i32>} : memref<64x128xf32, #tpu.memory_space<vmem>>, vector<8x128xf32>,
    %c0_51 = arith.constant 0 : index
    %c0_52 = arith.constant 0 : index
    %130 = vector.load %arg3[%c0_51, %c0_52] : memref<128x128xf32, #tpu.memory_space<vmem>>, vector<128x128xf32>
    %cst_53 = arith.constant dense<0.000000e+00> : vector<8x128xf32>
    %131 = tpu.matmul %128, %130, %cst_53 {dimension_numbers = #tpu.dot_dimension_numbers<[1], [0], [0], [1], [0, 0, 1, 1], [], []>} : vector<8x128xf32>, vector<128x128xf32>, vector<8x128xf32> -> vector<8x128xf32>
    %c40 = arith.constant 40 : index
    %c0_54 = arith.constant 0 : index
    %132 = vector.load %arg14[%c40, %c0_54] : memref<64x128xf32, #tpu.memory_space<vmem>>, vector<8x128xf32>
    %133 = arith.addf %132, %131 : vector<8x128xf32>
    %134 = arith.negf %133 : vector<8x128xf32>
    %135 = math.exp %134 : vector<8x128xf32>
    %cst_55 = arith.constant 1.000000e+00 : f32
    %136 = vector.broadcast %cst_55 : f32 to vector<8x128xf32>
    %137 = arith.addf %136, %135 : vector<8x128xf32>
    %138 = arith.divf %136, %137 : vector<8x128xf32>
    %139 = vector.extract_strided_slice %138 {offsets = [0, 0], sizes = [8, 32], strides = [1, 1]} : vector<8x128xf32> to vector<8x32xf32>
    %140 = vector.extract_strided_slice %138 {offsets = [0, 32], sizes = [8, 32], strides = [1, 1]} : vector<8x128xf32> to vector<8x32xf32>
    %141 = vector.extract_strided_slice %132 {offsets = [0, 64], sizes = [8, 32], strides = [1, 1]} : vector<8x128xf32> to vector<8x32xf32>
    %142 = vector.extract_strided_slice %131 {offsets = [0, 64], sizes = [8, 32], strides = [1, 1]} : vector<8x128xf32> to vector<8x32xf32>
    %143 = arith.addf %142, %16 : vector<8x32xf32>
    %144 = arith.mulf %139, %143 : vector<8x32xf32>
    %145 = arith.addf %141, %144 : vector<8x32xf32>
    %146 = math.tanh %145 : vector<8x32xf32>
    %147 = arith.subf %127, %146 : vector<8x32xf32>
    %148 = arith.mulf %140, %147 : vector<8x32xf32>
    %149 = arith.addf %146, %148 : vector<8x32xf32>
    %150 = tpu.concatenate %149, %0 in 1 : vector<8x32xf32>, vector<8x96xf32> -> vector<8x128xf32>
    %c40_56 = arith.constant 40 : index
    %c0_57 = arith.constant 0 : index
    %151 = vector.load %arg15[%c40_56, %c0_57] : memref<64x128xf32, #tpu.memory_space<vmem>>, vector<8x128xf32>
    tpu.vector_store %arg15[%c40_56, %c0_57], %150 {strides = array<i32>} : memref<64x128xf32, #tpu.memory_space<vmem>>, vector<8x128xf32>,
    %c0_58 = arith.constant 0 : index
    %c0_59 = arith.constant 0 : index
    %152 = vector.load %arg3[%c0_58, %c0_59] : memref<128x128xf32, #tpu.memory_space<vmem>>, vector<128x128xf32>
    %cst_60 = arith.constant dense<0.000000e+00> : vector<8x128xf32>
    %153 = tpu.matmul %150, %152, %cst_60 {dimension_numbers = #tpu.dot_dimension_numbers<[1], [0], [0], [1], [0, 0, 1, 1], [], []>} : vector<8x128xf32>, vector<128x128xf32>, vector<8x128xf32> -> vector<8x128xf32>
    %c48 = arith.constant 48 : index
    %c0_61 = arith.constant 0 : index
    %154 = vector.load %arg14[%c48, %c0_61] : memref<64x128xf32, #tpu.memory_space<vmem>>, vector<8x128xf32>
    %155 = arith.addf %154, %153 : vector<8x128xf32>
    %156 = arith.negf %155 : vector<8x128xf32>
    %157 = math.exp %156 : vector<8x128xf32>
    %cst_62 = arith.constant 1.000000e+00 : f32
    %158 = vector.broadcast %cst_62 : f32 to vector<8x128xf32>
    %159 = arith.addf %158, %157 : vector<8x128xf32>
    %160 = arith.divf %158, %159 : vector<8x128xf32>
    %161 = vector.extract_strided_slice %160 {offsets = [0, 0], sizes = [8, 32], strides = [1, 1]} : vector<8x128xf32> to vector<8x32xf32>
    %162 = vector.extract_strided_slice %160 {offsets = [0, 32], sizes = [8, 32], strides = [1, 1]} : vector<8x128xf32> to vector<8x32xf32>
    %163 = vector.extract_strided_slice %154 {offsets = [0, 64], sizes = [8, 32], strides = [1, 1]} : vector<8x128xf32> to vector<8x32xf32>
    %164 = vector.extract_strided_slice %153 {offsets = [0, 64], sizes = [8, 32], strides = [1, 1]} : vector<8x128xf32> to vector<8x32xf32>
    %165 = arith.addf %164, %16 : vector<8x32xf32>
    %166 = arith.mulf %161, %165 : vector<8x32xf32>
    %167 = arith.addf %163, %166 : vector<8x32xf32>
    %168 = math.tanh %167 : vector<8x32xf32>
    %169 = arith.subf %149, %168 : vector<8x32xf32>
    %170 = arith.mulf %162, %169 : vector<8x32xf32>
    %171 = arith.addf %168, %170 : vector<8x32xf32>
    %172 = tpu.concatenate %171, %0 in 1 : vector<8x32xf32>, vector<8x96xf32> -> vector<8x128xf32>
    %c48_63 = arith.constant 48 : index
    %c0_64 = arith.constant 0 : index
    %173 = vector.load %arg15[%c48_63, %c0_64] : memref<64x128xf32, #tpu.memory_space<vmem>>, vector<8x128xf32>
    tpu.vector_store %arg15[%c48_63, %c0_64], %172 {strides = array<i32>} : memref<64x128xf32, #tpu.memory_space<vmem>>, vector<8x128xf32>,
    %c0_65 = arith.constant 0 : index
    %c0_66 = arith.constant 0 : index
    %174 = vector.load %arg3[%c0_65, %c0_66] : memref<128x128xf32, #tpu.memory_space<vmem>>, vector<128x128xf32>
    %cst_67 = arith.constant dense<0.000000e+00> : vector<8x128xf32>
    %175 = tpu.matmul %172, %174, %cst_67 {dimension_numbers = #tpu.dot_dimension_numbers<[1], [0], [0], [1], [0, 0, 1, 1], [], []>} : vector<8x128xf32>, vector<128x128xf32>, vector<8x128xf32> -> vector<8x128xf32>
    %c56 = arith.constant 56 : index
    %c0_68 = arith.constant 0 : index
    %176 = vector.load %arg14[%c56, %c0_68] : memref<64x128xf32, #tpu.memory_space<vmem>>, vector<8x128xf32>
    %177 = arith.addf %176, %175 : vector<8x128xf32>
    %178 = arith.negf %177 : vector<8x128xf32>
    %179 = math.exp %178 : vector<8x128xf32>
    %cst_69 = arith.constant 1.000000e+00 : f32
    %180 = vector.broadcast %cst_69 : f32 to vector<8x128xf32>
    %181 = arith.addf %180, %179 : vector<8x128xf32>
    %182 = arith.divf %180, %181 : vector<8x128xf32>
    %183 = vector.extract_strided_slice %182 {offsets = [0, 0], sizes = [8, 32], strides = [1, 1]} : vector<8x128xf32> to vector<8x32xf32>
    %184 = vector.extract_strided_slice %182 {offsets = [0, 32], sizes = [8, 32], strides = [1, 1]} : vector<8x128xf32> to vector<8x32xf32>
    %185 = vector.extract_strided_slice %176 {offsets = [0, 64], sizes = [8, 32], strides = [1, 1]} : vector<8x128xf32> to vector<8x32xf32>
    %186 = vector.extract_strided_slice %175 {offsets = [0, 64], sizes = [8, 32], strides = [1, 1]} : vector<8x128xf32> to vector<8x32xf32>
    %187 = arith.addf %186, %16 : vector<8x32xf32>
    %188 = arith.mulf %183, %187 : vector<8x32xf32>
    %189 = arith.addf %185, %188 : vector<8x32xf32>
    %190 = math.tanh %189 : vector<8x32xf32>
    %191 = arith.subf %171, %190 : vector<8x32xf32>
    %192 = arith.mulf %184, %191 : vector<8x32xf32>
    %193 = arith.addf %190, %192 : vector<8x32xf32>
    %194 = tpu.concatenate %193, %0 in 1 : vector<8x32xf32>, vector<8x96xf32> -> vector<8x128xf32>
    %c56_70 = arith.constant 56 : index
    %c0_71 = arith.constant 0 : index
    %195 = vector.load %arg15[%c56_70, %c0_71] : memref<64x128xf32, #tpu.memory_space<vmem>>, vector<8x128xf32>
    tpu.vector_store %arg15[%c56_70, %c0_71], %194 {strides = array<i32>} : memref<64x128xf32, #tpu.memory_space<vmem>>, vector<8x128xf32>,
    %c0_72 = arith.constant 0 : index
    %c0_73 = arith.constant 0 : index
    %c0_74 = arith.constant 0 : index
    %196 = vector.load %arg13[%c0_72, %c0_73, %c0_74] : memref<2x8x128xf32, #tpu.memory_space<vmem>>, vector<1x8x128xf32>
    %197 = vector.shape_cast %196 : vector<1x8x128xf32> to vector<8x128xf32>
    %198 = vector.shape_cast %194 : vector<8x128xf32> to vector<1x8x128xf32>
    tpu.vector_store %arg13[%c0_72, %c0_73, %c0_74], %198 {strides = array<i32>} : memref<2x8x128xf32, #tpu.memory_space<vmem>>, vector<1x8x128xf32>,
    %c0_75 = arith.constant 0 : index
    %c0_76 = arith.constant 0 : index
    %199 = vector.load %arg15[%c0_75, %c0_76] : memref<64x128xf32, #tpu.memory_space<vmem>>, vector<64x128xf32>
    %c0_77 = arith.constant 0 : index
    %c0_78 = arith.constant 0 : index
    %200 = vector.load %arg6[%c0_77, %c0_78] : memref<128x128xf32, #tpu.memory_space<vmem>>, vector<128x128xf32>
    %cst_79 = arith.constant dense<0.000000e+00> : vector<64x128xf32>
    %201 = tpu.matmul %199, %200, %cst_79 {dimension_numbers = #tpu.dot_dimension_numbers<[1], [0], [0], [1], [0, 0, 1, 1], [], []>} : vector<64x128xf32>, vector<128x128xf32>, vector<64x128xf32> -> vector<64x128xf32>
    %c0_80 = arith.constant 0 : index
    %c0_81 = arith.constant 0 : index
    %202 = vector.load %arg8[%c0_80, %c0_81] : memref<1x128xf32, #tpu.memory_space<vmem>>, vector<1x128xf32>
    %203 = vector.broadcast %202 : vector<1x128xf32> to vector<64x128xf32>
    %204 = arith.addf %201, %203 : vector<64x128xf32>
    %c0_82 = arith.constant 0 : index
    %c0_83 = arith.constant 0 : index
    %205 = vector.load %arg14[%c0_82, %c0_83] : memref<64x128xf32, #tpu.memory_space<vmem>>, vector<64x128xf32>
    tpu.vector_store %arg14[%c0_82, %c0_83], %204 {strides = array<i32>} : memref<64x128xf32, #tpu.memory_space<vmem>>, vector<64x128xf32>,
    %c0_84 = arith.constant 0 : index
    %c0_85 = arith.constant 0 : index
    %206 = vector.load %arg9[%c0_84, %c0_85] : memref<1x32xf32, #tpu.memory_space<vmem>>, vector<1x32xf32>
    %207 = vector.shape_cast %206 : vector<1x32xf32> to vector<1x32xf32>
    %208 = vector.broadcast %207 : vector<1x32xf32> to vector<8x32xf32>
    %c1 = arith.constant 1 : index
    %c0_86 = arith.constant 0 : index
    %c0_87 = arith.constant 0 : index
    %209 = vector.load %arg1[%c1, %c0_86, %c0_87] : memref<2x8x128xf32, #tpu.memory_space<vmem>>, vector<1x8x128xf32>
    %210 = vector.shape_cast %209 : vector<1x8x128xf32> to vector<8x128xf32>
    %211 = vector.extract_strided_slice %210 {offsets = [0, 0], sizes = [8, 32], strides = [1, 1]} : vector<8x128xf32> to vector<8x32xf32>
    %c0_88 = arith.constant 0 : index
    %c0_89 = arith.constant 0 : index
    %212 = vector.load %arg7[%c0_88, %c0_89] : memref<128x128xf32, #tpu.memory_space<vmem>>, vector<128x128xf32>
    %cst_90 = arith.constant dense<0.000000e+00> : vector<8x128xf32>
    %213 = tpu.matmul %210, %212, %cst_90 {dimension_numbers = #tpu.dot_dimension_numbers<[1], [0], [0], [1], [0, 0, 1, 1], [], []>} : vector<8x128xf32>, vector<128x128xf32>, vector<8x128xf32> -> vector<8x128xf32>
    %c0_91 = arith.constant 0 : index
    %c0_92 = arith.constant 0 : index
    %214 = vector.load %arg14[%c0_91, %c0_92] : memref<64x128xf32, #tpu.memory_space<vmem>>, vector<8x128xf32>
    %215 = arith.addf %214, %213 : vector<8x128xf32>
    %216 = arith.negf %215 : vector<8x128xf32>
    %217 = math.exp %216 : vector<8x128xf32>
    %cst_93 = arith.constant 1.000000e+00 : f32
    %218 = vector.broadcast %cst_93 : f32 to vector<8x128xf32>
    %219 = arith.addf %218, %217 : vector<8x128xf32>
    %220 = arith.divf %218, %219 : vector<8x128xf32>
    %221 = vector.extract_strided_slice %220 {offsets = [0, 0], sizes = [8, 32], strides = [1, 1]} : vector<8x128xf32> to vector<8x32xf32>
    %222 = vector.extract_strided_slice %220 {offsets = [0, 32], sizes = [8, 32], strides = [1, 1]} : vector<8x128xf32> to vector<8x32xf32>
    %223 = vector.extract_strided_slice %214 {offsets = [0, 64], sizes = [8, 32], strides = [1, 1]} : vector<8x128xf32> to vector<8x32xf32>
    %224 = vector.extract_strided_slice %213 {offsets = [0, 64], sizes = [8, 32], strides = [1, 1]} : vector<8x128xf32> to vector<8x32xf32>
    %225 = arith.addf %224, %208 : vector<8x32xf32>
    %226 = arith.mulf %221, %225 : vector<8x32xf32>
    %227 = arith.addf %223, %226 : vector<8x32xf32>
    %228 = math.tanh %227 : vector<8x32xf32>
    %229 = arith.subf %211, %228 : vector<8x32xf32>
    %230 = arith.mulf %222, %229 : vector<8x32xf32>
    %231 = arith.addf %228, %230 : vector<8x32xf32>
    %232 = tpu.concatenate %231, %0 in 1 : vector<8x32xf32>, vector<8x96xf32> -> vector<8x128xf32>
    %c0_94 = arith.constant 0 : index
    %c0_95 = arith.constant 0 : index
    %233 = vector.load %arg16[%c0_94, %c0_95] : memref<64x128xf32, #tpu.memory_space<vmem>>, vector<8x128xf32>
    tpu.vector_store %arg16[%c0_94, %c0_95], %232 {strides = array<i32>} : memref<64x128xf32, #tpu.memory_space<vmem>>, vector<8x128xf32>,
    %c0_96 = arith.constant 0 : index
    %c0_97 = arith.constant 0 : index
    %234 = vector.load %arg7[%c0_96, %c0_97] : memref<128x128xf32, #tpu.memory_space<vmem>>, vector<128x128xf32>
    %cst_98 = arith.constant dense<0.000000e+00> : vector<8x128xf32>
    %235 = tpu.matmul %232, %234, %cst_98 {dimension_numbers = #tpu.dot_dimension_numbers<[1], [0], [0], [1], [0, 0, 1, 1], [], []>} : vector<8x128xf32>, vector<128x128xf32>, vector<8x128xf32> -> vector<8x128xf32>
    %c8_99 = arith.constant 8 : index
    %c0_100 = arith.constant 0 : index
    %236 = vector.load %arg14[%c8_99, %c0_100] : memref<64x128xf32, #tpu.memory_space<vmem>>, vector<8x128xf32>
    %237 = arith.addf %236, %235 : vector<8x128xf32>
    %238 = arith.negf %237 : vector<8x128xf32>
    %239 = math.exp %238 : vector<8x128xf32>
    %cst_101 = arith.constant 1.000000e+00 : f32
    %240 = vector.broadcast %cst_101 : f32 to vector<8x128xf32>
    %241 = arith.addf %240, %239 : vector<8x128xf32>
    %242 = arith.divf %240, %241 : vector<8x128xf32>
    %243 = vector.extract_strided_slice %242 {offsets = [0, 0], sizes = [8, 32], strides = [1, 1]} : vector<8x128xf32> to vector<8x32xf32>
    %244 = vector.extract_strided_slice %242 {offsets = [0, 32], sizes = [8, 32], strides = [1, 1]} : vector<8x128xf32> to vector<8x32xf32>
    %245 = vector.extract_strided_slice %236 {offsets = [0, 64], sizes = [8, 32], strides = [1, 1]} : vector<8x128xf32> to vector<8x32xf32>
    %246 = vector.extract_strided_slice %235 {offsets = [0, 64], sizes = [8, 32], strides = [1, 1]} : vector<8x128xf32> to vector<8x32xf32>
    %247 = arith.addf %246, %208 : vector<8x32xf32>
    %248 = arith.mulf %243, %247 : vector<8x32xf32>
    %249 = arith.addf %245, %248 : vector<8x32xf32>
    %250 = math.tanh %249 : vector<8x32xf32>
    %251 = arith.subf %231, %250 : vector<8x32xf32>
    %252 = arith.mulf %244, %251 : vector<8x32xf32>
    %253 = arith.addf %250, %252 : vector<8x32xf32>
    %254 = tpu.concatenate %253, %0 in 1 : vector<8x32xf32>, vector<8x96xf32> -> vector<8x128xf32>
    %c8_102 = arith.constant 8 : index
    %c0_103 = arith.constant 0 : index
    %255 = vector.load %arg16[%c8_102, %c0_103] : memref<64x128xf32, #tpu.memory_space<vmem>>, vector<8x128xf32>
    tpu.vector_store %arg16[%c8_102, %c0_103], %254 {strides = array<i32>} : memref<64x128xf32, #tpu.memory_space<vmem>>, vector<8x128xf32>,
    %c0_104 = arith.constant 0 : index
    %c0_105 = arith.constant 0 : index
    %256 = vector.load %arg7[%c0_104, %c0_105] : memref<128x128xf32, #tpu.memory_space<vmem>>, vector<128x128xf32>
    %cst_106 = arith.constant dense<0.000000e+00> : vector<8x128xf32>
    %257 = tpu.matmul %254, %256, %cst_106 {dimension_numbers = #tpu.dot_dimension_numbers<[1], [0], [0], [1], [0, 0, 1, 1], [], []>} : vector<8x128xf32>, vector<128x128xf32>, vector<8x128xf32> -> vector<8x128xf32>
    %c16_107 = arith.constant 16 : index
    %c0_108 = arith.constant 0 : index
    %258 = vector.load %arg14[%c16_107, %c0_108] : memref<64x128xf32, #tpu.memory_space<vmem>>, vector<8x128xf32>
    %259 = arith.addf %258, %257 : vector<8x128xf32>
    %260 = arith.negf %259 : vector<8x128xf32>
    %261 = math.exp %260 : vector<8x128xf32>
    %cst_109 = arith.constant 1.000000e+00 : f32
    %262 = vector.broadcast %cst_109 : f32 to vector<8x128xf32>
    %263 = arith.addf %262, %261 : vector<8x128xf32>
    %264 = arith.divf %262, %263 : vector<8x128xf32>
    %265 = vector.extract_strided_slice %264 {offsets = [0, 0], sizes = [8, 32], strides = [1, 1]} : vector<8x128xf32> to vector<8x32xf32>
    %266 = vector.extract_strided_slice %264 {offsets = [0, 32], sizes = [8, 32], strides = [1, 1]} : vector<8x128xf32> to vector<8x32xf32>
    %267 = vector.extract_strided_slice %258 {offsets = [0, 64], sizes = [8, 32], strides = [1, 1]} : vector<8x128xf32> to vector<8x32xf32>
    %268 = vector.extract_strided_slice %257 {offsets = [0, 64], sizes = [8, 32], strides = [1, 1]} : vector<8x128xf32> to vector<8x32xf32>
    %269 = arith.addf %268, %208 : vector<8x32xf32>
    %270 = arith.mulf %265, %269 : vector<8x32xf32>
    %271 = arith.addf %267, %270 : vector<8x32xf32>
    %272 = math.tanh %271 : vector<8x32xf32>
    %273 = arith.subf %253, %272 : vector<8x32xf32>
    %274 = arith.mulf %266, %273 : vector<8x32xf32>
    %275 = arith.addf %272, %274 : vector<8x32xf32>
    %276 = tpu.concatenate %275, %0 in 1 : vector<8x32xf32>, vector<8x96xf32> -> vector<8x128xf32>
    %c16_110 = arith.constant 16 : index
    %c0_111 = arith.constant 0 : index
    %277 = vector.load %arg16[%c16_110, %c0_111] : memref<64x128xf32, #tpu.memory_space<vmem>>, vector<8x128xf32>
    tpu.vector_store %arg16[%c16_110, %c0_111], %276 {strides = array<i32>} : memref<64x128xf32, #tpu.memory_space<vmem>>, vector<8x128xf32>,
    %c0_112 = arith.constant 0 : index
    %c0_113 = arith.constant 0 : index
    %278 = vector.load %arg7[%c0_112, %c0_113] : memref<128x128xf32, #tpu.memory_space<vmem>>, vector<128x128xf32>
    %cst_114 = arith.constant dense<0.000000e+00> : vector<8x128xf32>
    %279 = tpu.matmul %276, %278, %cst_114 {dimension_numbers = #tpu.dot_dimension_numbers<[1], [0], [0], [1], [0, 0, 1, 1], [], []>} : vector<8x128xf32>, vector<128x128xf32>, vector<8x128xf32> -> vector<8x128xf32>
    %c24_115 = arith.constant 24 : index
    %c0_116 = arith.constant 0 : index
    %280 = vector.load %arg14[%c24_115, %c0_116] : memref<64x128xf32, #tpu.memory_space<vmem>>, vector<8x128xf32>
    %281 = arith.addf %280, %279 : vector<8x128xf32>
    %282 = arith.negf %281 : vector<8x128xf32>
    %283 = math.exp %282 : vector<8x128xf32>
    %cst_117 = arith.constant 1.000000e+00 : f32
    %284 = vector.broadcast %cst_117 : f32 to vector<8x128xf32>
    %285 = arith.addf %284, %283 : vector<8x128xf32>
    %286 = arith.divf %284, %285 : vector<8x128xf32>
    %287 = vector.extract_strided_slice %286 {offsets = [0, 0], sizes = [8, 32], strides = [1, 1]} : vector<8x128xf32> to vector<8x32xf32>
    %288 = vector.extract_strided_slice %286 {offsets = [0, 32], sizes = [8, 32], strides = [1, 1]} : vector<8x128xf32> to vector<8x32xf32>
    %289 = vector.extract_strided_slice %280 {offsets = [0, 64], sizes = [8, 32], strides = [1, 1]} : vector<8x128xf32> to vector<8x32xf32>
    %290 = vector.extract_strided_slice %279 {offsets = [0, 64], sizes = [8, 32], strides = [1, 1]} : vector<8x128xf32> to vector<8x32xf32>
    %291 = arith.addf %290, %208 : vector<8x32xf32>
    %292 = arith.mulf %287, %291 : vector<8x32xf32>
    %293 = arith.addf %289, %292 : vector<8x32xf32>
    %294 = math.tanh %293 : vector<8x32xf32>
    %295 = arith.subf %275, %294 : vector<8x32xf32>
    %296 = arith.mulf %288, %295 : vector<8x32xf32>
    %297 = arith.addf %294, %296 : vector<8x32xf32>
    %298 = tpu.concatenate %297, %0 in 1 : vector<8x32xf32>, vector<8x96xf32> -> vector<8x128xf32>
    %c24_118 = arith.constant 24 : index
    %c0_119 = arith.constant 0 : index
    %299 = vector.load %arg16[%c24_118, %c0_119] : memref<64x128xf32, #tpu.memory_space<vmem>>, vector<8x128xf32>
    tpu.vector_store %arg16[%c24_118, %c0_119], %298 {strides = array<i32>} : memref<64x128xf32, #tpu.memory_space<vmem>>, vector<8x128xf32>,
    %c0_120 = arith.constant 0 : index
    %c0_121 = arith.constant 0 : index
    %300 = vector.load %arg7[%c0_120, %c0_121] : memref<128x128xf32, #tpu.memory_space<vmem>>, vector<128x128xf32>
    %cst_122 = arith.constant dense<0.000000e+00> : vector<8x128xf32>
    %301 = tpu.matmul %298, %300, %cst_122 {dimension_numbers = #tpu.dot_dimension_numbers<[1], [0], [0], [1], [0, 0, 1, 1], [], []>} : vector<8x128xf32>, vector<128x128xf32>, vector<8x128xf32> -> vector<8x128xf32>
    %c32_123 = arith.constant 32 : index
    %c0_124 = arith.constant 0 : index
    %302 = vector.load %arg14[%c32_123, %c0_124] : memref<64x128xf32, #tpu.memory_space<vmem>>, vector<8x128xf32>
    %303 = arith.addf %302, %301 : vector<8x128xf32>
    %304 = arith.negf %303 : vector<8x128xf32>
    %305 = math.exp %304 : vector<8x128xf32>
    %cst_125 = arith.constant 1.000000e+00 : f32
    %306 = vector.broadcast %cst_125 : f32 to vector<8x128xf32>
    %307 = arith.addf %306, %305 : vector<8x128xf32>
    %308 = arith.divf %306, %307 : vector<8x128xf32>
    %309 = vector.extract_strided_slice %308 {offsets = [0, 0], sizes = [8, 32], strides = [1, 1]} : vector<8x128xf32> to vector<8x32xf32>
    %310 = vector.extract_strided_slice %308 {offsets = [0, 32], sizes = [8, 32], strides = [1, 1]} : vector<8x128xf32> to vector<8x32xf32>
    %311 = vector.extract_strided_slice %302 {offsets = [0, 64], sizes = [8, 32], strides = [1, 1]} : vector<8x128xf32> to vector<8x32xf32>
    %312 = vector.extract_strided_slice %301 {offsets = [0, 64], sizes = [8, 32], strides = [1, 1]} : vector<8x128xf32> to vector<8x32xf32>
    %313 = arith.addf %312, %208 : vector<8x32xf32>
    %314 = arith.mulf %309, %313 : vector<8x32xf32>
    %315 = arith.addf %311, %314 : vector<8x32xf32>
    %316 = math.tanh %315 : vector<8x32xf32>
    %317 = arith.subf %297, %316 : vector<8x32xf32>
    %318 = arith.mulf %310, %317 : vector<8x32xf32>
    %319 = arith.addf %316, %318 : vector<8x32xf32>
    %320 = tpu.concatenate %319, %0 in 1 : vector<8x32xf32>, vector<8x96xf32> -> vector<8x128xf32>
    %c32_126 = arith.constant 32 : index
    %c0_127 = arith.constant 0 : index
    %321 = vector.load %arg16[%c32_126, %c0_127] : memref<64x128xf32, #tpu.memory_space<vmem>>, vector<8x128xf32>
    tpu.vector_store %arg16[%c32_126, %c0_127], %320 {strides = array<i32>} : memref<64x128xf32, #tpu.memory_space<vmem>>, vector<8x128xf32>,
    %c0_128 = arith.constant 0 : index
    %c0_129 = arith.constant 0 : index
    %322 = vector.load %arg7[%c0_128, %c0_129] : memref<128x128xf32, #tpu.memory_space<vmem>>, vector<128x128xf32>
    %cst_130 = arith.constant dense<0.000000e+00> : vector<8x128xf32>
    %323 = tpu.matmul %320, %322, %cst_130 {dimension_numbers = #tpu.dot_dimension_numbers<[1], [0], [0], [1], [0, 0, 1, 1], [], []>} : vector<8x128xf32>, vector<128x128xf32>, vector<8x128xf32> -> vector<8x128xf32>
    %c40_131 = arith.constant 40 : index
    %c0_132 = arith.constant 0 : index
    %324 = vector.load %arg14[%c40_131, %c0_132] : memref<64x128xf32, #tpu.memory_space<vmem>>, vector<8x128xf32>
    %325 = arith.addf %324, %323 : vector<8x128xf32>
    %326 = arith.negf %325 : vector<8x128xf32>
    %327 = math.exp %326 : vector<8x128xf32>
    %cst_133 = arith.constant 1.000000e+00 : f32
    %328 = vector.broadcast %cst_133 : f32 to vector<8x128xf32>
    %329 = arith.addf %328, %327 : vector<8x128xf32>
    %330 = arith.divf %328, %329 : vector<8x128xf32>
    %331 = vector.extract_strided_slice %330 {offsets = [0, 0], sizes = [8, 32], strides = [1, 1]} : vector<8x128xf32> to vector<8x32xf32>
    %332 = vector.extract_strided_slice %330 {offsets = [0, 32], sizes = [8, 32], strides = [1, 1]} : vector<8x128xf32> to vector<8x32xf32>
    %333 = vector.extract_strided_slice %324 {offsets = [0, 64], sizes = [8, 32], strides = [1, 1]} : vector<8x128xf32> to vector<8x32xf32>
    %334 = vector.extract_strided_slice %323 {offsets = [0, 64], sizes = [8, 32], strides = [1, 1]} : vector<8x128xf32> to vector<8x32xf32>
    %335 = arith.addf %334, %208 : vector<8x32xf32>
    %336 = arith.mulf %331, %335 : vector<8x32xf32>
    %337 = arith.addf %333, %336 : vector<8x32xf32>
    %338 = math.tanh %337 : vector<8x32xf32>
    %339 = arith.subf %319, %338 : vector<8x32xf32>
    %340 = arith.mulf %332, %339 : vector<8x32xf32>
    %341 = arith.addf %338, %340 : vector<8x32xf32>
    %342 = tpu.concatenate %341, %0 in 1 : vector<8x32xf32>, vector<8x96xf32> -> vector<8x128xf32>
    %c40_134 = arith.constant 40 : index
    %c0_135 = arith.constant 0 : index
    %343 = vector.load %arg16[%c40_134, %c0_135] : memref<64x128xf32, #tpu.memory_space<vmem>>, vector<8x128xf32>
    tpu.vector_store %arg16[%c40_134, %c0_135], %342 {strides = array<i32>} : memref<64x128xf32, #tpu.memory_space<vmem>>, vector<8x128xf32>,
    %c0_136 = arith.constant 0 : index
    %c0_137 = arith.constant 0 : index
    %344 = vector.load %arg7[%c0_136, %c0_137] : memref<128x128xf32, #tpu.memory_space<vmem>>, vector<128x128xf32>
    %cst_138 = arith.constant dense<0.000000e+00> : vector<8x128xf32>
    %345 = tpu.matmul %342, %344, %cst_138 {dimension_numbers = #tpu.dot_dimension_numbers<[1], [0], [0], [1], [0, 0, 1, 1], [], []>} : vector<8x128xf32>, vector<128x128xf32>, vector<8x128xf32> -> vector<8x128xf32>
    %c48_139 = arith.constant 48 : index
    %c0_140 = arith.constant 0 : index
    %346 = vector.load %arg14[%c48_139, %c0_140] : memref<64x128xf32, #tpu.memory_space<vmem>>, vector<8x128xf32>
    %347 = arith.addf %346, %345 : vector<8x128xf32>
    %348 = arith.negf %347 : vector<8x128xf32>
    %349 = math.exp %348 : vector<8x128xf32>
    %cst_141 = arith.constant 1.000000e+00 : f32
    %350 = vector.broadcast %cst_141 : f32 to vector<8x128xf32>
    %351 = arith.addf %350, %349 : vector<8x128xf32>
    %352 = arith.divf %350, %351 : vector<8x128xf32>
    %353 = vector.extract_strided_slice %352 {offsets = [0, 0], sizes = [8, 32], strides = [1, 1]} : vector<8x128xf32> to vector<8x32xf32>
    %354 = vector.extract_strided_slice %352 {offsets = [0, 32], sizes = [8, 32], strides = [1, 1]} : vector<8x128xf32> to vector<8x32xf32>
    %355 = vector.extract_strided_slice %346 {offsets = [0, 64], sizes = [8, 32], strides = [1, 1]} : vector<8x128xf32> to vector<8x32xf32>
    %356 = vector.extract_strided_slice %345 {offsets = [0, 64], sizes = [8, 32], strides = [1, 1]} : vector<8x128xf32> to vector<8x32xf32>
    %357 = arith.addf %356, %208 : vector<8x32xf32>
    %358 = arith.mulf %353, %357 : vector<8x32xf32>
    %359 = arith.addf %355, %358 : vector<8x32xf32>
    %360 = math.tanh %359 : vector<8x32xf32>
    %361 = arith.subf %341, %360 : vector<8x32xf32>
    %362 = arith.mulf %354, %361 : vector<8x32xf32>
    %363 = arith.addf %360, %362 : vector<8x32xf32>
    %364 = tpu.concatenate %363, %0 in 1 : vector<8x32xf32>, vector<8x96xf32> -> vector<8x128xf32>
    %c48_142 = arith.constant 48 : index
    %c0_143 = arith.constant 0 : index
    %365 = vector.load %arg16[%c48_142, %c0_143] : memref<64x128xf32, #tpu.memory_space<vmem>>, vector<8x128xf32>
    tpu.vector_store %arg16[%c48_142, %c0_143], %364 {strides = array<i32>} : memref<64x128xf32, #tpu.memory_space<vmem>>, vector<8x128xf32>,
    %c0_144 = arith.constant 0 : index
    %c0_145 = arith.constant 0 : index
    %366 = vector.load %arg7[%c0_144, %c0_145] : memref<128x128xf32, #tpu.memory_space<vmem>>, vector<128x128xf32>
    %cst_146 = arith.constant dense<0.000000e+00> : vector<8x128xf32>
    %367 = tpu.matmul %364, %366, %cst_146 {dimension_numbers = #tpu.dot_dimension_numbers<[1], [0], [0], [1], [0, 0, 1, 1], [], []>} : vector<8x128xf32>, vector<128x128xf32>, vector<8x128xf32> -> vector<8x128xf32>
    %c56_147 = arith.constant 56 : index
    %c0_148 = arith.constant 0 : index
    %368 = vector.load %arg14[%c56_147, %c0_148] : memref<64x128xf32, #tpu.memory_space<vmem>>, vector<8x128xf32>
    %369 = arith.addf %368, %367 : vector<8x128xf32>
    %370 = arith.negf %369 : vector<8x128xf32>
    %371 = math.exp %370 : vector<8x128xf32>
    %cst_149 = arith.constant 1.000000e+00 : f32
    %372 = vector.broadcast %cst_149 : f32 to vector<8x128xf32>
    %373 = arith.addf %372, %371 : vector<8x128xf32>
    %374 = arith.divf %372, %373 : vector<8x128xf32>
    %375 = vector.extract_strided_slice %374 {offsets = [0, 0], sizes = [8, 32], strides = [1, 1]} : vector<8x128xf32> to vector<8x32xf32>
    %376 = vector.extract_strided_slice %374 {offsets = [0, 32], sizes = [8, 32], strides = [1, 1]} : vector<8x128xf32> to vector<8x32xf32>
    %377 = vector.extract_strided_slice %368 {offsets = [0, 64], sizes = [8, 32], strides = [1, 1]} : vector<8x128xf32> to vector<8x32xf32>
    %378 = vector.extract_strided_slice %367 {offsets = [0, 64], sizes = [8, 32], strides = [1, 1]} : vector<8x128xf32> to vector<8x32xf32>
    %379 = arith.addf %378, %208 : vector<8x32xf32>
    %380 = arith.mulf %375, %379 : vector<8x32xf32>
    %381 = arith.addf %377, %380 : vector<8x32xf32>
    %382 = math.tanh %381 : vector<8x32xf32>
    %383 = arith.subf %363, %382 : vector<8x32xf32>
    %384 = arith.mulf %376, %383 : vector<8x32xf32>
    %385 = arith.addf %382, %384 : vector<8x32xf32>
    %386 = tpu.concatenate %385, %0 in 1 : vector<8x32xf32>, vector<8x96xf32> -> vector<8x128xf32>
    %c56_150 = arith.constant 56 : index
    %c0_151 = arith.constant 0 : index
    %387 = vector.load %arg16[%c56_150, %c0_151] : memref<64x128xf32, #tpu.memory_space<vmem>>, vector<8x128xf32>
    tpu.vector_store %arg16[%c56_150, %c0_151], %386 {strides = array<i32>} : memref<64x128xf32, #tpu.memory_space<vmem>>, vector<8x128xf32>,
    %c1_152 = arith.constant 1 : index
    %c0_153 = arith.constant 0 : index
    %c0_154 = arith.constant 0 : index
    %388 = vector.load %arg13[%c1_152, %c0_153, %c0_154] : memref<2x8x128xf32, #tpu.memory_space<vmem>>, vector<1x8x128xf32>
    %389 = vector.shape_cast %388 : vector<1x8x128xf32> to vector<8x128xf32>
    %390 = vector.shape_cast %386 : vector<8x128xf32> to vector<1x8x128xf32>
    tpu.vector_store %arg13[%c1_152, %c0_153, %c0_154], %390 {strides = array<i32>} : memref<2x8x128xf32, #tpu.memory_space<vmem>>, vector<1x8x128xf32>,
    %c0_155 = arith.constant 0 : index
    %c0_156 = arith.constant 0 : index
    %391 = vector.load %arg16[%c0_155, %c0_156] : memref<64x128xf32, #tpu.memory_space<vmem>>, vector<64x128xf32>
    %c0_157 = arith.constant 0 : index
    %c0_158 = arith.constant 0 : index
    %392 = vector.load %arg10[%c0_157, %c0_158] : memref<128x128xf32, #tpu.memory_space<vmem>>, vector<128x128xf32>
    %cst_159 = arith.constant dense<0.000000e+00> : vector<64x128xf32>
    %393 = tpu.matmul %391, %392, %cst_159 {dimension_numbers = #tpu.dot_dimension_numbers<[1], [0], [0], [1], [0, 0, 1, 1], [], []>} : vector<64x128xf32>, vector<128x128xf32>, vector<64x128xf32> -> vector<64x128xf32>
    %c0_160 = arith.constant 0 : index
    %c0_161 = arith.constant 0 : index
    %394 = vector.load %arg11[%c0_160, %c0_161] : memref<1x128xf32, #tpu.memory_space<vmem>>, vector<1x128xf32>
    %395 = vector.broadcast %394 : vector<1x128xf32> to vector<64x128xf32>
    %396 = arith.addf %393, %395 : vector<64x128xf32>
    %c0_162 = arith.constant 0 : index
    %c0_163 = arith.constant 0 : index
    %397 = vector.load %arg12[%c0_162, %c0_163] : memref<64x128xf32, #tpu.memory_space<vmem>>, vector<64x128xf32>
    tpu.vector_store %arg12[%c0_162, %c0_163], %396 {strides = array<i32>} : memref<64x128xf32, #tpu.memory_space<vmem>>, vector<64x128xf32>,
    return
  }
}

</mosaic_0001>

<llo_original>
// kernel: gru_forward.1
$region0: #{gru_forward.1}
  #allocation0 [shape = 'u32[]', space=smem, size = 0x4, offset = 0x4, fixed_abs, tag = 'smem constant byte address 0x4 - core index']
  #allocation1 [shape = 'u32[144,128]{1,0:T(1,128)}', space=vmem, size = 0x12000, scoped, tag = 'internal scratch']
  #allocation2 [shape = 'f32[64,128]{1,0:T(8,128)}', space=vmem, size = 0x8000, scoped, tag = 'scratch operand']
  #allocation3 [shape = 'f32[64,128]{1,0:T(8,128)}', space=vmem, size = 0x8000, scoped, tag = 'scratch operand']
  #allocation4 [shape = 'f32[64,128]{1,0:T(8,128)}', space=vmem, size = 0x8000, scoped, tag = 'scratch operand']
  %s0 = inlined_call_operand.vmem [shape: s32[64,1], index: 0, kind: input, shape index: {}]
  %s1 = inlined_call_operand.vmem [shape: f32[2,8,128], index: 1, kind: input, shape index: {}]
  %s2 = inlined_call_operand.hbm [shape: f32[128,128], index: 2, kind: input, shape index: {}]
  %s3 = inlined_call_operand.hbm [shape: f32[128,128], index: 3, kind: input, shape index: {}]
  %s4 = inlined_call_operand.vmem [shape: f32[1,128], index: 4, kind: input, shape index: {}]
  %s5 = inlined_call_operand.vmem [shape: f32[1,32], index: 5, kind: input, shape index: {}]
  %s6 = inlined_call_operand.hbm [shape: f32[128,128], index: 6, kind: input, shape index: {}]
  %s7 = inlined_call_operand.hbm [shape: f32[128,128], index: 7, kind: input, shape index: {}]
  %s8 = inlined_call_operand.vmem [shape: f32[1,128], index: 8, kind: input, shape index: {}]
  %s9 = inlined_call_operand.vmem [shape: f32[1,32], index: 9, kind: input, shape index: {}]
  %s10 = inlined_call_operand.vmem [shape: f32[128,128], index: 10, kind: input, shape index: {}]
  %s11 = inlined_call_operand.vmem [shape: f32[1,128], index: 11, kind: input, shape index: {}]
  %s12 = inlined_call_operand.vmem [shape: f32[64,128], index: 12, kind: output, shape index: {0}]
  %s13 = inlined_call_operand.vmem [shape: f32[2,8,128], index: 13, kind: output, shape index: {1}]
  %14 = xla_tuple %s12, %s13
  %s15 = sld [smem:[#allocation0]]
  $region82: #{gru_forward.1} parent=0
    _
  %s17 = ssub.s32 1, %s15
  %s18 = scalar_select 0, %s17, %s15
  $region1: #{gru_forward.1} parent=0
    #allocation5 [shape = 'u8[65536]{0}', space=vmem, size = 0x10000, scoped, tag = 'input window, operand 2, single buffered']
    #allocation6 [shape = 's32[1]{0}', space=sflag, size = 0x4, scoped, tag = 'scoped memory for gru_forward.1']
    #allocation7 [shape = 'u8[65536]{0}', space=vmem, size = 0x10000, scoped, tag = 'input window, operand 3, single buffered']
    #allocation8 [shape = 's32[1]{0}', space=sflag, size = 0x4, scoped, tag = 'scoped memory for gru_forward.1']
    #allocation9 [shape = 'u8[65536]{0}', space=vmem, size = 0x10000, scoped, tag = 'input window, operand 6, single buffered']
    #allocation10 [shape = 'u8[65536]{0}', space=vmem, size = 0x10000, scoped, tag = 'input window, operand 7, single buffered']
    #allocation11 [shape = 's32[1]{0}', space=sflag, size = 0x4, scoped, tag = 'scoped memory for gru_forward.1']
    %19 = vsyncpa [#allocation6], 0
    %20 = vsyncpa [#allocation8], 0
    %21 = vsyncpa [#allocation11], 0
    // Predicated region
    $region2: #{gru_forward.1} parent=1 // pred_check
      _
    $region3: #{gru_forward.1} parent=1 // pred_check_branch
      %23 = sbr.rel (0) target = $region5
    $region4: #{gru_forward.1} parent=1 // pred_region
      _
    $region5: #{gru_forward.1} parent=1 // pred_fallthru
      _
    // Predicated region
    $region6: #{gru_forward.1} parent=1 // pred_check
      _
    $region7: #{gru_forward.1} parent=1 // pred_check_branch
      %25 = sbr.rel (0) target = $region9
    $region8: #{gru_forward.1} parent=1 // pred_region
      _
    $region9: #{gru_forward.1} parent=1 // pred_fallthru
      _
    // Predicated region
    $region10: #{gru_forward.1} parent=1 // pred_check
      _
    $region11: #{gru_forward.1} parent=1 // pred_check_branch
      %27 = sbr.rel (0) target = $region13
    $region12: #{gru_forward.1} parent=1 // pred_region
      %s29 = ssub.s32 2048, 2048
      %30 = vsyncadd [#allocation6], %s29
      %s31 = sshll.u32 [#allocation5], 4
      %s32 = int_to_ptr.vmem [resolvable:$true] %s31
      %37 = dma.hbm_to_vmem [thread:$0]  %s2, 2048, %s32, [#allocation6], 128, 128, 8
    $region13: #{gru_forward.1} parent=1 // pred_fallthru
      _
    // Predicated region
    $region14: #{gru_forward.1} parent=1 // pred_check
      _
    $region15: #{gru_forward.1} parent=1 // pred_check_branch
      %39 = sbr.rel (0) target = $region17
    $region16: #{gru_forward.1} parent=1 // pred_region
      %s41 = ssub.s32 2048, 2048
      %42 = vsyncadd [#allocation8], %s41
      %s43 = sshll.u32 [#allocation7], 4
      %s44 = int_to_ptr.vmem [resolvable:$true] %s43
      %49 = dma.hbm_to_vmem [thread:$0]  %s3, 2048, %s44, [#allocation8], 128, 128, 8
    $region17: #{gru_forward.1} parent=1 // pred_fallthru
      _
    // Predicated region
    $region18: #{gru_forward.1} parent=1 // pred_check
      _
    $region19: #{gru_forward.1} parent=1 // pred_check_branch
      %51 = sbr.rel (0) target = $region21
    $region20: #{gru_forward.1} parent=1 // pred_region
      _
    $region21: #{gru_forward.1} parent=1 // pred_fallthru
      _
    // Predicated region
    $region22: #{gru_forward.1} parent=1 // pred_check
      _
    $region23: #{gru_forward.1} parent=1 // pred_check_branch
      %53 = sbr.rel (0) target = $region25
    $region24: #{gru_forward.1} parent=1 // pred_region
      _
    $region25: #{gru_forward.1} parent=1 // pred_fallthru
      _
    // Predicated region
    $region26: #{gru_forward.1} parent=1 // pred_check
      _
    $region27: #{gru_forward.1} parent=1 // pred_check_branch
      %55 = sbr.rel (0) target = $region29
    $region28: #{gru_forward.1} parent=1 // pred_region
      %s57 = ssub.s32 2048, 2048
      %58 = vsyncadd [#allocation8], %s57
      %s59 = sshll.u32 [#allocation9], 4
      %s60 = int_to_ptr.vmem [resolvable:$true] %s59
      %65 = dma.hbm_to_vmem [thread:$0]  %s6, 2048, %s60, [#allocation8], 128, 128, 8
    $region29: #{gru_forward.1} parent=1 // pred_fallthru
      _
    // Predicated region
    $region30: #{gru_forward.1} parent=1 // pred_check
      _
    $region31: #{gru_forward.1} parent=1 // pred_check_branch
      %67 = sbr.rel (0) target = $region33
    $region32: #{gru_forward.1} parent=1 // pred_region
      %s69 = ssub.s32 2048, 2048
      %70 = vsyncadd [#allocation11], %s69
      %s71 = sshll.u32 [#allocation10], 4
      %s72 = int_to_ptr.vmem [resolvable:$true] %s71
      %77 = dma.hbm_to_vmem [thread:$0]  %s7, 2048, %s72, [#allocation11], 128, 128, 8
    $region33: #{gru_forward.1} parent=1 // pred_fallthru
      _
    // Predicated region
    $region34: #{gru_forward.1} parent=1 // pred_check
      _
    $region35: #{gru_forward.1} parent=1 // pred_check_branch
      %79 = sbr.rel (0) target = $region37
    $region36: #{gru_forward.1} parent=1 // pred_region
      _
    $region37: #{gru_forward.1} parent=1 // pred_fallthru
      _
    // Predicated region
    $region38: #{gru_forward.1} parent=1 // pred_check
      _
    $region39: #{gru_forward.1} parent=1 // pred_check_branch
      %81 = sbr.rel (0) target = $region41
    $region40: #{gru_forward.1} parent=1 // pred_region
      _
    $region41: #{gru_forward.1} parent=1 // pred_fallthru
      _
    // Predicated region
    $region42: #{gru_forward.1} parent=1 // pred_check
      _
    $region43: #{gru_forward.1} parent=1 // pred_check_branch
      %83 = sbr.rel (0) target = $region45
    $region44: #{gru_forward.1} parent=1 // pred_region
      _
    $region45: #{gru_forward.1} parent=1 // pred_fallthru
      _
    // Predicated region
    $region46: #{gru_forward.1} parent=1 // pred_check
      _
    $region47: #{gru_forward.1} parent=1 // pred_check_branch
      %85 = sbr.rel (0) target = $region49
    $region48: #{gru_forward.1} parent=1 // pred_region
      _
    $region49: #{gru_forward.1} parent=1 // pred_fallthru
      _
    // Predicated region
    $region50: #{gru_forward.1} parent=1 // pred_check
      _
    $region51: #{gru_forward.1} parent=1 // pred_check_branch
      %87 = sbr.rel (0) target = $region53
    $region52: #{gru_forward.1} parent=1 // pred_region
      %88 = dma.done [#allocation6], 2048
    $region53: #{gru_forward.1} parent=1 // pred_fallthru
      _
    // Predicated region
    $region54: #{gru_forward.1} parent=1 // pred_check
      _
    $region55: #{gru_forward.1} parent=1 // pred_check_branch
      %90 = sbr.rel (0) target = $region57
    $region56: #{gru_forward.1} parent=1 // pred_region
      %91 = dma.done [#allocation8], 2048
    $region57: #{gru_forward.1} parent=1 // pred_fallthru
      _
    // Predicated region
    $region58: #{gru_forward.1} parent=1 // pred_check
      _
    $region59: #{gru_forward.1} parent=1 // pred_check_branch
      %93 = sbr.rel (0) target = $region61
    $region60: #{gru_forward.1} parent=1 // pred_region
      %94 = dma.done [#allocation8], 2048
    $region61: #{gru_forward.1} parent=1 // pred_fallthru
      _
    // Predicated region
    $region62: #{gru_forward.1} parent=1 // pred_check
      _
    $region63: #{gru_forward.1} parent=1 // pred_check_branch
      %96 = sbr.rel (0) target = $region65
    $region64: #{gru_forward.1} parent=1 // pred_region
      %97 = dma.done [#allocation11], 2048
    $region65: #{gru_forward.1} parent=1 // pred_fallthru
      _
    %v98 = vld [vmem:[%s0] sm:$0xff]
    %v99 = vld [vmem:[%s0 + $0x8] sm:$0xff]
    %v100 = vld [vmem:[%s0 + $0x10] sm:$0xff]
    %v101 = vld [vmem:[%s0 + $0x18] sm:$0xff]
    %v102 = vld [vmem:[%s0 + $0x20] sm:$0xff]
    %v103 = vld [vmem:[%s0 + $0x28] sm:$0xff]
    %v104 = vld [vmem:[%s0 + $0x30] sm:$0xff]
    %v105 = vld [vmem:[%s0 + $0x38] sm:$0xff]
    %v106 = vlaneseq
    %v107 = vand.u32 %v106, 127
    %108 = vset.pattern.permute.xlu0 0
    %109 = vperm.xlu0 %108, %v98
    %v110 = vpop.permute.xlu0 %109
    %111 = vset.pattern.permute.xlu0 0
    %112 = vperm.xlu0 %111, %v99
    %v113 = vpop.permute.xlu0 %112
    %114 = vset.pattern.permute.xlu0 0
    %115 = vperm.xlu0 %114, %v100
    %v116 = vpop.permute.xlu0 %115
    %117 = vset.pattern.permute.xlu0 0
    %118 = vperm.xlu0 %117, %v101
    %v119 = vpop.permute.xlu0 %118
    %120 = vset.pattern.permute.xlu0 0
    %121 = vperm.xlu0 %120, %v102
    %v122 = vpop.permute.xlu0 %121
    %123 = vset.pattern.permute.xlu0 0
    %124 = vperm.xlu0 %123, %v103
    %v125 = vpop.permute.xlu0 %124
    %126 = vset.pattern.permute.xlu0 0
    %127 = vperm.xlu0 %126, %v104
    %v128 = vpop.permute.xlu0 %127
    %129 = vset.pattern.permute.xlu0 0
    %130 = vperm.xlu0 %129, %v105
    %v131 = vpop.permute.xlu0 %130
    %vm132 = vcmp.eq.s32.totalorder %v110, %v107
    %vm133 = vcmp.eq.s32.totalorder %v113, %v107
    %vm134 = vcmp.eq.s32.totalorder %v116, %v107
    %vm135 = vcmp.eq.s32.totalorder %v119, %v107
    %vm136 = vcmp.eq.s32.totalorder %v122, %v107
    %vm137 = vcmp.eq.s32.totalorder %v125, %v107
    %vm138 = vcmp.eq.s32.totalorder %v128, %v107
    %vm139 = vcmp.eq.s32.totalorder %v131, %v107
    %v140 = vsel %vm132, 1.0, 0.0
    %v141 = vsel %vm133, 1.0, 0.0
    %v142 = vsel %vm134, 1.0, 0.0
    %v143 = vsel %vm135, 1.0, 0.0
    %v144 = vsel %vm136, 1.0, 0.0
    %v145 = vsel %vm137, 1.0, 0.0
    %v146 = vsel %vm138, 1.0, 0.0
    %v147 = vsel %vm139, 1.0, 0.0
    %v148 = vld [vmem:[#allocation5] sm:$0xff]
    %v149 = vld [vmem:[#allocation5 + $0x8] sm:$0xff]
    %v150 = vld [vmem:[#allocation5 + $0x10] sm:$0xff]
    %v151 = vld [vmem:[#allocation5 + $0x18] sm:$0xff]
    %v152 = vld [vmem:[#allocation5 + $0x20] sm:$0xff]
    %v153 = vld [vmem:[#allocation5 + $0x28] sm:$0xff]
    %v154 = vld [vmem:[#allocation5 + $0x30] sm:$0xff]
    %v155 = vld [vmem:[#allocation5 + $0x38] sm:$0xff]
    %v156 = vld [vmem:[#allocation5 + $0x40] sm:$0xff]
    %v157 = vld [vmem:[#allocation5 + $0x48] sm:$0xff]
    %v158 = vld [vmem:[#allocation5 + $0x50] sm:$0xff]
    %v159 = vld [vmem:[#allocation5 + $0x58] sm:$0xff]
    %v160 = vld [vmem:[#allocation5 + $0x60] sm:$0xff]
    %v161 = vld [vmem:[#allocation5 + $0x68] sm:$0xff]
    %v162 = vld [vmem:[#allocation5 + $0x70] sm:$0xff]
    %v163 = vld [vmem:[#allocation5 + $0x78] sm:$0xff]
    %v164 = vld [vmem:[%s4] sm:$0x1]
    %v166 = vlaneseq
    %v167 = vshrl.u32 %v166, 7
    %v168 = vsub.s32 0, %v167
    %v169 = vrot.slane %v164, %v168
    %171 = vmatprep.subr.mxu0 0.0
    %172 = vmatpush1.msra.mxu0 %v148
    %173 = vmatprep.subr.mxu0 0.0
    %174 = vmatpush1.msra.mxu0 %v149
    %175 = vmatprep.subr.mxu0 0.0
    %176 = vmatpush1.msra.mxu0 %v150
    %177 = vmatprep.subr.mxu0 0.0
    %178 = vmatpush1.msra.mxu0 %v151
    %179 = vmatprep.subr.mxu0 0.0
    %180 = vmatpush1.msra.mxu0 %v152
    %181 = vmatprep.subr.mxu0 0.0
    %182 = vmatpush1.msra.mxu0 %v153
    %183 = vmatprep.subr.mxu0 0.0
    %184 = vmatpush1.msra.mxu0 %v154
    %185 = vmatprep.subr.mxu0 0.0
    %186 = vmatpush1.msra.mxu0 %v155
    %187 = vmatprep.subr.mxu0 0.0
    %188 = vmatpush1.msra.mxu0 %v156
    %189 = vmatprep.subr.mxu0 0.0
    %190 = vmatpush1.msra.mxu0 %v157
    %191 = vmatprep.subr.mxu0 0.0
    %192 = vmatpush1.msra.mxu0 %v158
    %193 = vmatprep.subr.mxu0 0.0
    %194 = vmatpush1.msra.mxu0 %v159
    %195 = vmatprep.subr.mxu0 0.0
    %196 = vmatpush1.msra.mxu0 %v160
    %197 = vmatprep.subr.mxu0 0.0
    %198 = vmatpush1.msra.mxu0 %v161
    %199 = vmatprep.subr.mxu0 0.0
    %200 = vmatpush1.msra.mxu0 %v162
    %201 = vmatprep.subr.mxu0 0.0
    %202 = vmatpush1.msra.mxu0 %v163
    %203 = vmatprep.subr.mxu0 0.0
    %204 = vmatpush1.msra.mxu0 0.0
    %205 = vmatprep.subr.mxu0 0.0
    %206 = vmatpush1.msra.mxu0 0.0
    %207 = vmatprep.subr.mxu0 0.0
    %208 = vmatpush1.msra.mxu0 0.0
    %209 = vmatprep.subr.mxu0 0.0
    %210 = vmatpush1.msra.mxu0 0.0
    %211 = vmatprep.subr.mxu0 0.0
    %212 = vmatpush1.msra.mxu0 0.0
    %213 = vmatprep.subr.mxu0 0.0
    %214 = vmatpush1.msra.mxu0 0.0
    %215 = vmatprep.subr.mxu0 0.0
    %216 = vmatpush1.msra.mxu0 0.0
    %217 = vmatprep.subr.mxu0 0.0
    %218 = vmatpush1.msra.mxu0 0.0
    %219 = vmatprep.subr.mxu0 0.0
    %220 = vmatpush1.msra.mxu0 0.0
    %221 = vmatprep.subr.mxu0 0.0
    %222 = vmatpush1.msra.mxu0 0.0
    %223 = vmatprep.subr.mxu0 0.0
    %224 = vmatpush1.msra.mxu0 0.0
    %225 = vmatprep.subr.mxu0 0.0
    %226 = vmatpush1.msra.mxu0 0.0
    %227 = vmatprep.subr.mxu0 0.0
    %228 = vmatpush1.msra.mxu0 0.0
    %229 = vmatprep.subr.mxu0 0.0
    %230 = vmatpush1.msra.mxu0 0.0
    %231 = vmatprep.subr.mxu0 0.0
    %232 = vmatpush1.msra.mxu0 0.0
    %233 = vmatprep.subr.mxu0 0.0
    %234 = vmatpush1.msra.mxu0 0.0
    %235 = vmatprep.mubr.f32.mxu0 0.0
    %236 = vmatmul.mubr.f32.gmra.mrb[0].mxu0 %v140
    %v237 = vpop.f32.mrb[0].mxu0
    %v238 = vadd.f32 %v169, %v237
    %v239 = vpop.f32.mrb[0].mxu0
    %240 = vmatprep.mubr.f32.mxu0 0.0
    %241 = vmatmul.mubr.f32.gmra.mrb[0].mxu0 %v141
    %v242 = vpop.f32.mrb[0].mxu0
    %v243 = vadd.f32 %v169, %v242
    %v244 = vpop.f32.mrb[0].mxu0
    %245 = vmatprep.mubr.f32.mxu0 0.0
    %246 = vmatmul.mubr.f32.gmra.mrb[0].mxu0 %v142
    %v247 = vpop.f32.mrb[0].mxu0
    %v248 = vadd.f32 %v169, %v247
    %v249 = vpop.f32.mrb[0].mxu0
    %250 = vmatprep.mubr.f32.mxu0 0.0
    %251 = vmatmul.mubr.f32.gmra.mrb[0].mxu0 %v143
    %v252 = vpop.f32.mrb[0].mxu0
    %v253 = vadd.f32 %v169, %v252
    %v254 = vpop.f32.mrb[0].mxu0
    %255 = vmatprep.mubr.f32.mxu0 0.0
    %256 = vmatmul.mubr.f32.gmra.mrb[0].mxu0 %v144
    %v257 = vpop.f32.mrb[0].mxu0
    %v258 = vadd.f32 %v169, %v257
    %v259 = vpop.f32.mrb[0].mxu0
    %260 = vmatprep.mubr.f32.mxu0 0.0
    %261 = vmatmul.mubr.f32.gmra.mrb[0].mxu0 %v145
    %v262 = vpop.f32.mrb[0].mxu0
    %v263 = vadd.f32 %v169, %v262
    %v264 = vpop.f32.mrb[0].mxu0
    %265 = vmatprep.mubr.f32.mxu0 0.0
    %266 = vmatmul.mubr.f32.gmra.mrb[0].mxu0 %v146
    %v267 = vpop.f32.mrb[0].mxu0
    %v268 = vadd.f32 %v169, %v267
    %v269 = vpop.f32.mrb[0].mxu0
    %270 = vmatprep.mubr.f32.mxu0 0.0
    %271 = vmatmul.mubr.f32.gmra.mrb[0].mxu0 %v147
    %v272 = vpop.f32.mrb[0].mxu0
    %v273 = vadd.f32 %v169, %v272
    %v274 = vpop.f32.mrb[0].mxu0
    %275 = vdwg.mxu0
    %276 = vst [vmem:[#allocation2] sm:$0xff] %v238
    %277 = vst [vmem:[#allocation2 + $0x8] sm:$0xff] %v243
    %278 = vst [vmem:[#allocation2 + $0x10] sm:$0xff] %v248
    %279 = vst [vmem:[#allocation2 + $0x18] sm:$0xff] %v253
    %280 = vst [vmem:[#allocation2 + $0x20] sm:$0xff] %v258
    %281 = vst [vmem:[#allocation2 + $0x28] sm:$0xff] %v263
    %282 = vst [vmem:[#allocation2 + $0x30] sm:$0xff] %v268
    %283 = vst [vmem:[#allocation2 + $0x38] sm:$0xff] %v273
    %v284 = vld [vmem:[%s5] sm:$0x1]
    %v286 = vlaneseq
    %v287 = vshrl.u32 %v286, 7
    %v288 = vsub.s32 0, %v287
    %v289 = vrot.slane %v284, %v288
    %v290 = vld [vmem:[%s1] sm:$0xff]
    %v291 = vld [vmem:[#allocation7] sm:$0xff]
    %v292 = vld [vmem:[#allocation7 + $0x8] sm:$0xff]
    %v293 = vld [vmem:[#allocation7 + $0x10] sm:$0xff]
    %v294 = vld [vmem:[#allocation7 + $0x18] sm:$0xff]
    %v295 = vld [vmem:[#allocation7 + $0x20] sm:$0xff]
    %v296 = vld [vmem:[#allocation7 + $0x28] sm:$0xff]
    %v297 = vld [vmem:[#allocation7 + $0x30] sm:$0xff]
    %v298 = vld [vmem:[#allocation7 + $0x38] sm:$0xff]
    %v299 = vld [vmem:[#allocation7 + $0x40] sm:$0xff]
    %v300 = vld [vmem:[#allocation7 + $0x48] sm:$0xff]
    %v301 = vld [vmem:[#allocation7 + $0x50] sm:$0xff]
    %v302 = vld [vmem:[#allocation7 + $0x58] sm:$0xff]
    %v303 = vld [vmem:[#allocation7 + $0x60] sm:$0xff]
    %v304 = vld [vmem:[#allocation7 + $0x68] sm:$0xff]
    %v305 = vld [vmem:[#allocation7 + $0x70] sm:$0xff]
    %v306 = vld [vmem:[#allocation7 + $0x78] sm:$0xff]
    %307 = vmatprep.subr.mxu0 0.0
    %308 = vmatpush1.msra.mxu0 %v291
    %309 = vmatprep.subr.mxu0 0.0
    %310 = vmatpush1.msra.mxu0 %v292
    %311 = vmatprep.subr.mxu0 0.0
    %312 = vmatpush1.msra.mxu0 %v293
    %313 = vmatprep.subr.mxu0 0.0
    %314 = vmatpush1.msra.mxu0 %v294
    %315 = vmatprep.subr.mxu0 0.0
    %316 = vmatpush1.msra.mxu0 %v295
    %317 = vmatprep.subr.mxu0 0.0
    %318 = vmatpush1.msra.mxu0 %v296
    %319 = vmatprep.subr.mxu0 0.0
    %320 = vmatpush1.msra.mxu0 %v297
    %321 = vmatprep.subr.mxu0 0.0
    %322 = vmatpush1.msra.mxu0 %v298
    %323 = vmatprep.subr.mxu0 0.0
    %324 = vmatpush1.msra.mxu0 %v299
    %325 = vmatprep.subr.mxu0 0.0
    %326 = vmatpush1.msra.mxu0 %v300
    %327 = vmatprep.subr.mxu0 0.0
    %328 = vmatpush1.msra.mxu0 %v301
    %329 = vmatprep.subr.mxu0 0.0
    %330 = vmatpush1.msra.mxu0 %v302
    %331 = vmatprep.subr.mxu0 0.0
    %332 = vmatpush1.msra.mxu0 %v303
    %333 = vmatprep.subr.mxu0 0.0
    %334 = vmatpush1.msra.mxu0 %v304
    %335 = vmatprep.subr.mxu0 0.0
    %336 = vmatpush1.msra.mxu0 %v305
    %337 = vmatprep.subr.mxu0 0.0
    %338 = vmatpush1.msra.mxu0 %v306
    %339 = vmatprep.subr.mxu0 0.0
    %340 = vmatpush1.msra.mxu0 0.0
    %341 = vmatprep.subr.mxu0 0.0
    %342 = vmatpush1.msra.mxu0 0.0
    %343 = vmatprep.subr.mxu0 0.0
    %344 = vmatpush1.msra.mxu0 0.0
    %345 = vmatprep.subr.mxu0 0.0
    %346 = vmatpush1.msra.mxu0 0.0
    %347 = vmatprep.subr.mxu0 0.0
    %348 = vmatpush1.msra.mxu0 0.0
    %349 = vmatprep.subr.mxu0 0.0
    %350 = vmatpush1.msra.mxu0 0.0
    %351 = vmatprep.subr.mxu0 0.0
    %352 = vmatpush1.msra.mxu0 0.0
    %353 = vmatprep.subr.mxu0 0.0
    %354 = vmatpush1.msra.mxu0 0.0
    %355 = vmatprep.subr.mxu0 0.0
    %356 = vmatpush1.msra.mxu0 0.0
    %357 = vmatprep.subr.mxu0 0.0
    %358 = vmatpush1.msra.mxu0 0.0
    %359 = vmatprep.subr.mxu0 0.0
    %360 = vmatpush1.msra.mxu0 0.0
    %361 = vmatprep.subr.mxu0 0.0
    %362 = vmatpush1.msra.mxu0 0.0
    %363 = vmatprep.subr.mxu0 0.0
    %364 = vmatpush1.msra.mxu0 0.0
    %365 = vmatprep.subr.mxu0 0.0
    %366 = vmatpush1.msra.mxu0 0.0
    %367 = vmatprep.subr.mxu0 0.0
    %368 = vmatpush1.msra.mxu0 0.0
    %369 = vmatprep.subr.mxu0 0.0
    %370 = vmatpush1.msra.mxu0 0.0
    %371 = vmatprep.mubr.f32.mxu0 0.0
    %372 = vmatmul.mubr.f32.gmra.mrb[0].mxu0 %v290
    %v373 = vpop.f32.mrb[0].mxu0
    %v374 = vadd.f32 0.0, %v373
    %v375 = vpop.f32.mrb[0].mxu0
    %376 = vdwg.mxu0
    %v377 = vld [vmem:[#allocation2] sm:$0xff]
    %v378 = vadd.f32 %v377, %v374
    %v379 = vxor.u32 %v378, 2147483648
    %v380 = vmul.f32 %v379, 1.442695
    %v381 = vpow.pop %v380
    %v382 = vadd.f32 %v381, 1.0
    %v383 = vrcp.pop %v382
    %v384 = vmul.f32 1.0, %v383
    %385 = vrot.lane.b32.xlu0 %v289, 64
    %v386 = vpop.permute.xlu0 %385
    %v388 = vadd.f32 %v374, %v386
    %390 = vrot.lane.b32.xlu0 %v388, 64
    %v391 = vpop.permute.xlu0 %390
    %v393 = vmul.f32 %v384, %v391
    %395 = vrot.lane.b32.xlu0 %v393, 64
    %v396 = vpop.permute.xlu0 %395
    %v398 = vadd.f32 %v377, %v396
    %v399 = vtanh.pop %v398
    %401 = vrot.lane.b32.xlu0 %v399, 64
    %v402 = vpop.permute.xlu0 %401
    %v404 = vsub.f32 %v290, %v402
    %406 = vrot.lane.b32.xlu0 %v404, 32
    %v407 = vpop.permute.xlu0 %406
    %v409 = vmul.f32 %v384, %v407
    %411 = vrot.lane.b32.xlu0 %v409, 32
    %v412 = vpop.permute.xlu0 %411
    %v414 = vadd.f32 %v399, %v412
    %416 = vrot.lane.b32.xlu0 %v414, 64
    %v417 = vpop.permute.xlu0 %416
    %vm419 = vcmask 261120
    %v420 = vsel %vm419, %v417, 0.0
    %421 = vst [vmem:[#allocation3] sm:$0xff] %v420
    %v422 = vld [vmem:[#allocation7] sm:$0xff]
    %v423 = vld [vmem:[#allocation7 + $0x8] sm:$0xff]
    %v424 = vld [vmem:[#allocation7 + $0x10] sm:$0xff]
    %v425 = vld [vmem:[#allocation7 + $0x18] sm:$0xff]
    %v426 = vld [vmem:[#allocation7 + $0x20] sm:$0xff]
    %v427 = vld [vmem:[#allocation7 + $0x28] sm:$0xff]
    %v428 = vld [vmem:[#allocation7 + $0x30] sm:$0xff]
    %v429 = vld [vmem:[#allocation7 + $0x38] sm:$0xff]
    %v430 = vld [vmem:[#allocation7 + $0x40] sm:$0xff]
    %v431 = vld [vmem:[#allocation7 + $0x48] sm:$0xff]
    %v432 = vld [vmem:[#allocation7 + $0x50] sm:$0xff]
    %v433 = vld [vmem:[#allocation7 + $0x58] sm:$0xff]
    %v434 = vld [vmem:[#allocation7 + $0x60] sm:$0xff]
    %v435 = vld [vmem:[#allocation7 + $0x68] sm:$0xff]
    %v436 = vld [vmem:[#allocation7 + $0x70] sm:$0xff]
    %v437 = vld [vmem:[#allocation7 + $0x78] sm:$0xff]
    %438 = vmatprep.subr.mxu0 0.0
    %439 = vmatpush1.msra.mxu0 %v422
    %440 = vmatprep.subr.mxu0 0.0
    %441 = vmatpush1.msra.mxu0 %v423
    %442 = vmatprep.subr.mxu0 0.0
    %443 = vmatpush1.msra.mxu0 %v424
    %444 = vmatprep.subr.mxu0 0.0
    %445 = vmatpush1.msra.mxu0 %v425
    %446 = vmatprep.subr.mxu0 0.0
    %447 = vmatpush1.msra.mxu0 %v426
    %448 = vmatprep.subr.mxu0 0.0
    %449 = vmatpush1.msra.mxu0 %v427
    %450 = vmatprep.subr.mxu0 0.0
    %451 = vmatpush1.msra.mxu0 %v428
    %452 = vmatprep.subr.mxu0 0.0
    %453 = vmatpush1.msra.mxu0 %v429
    %454 = vmatprep.subr.mxu0 0.0
    %455 = vmatpush1.msra.mxu0 %v430
    %456 = vmatprep.subr.mxu0 0.0
    %457 = vmatpush1.msra.mxu0 %v431
    %458 = vmatprep.subr.mxu0 0.0
    %459 = vmatpush1.msra.mxu0 %v432
    %460 = vmatprep.subr.mxu0 0.0
    %461 = vmatpush1.msra.mxu0 %v433
    %462 = vmatprep.subr.mxu0 0.0
    %463 = vmatpush1.msra.mxu0 %v434
    %464 = vmatprep.subr.mxu0 0.0
    %465 = vmatpush1.msra.mxu0 %v435
    %466 = vmatprep.subr.mxu0 0.0
    %467 = vmatpush1.msra.mxu0 %v436
    %468 = vmatprep.subr.mxu0 0.0
    %469 = vmatpush1.msra.mxu0 %v437
    %470 = vmatprep.subr.mxu0 0.0
    %471 = vmatpush1.msra.mxu0 0.0
    %472 = vmatprep.subr.mxu0 0.0
    %473 = vmatpush1.msra.mxu0 0.0
    %474 = vmatprep.subr.mxu0 0.0
    %475 = vmatpush1.msra.mxu0 0.0
    %476 = vmatprep.subr.mxu0 0.0
    %477 = vmatpush1.msra.mxu0 0.0
    %478 = vmatprep.subr.mxu0 0.0
    %479 = vmatpush1.msra.mxu0 0.0
    %480 = vmatprep.subr.mxu0 0.0
    %481 = vmatpush1.msra.mxu0 0.0
    %482 = vmatprep.subr.mxu0 0.0
    %483 = vmatpush1.msra.mxu0 0.0
    %484 = vmatprep.subr.mxu0 0.0
    %485 = vmatpush1.msra.mxu0 0.0
    %486 = vmatprep.subr.mxu0 0.0
    %487 = vmatpush1.msra.mxu0 0.0
    %488 = vmatprep.subr.mxu0 0.0
    %489 = vmatpush1.msra.mxu0 0.0
    %490 = vmatprep.subr.mxu0 0.0
    %491 = vmatpush1.msra.mxu0 0.0
    %492 = vmatprep.subr.mxu0 0.0
    %493 = vmatpush1.msra.mxu0 0.0
    %494 = vmatprep.subr.mxu0 0.0
    %495 = vmatpush1.msra.mxu0 0.0
    %496 = vmatprep.subr.mxu0 0.0
    %497 = vmatpush1.msra.mxu0 0.0
    %498 = vmatprep.subr.mxu0 0.0
    %499 = vmatpush1.msra.mxu0 0.0
    %500 = vmatprep.subr.mxu0 0.0
    %501 = vmatpush1.msra.mxu0 0.0
    %502 = vmatprep.mubr.f32.mxu0 0.0
    %503 = vmatmul.mubr.f32.gmra.mrb[0].mxu0 %v420
    %v504 = vpop.f32.mrb[0].mxu0
    %v505 = vadd.f32 0.0, %v504
    %v506 = vpop.f32.mrb[0].mxu0
    %507 = vdwg.mxu0
    %v508 = vld [vmem:[#allocation2 + $0x8] sm:$0xff]
    %v509 = vadd.f32 %v508, %v505
    %v510 = vxor.u32 %v509, 2147483648
    %v511 = vmul.f32 %v510, 1.442695
    %v512 = vpow.pop %v511
    %v513 = vadd.f32 %v512, 1.0
    %v514 = vrcp.pop %v513
    %v515 = vmul.f32 1.0, %v514
    %v516 = vadd.f32 %v505, %v386
    %518 = vrot.lane.b32.xlu0 %v516, 64
    %v519 = vpop.permute.xlu0 %518
    %v521 = vmul.f32 %v515, %v519
    %523 = vrot.lane.b32.xlu0 %v521, 64
    %v524 = vpop.permute.xlu0 %523
    %v526 = vadd.f32 %v508, %v524
    %v527 = vtanh.pop %v526
    %v528 = vsub.f32 %v414, %v527
    %530 = vrot.lane.b32.xlu0 %v528, 96
    %v531 = vpop.permute.xlu0 %530
    %v533 = vmul.f32 %v515, %v531
    %535 = vrot.lane.b32.xlu0 %v533, 32
    %v536 = vpop.permute.xlu0 %535
    %v538 = vadd.f32 %v527, %v536
    %540 = vrot.lane.b32.xlu0 %v538, 64
    %v541 = vpop.permute.xlu0 %540
    %v543 = vsel %vm419, %v541, 0.0
    %544 = vst [vmem:[#allocation3 + $0x8] sm:$0xff] %v543
    %v545 = vld [vmem:[#allocation7] sm:$0xff]
    %v546 = vld [vmem:[#allocation7 + $0x8] sm:$0xff]
    %v547 = vld [vmem:[#allocation7 + $0x10] sm:$0xff]
    %v548 = vld [vmem:[#allocation7 + $0x18] sm:$0xff]
    %v549 = vld [vmem:[#allocation7 + $0x20] sm:$0xff]
    %v550 = vld [vmem:[#allocation7 + $0x28] sm:$0xff]
    %v551 = vld [vmem:[#allocation7 + $0x30] sm:$0xff]
    %v552 = vld [vmem:[#allocation7 + $0x38] sm:$0xff]
    %v553 = vld [vmem:[#allocation7 + $0x40] sm:$0xff]
    %v554 = vld [vmem:[#allocation7 + $0x48] sm:$0xff]
    %v555 = vld [vmem:[#allocation7 + $0x50] sm:$0xff]
    %v556 = vld [vmem:[#allocation7 + $0x58] sm:$0xff]
    %v557 = vld [vmem:[#allocation7 + $0x60] sm:$0xff]
    %v558 = vld [vmem:[#allocation7 + $0x68] sm:$0xff]
    %v559 = vld [vmem:[#allocation7 + $0x70] sm:$0xff]
    %v560 = vld [vmem:[#allocation7 + $0x78] sm:$0xff]
    %561 = vmatprep.subr.mxu0 0.0
    %562 = vmatpush1.msra.mxu0 %v545
    %563 = vmatprep.subr.mxu0 0.0
    %564 = vmatpush1.msra.mxu0 %v546
    %565 = vmatprep.subr.mxu0 0.0
    %566 = vmatpush1.msra.mxu0 %v547
    %567 = vmatprep.subr.mxu0 0.0
    %568 = vmatpush1.msra.mxu0 %v548
    %569 = vmatprep.subr.mxu0 0.0
    %570 = vmatpush1.msra.mxu0 %v549
    %571 = vmatprep.subr.mxu0 0.0
    %572 = vmatpush1.msra.mxu0 %v550
    %573 = vmatprep.subr.mxu0 0.0
    %574 = vmatpush1.msra.mxu0 %v551
    %575 = vmatprep.subr.mxu0 0.0
    %576 = vmatpush1.msra.mxu0 %v552
    %577 = vmatprep.subr.mxu0 0.0
    %578 = vmatpush1.msra.mxu0 %v553
    %579 = vmatprep.subr.mxu0 0.0
    %580 = vmatpush1.msra.mxu0 %v554
    %581 = vmatprep.subr.mxu0 0.0
    %582 = vmatpush1.msra.mxu0 %v555
    %583 = vmatprep.subr.mxu0 0.0
    %584 = vmatpush1.msra.mxu0 %v556
    %585 = vmatprep.subr.mxu0 0.0
    %586 = vmatpush1.msra.mxu0 %v557
    %587 = vmatprep.subr.mxu0 0.0
    %588 = vmatpush1.msra.mxu0 %v558
    %589 = vmatprep.subr.mxu0 0.0
    %590 = vmatpush1.msra.mxu0 %v559
    %591 = vmatprep.subr.mxu0 0.0
    %592 = vmatpush1.msra.mxu0 %v560
    %593 = vmatprep.subr.mxu0 0.0
    %594 = vmatpush1.msra.mxu0 0.0
    %595 = vmatprep.subr.mxu0 0.0
    %596 = vmatpush1.msra.mxu0 0.0
    %597 = vmatprep.subr.mxu0 0.0
    %598 = vmatpush1.msra.mxu0 0.0
    %599 = vmatprep.subr.mxu0 0.0
    %600 = vmatpush1.msra.mxu0 0.0
    %601 = vmatprep.subr.mxu0 0.0
    %602 = vmatpush1.msra.mxu0 0.0
    %603 = vmatprep.subr.mxu0 0.0
    %604 = vmatpush1.msra.mxu0 0.0
    %605 = vmatprep.subr.mxu0 0.0
    %606 = vmatpush1.msra.mxu0 0.0
    %607 = vmatprep.subr.mxu0 0.0
    %608 = vmatpush1.msra.mxu0 0.0
    %609 = vmatprep.subr.mxu0 0.0
    %610 = vmatpush1.msra.mxu0 0.0
    %611 = vmatprep.subr.mxu0 0.0
    %612 = vmatpush1.msra.mxu0 0.0
    %613 = vmatprep.subr.mxu0 0.0
    %614 = vmatpush1.msra.mxu0 0.0
    %615 = vmatprep.subr.mxu0 0.0
    %616 = vmatpush1.msra.mxu0 0.0
    %617 = vmatprep.subr.mxu0 0.0
    %618 = vmatpush1.msra.mxu0 0.0
    %619 = vmatprep.subr.mxu0 0.0
    %620 = vmatpush1.msra.mxu0 0.0
    %621 = vmatprep.subr.mxu0 0.0
    %622 = vmatpush1.msra.mxu0 0.0
    %623 = vmatprep.subr.mxu0 0.0
    %624 = vmatpush1.msra.mxu0 0.0
    %625 = vmatprep.mubr.f32.mxu0 0.0
    %626 = vmatmul.mubr.f32.gmra.mrb[0].mxu0 %v543
    %v627 = vpop.f32.mrb[0].mxu0
    %v628 = vadd.f32 0.0, %v627
    %v629 = vpop.f32.mrb[0].mxu0
    %630 = vdwg.mxu0
    %v631 = vld [vmem:[#allocation2 + $0x10] sm:$0xff]
    %v632 = vadd.f32 %v631, %v628
    %v633 = vxor.u32 %v632, 2147483648
    %v634 = vmul.f32 %v633, 1.442695
    %v635 = vpow.pop %v634
    %v636 = vadd.f32 %v635, 1.0
    %v637 = vrcp.pop %v636
    %v638 = vmul.f32 1.0, %v637
    %v639 = vadd.f32 %v628, %v386
    %641 = vrot.lane.b32.xlu0 %v639, 64
    %v642 = vpop.permute.xlu0 %641
    %v644 = vmul.f32 %v638, %v642
    %646 = vrot.lane.b32.xlu0 %v644, 64
    %v647 = vpop.permute.xlu0 %646
    %v649 = vadd.f32 %v631, %v647
    %v650 = vtanh.pop %v649
    %v651 = vsub.f32 %v538, %v650
    %653 = vrot.lane.b32.xlu0 %v651, 96
    %v654 = vpop.permute.xlu0 %653
    %v656 = vmul.f32 %v638, %v654
    %658 = vrot.lane.b32.xlu0 %v656, 32
    %v659 = vpop.permute.xlu0 %658
    %v661 = vadd.f32 %v650, %v659
    %663 = vrot.lane.b32.xlu0 %v661, 64
    %v664 = vpop.permute.xlu0 %663
    %v666 = vsel %vm419, %v664, 0.0
    %667 = vst [vmem:[#allocation3 + $0x10] sm:$0xff] %v666
    %v668 = vld [vmem:[#allocation7] sm:$0xff]
    %v669 = vld [vmem:[#allocation7 + $0x8] sm:$0xff]
    %v670 = vld [vmem:[#allocation7 + $0x10] sm:$0xff]
    %v671 = vld [vmem:[#allocation7 + $0x18] sm:$0xff]
    %v672 = vld [vmem:[#allocation7 + $0x20] sm:$0xff]
    %v673 = vld [vmem:[#allocation7 + $0x28] sm:$0xff]
    %v674 = vld [vmem:[#allocation7 + $0x30] sm:$0xff]
    %v675 = vld [vmem:[#allocation7 + $0x38] sm:$0xff]
    %v676 = vld [vmem:[#allocation7 + $0x40] sm:$0xff]
    %v677 = vld [vmem:[#allocation7 + $0x48] sm:$0xff]
    %v678 = vld [vmem:[#allocation7 + $0x50] sm:$0xff]
    %v679 = vld [vmem:[#allocation7 + $0x58] sm:$0xff]
    %v680 = vld [vmem:[#allocation7 + $0x60] sm:$0xff]
    %v681 = vld [vmem:[#allocation7 + $0x68] sm:$0xff]
    %v682 = vld [vmem:[#allocation7 + $0x70] sm:$0xff]
    %v683 = vld [vmem:[#allocation7 + $0x78] sm:$0xff]
    %684 = vmatprep.subr.mxu0 0.0
    %685 = vmatpush1.msra.mxu0 %v668
    %686 = vmatprep.subr.mxu0 0.0
    %687 = vmatpush1.msra.mxu0 %v669
    %688 = vmatprep.subr.mxu0 0.0
    %689 = vmatpush1.msra.mxu0 %v670
    %690 = vmatprep.subr.mxu0 0.0
    %691 = vmatpush1.msra.mxu0 %v671
    %692 = vmatprep.subr.mxu0 0.0
    %693 = vmatpush1.msra.mxu0 %v672
    %694 = vmatprep.subr.mxu0 0.0
    %695 = vmatpush1.msra.mxu0 %v673
    %696 = vmatprep.subr.mxu0 0.0
    %697 = vmatpush1.msra.mxu0 %v674
    %698 = vmatprep.subr.mxu0 0.0
    %699 = vmatpush1.msra.mxu0 %v675
    %700 = vmatprep.subr.mxu0 0.0
    %701 = vmatpush1.msra.mxu0 %v676
    %702 = vmatprep.subr.mxu0 0.0
    %703 = vmatpush1.msra.mxu0 %v677
    %704 = vmatprep.subr.mxu0 0.0
    %705 = vmatpush1.msra.mxu0 %v678
    %706 = vmatprep.subr.mxu0 0.0
    %707 = vmatpush1.msra.mxu0 %v679
    %708 = vmatprep.subr.mxu0 0.0
    %709 = vmatpush1.msra.mxu0 %v680
    %710 = vmatprep.subr.mxu0 0.0
    %711 = vmatpush1.msra.mxu0 %v681
    %712 = vmatprep.subr.mxu0 0.0
    %713 = vmatpush1.msra.mxu0 %v682
    %714 = vmatprep.subr.mxu0 0.0
    %715 = vmatpush1.msra.mxu0 %v683
    %716 = vmatprep.subr.mxu0 0.0
    %717 = vmatpush1.msra.mxu0 0.0
    %718 = vmatprep.subr.mxu0 0.0
    %719 = vmatpush1.msra.mxu0 0.0
    %720 = vmatprep.subr.mxu0 0.0
    %721 = vmatpush1.msra.mxu0 0.0
    %722 = vmatprep.subr.mxu0 0.0
    %723 = vmatpush1.msra.mxu0 0.0
    %724 = vmatprep.subr.mxu0 0.0
    %725 = vmatpush1.msra.mxu0 0.0
    %726 = vmatprep.subr.mxu0 0.0
    %727 = vmatpush1.msra.mxu0 0.0
    %728 = vmatprep.subr.mxu0 0.0
    %729 = vmatpush1.msra.mxu0 0.0
    %730 = vmatprep.subr.mxu0 0.0
    %731 = vmatpush1.msra.mxu0 0.0
    %732 = vmatprep.subr.mxu0 0.0
    %733 = vmatpush1.msra.mxu0 0.0
    %734 = vmatprep.subr.mxu0 0.0
    %735 = vmatpush1.msra.mxu0 0.0
    %736 = vmatprep.subr.mxu0 0.0
    %737 = vmatpush1.msra.mxu0 0.0
    %738 = vmatprep.subr.mxu0 0.0
    %739 = vmatpush1.msra.mxu0 0.0
    %740 = vmatprep.subr.mxu0 0.0
    %741 = vmatpush1.msra.mxu0 0.0
    %742 = vmatprep.subr.mxu0 0.0
    %743 = vmatpush1.msra.mxu0 0.0
    %744 = vmatprep.subr.mxu0 0.0
    %745 = vmatpush1.msra.mxu0 0.0
    %746 = vmatprep.subr.mxu0 0.0
    %747 = vmatpush1.msra.mxu0 0.0
    %748 = vmatprep.mubr.f32.mxu0 0.0
    %749 = vmatmul.mubr.f32.gmra.mrb[0].mxu0 %v666
    %v750 = vpop.f32.mrb[0].mxu0
    %v751 = vadd.f32 0.0, %v750
    %v752 = vpop.f32.mrb[0].mxu0
    %753 = vdwg.mxu0
    %v754 = vld [vmem:[#allocation2 + $0x18] sm:$0xff]
    %v755 = vadd.f32 %v754, %v751
    %v756 = vxor.u32 %v755, 2147483648
    %v757 = vmul.f32 %v756, 1.442695
    %v758 = vpow.pop %v757
    %v759 = vadd.f32 %v758, 1.0
    %v760 = vrcp.pop %v759
    %v761 = vmul.f32 1.0, %v760
    %v762 = vadd.f32 %v751, %v386
    %764 = vrot.lane.b32.xlu0 %v762, 64
    %v765 = vpop.permute.xlu0 %764
    %v767 = vmul.f32 %v761, %v765
    %769 = vrot.lane.b32.xlu0 %v767, 64
    %v770 = vpop.permute.xlu0 %769
    %v772 = vadd.f32 %v754, %v770
    %v773 = vtanh.pop %v772
    %v774 = vsub.f32 %v661, %v773
    %776 = vrot.lane.b32.xlu0 %v774, 96
    %v777 = vpop.permute.xlu0 %776
    %v779 = vmul.f32 %v761, %v777
    %781 = vrot.lane.b32.xlu0 %v779, 32
    %v782 = vpop.permute.xlu0 %781
    %v784 = vadd.f32 %v773, %v782
    %786 = vrot.lane.b32.xlu0 %v784, 64
    %v787 = vpop.permute.xlu0 %786
    %v789 = vsel %vm419, %v787, 0.0
    %790 = vst [vmem:[#allocation3 + $0x18] sm:$0xff] %v789
    %v791 = vld [vmem:[#allocation7] sm:$0xff]
    %v792 = vld [vmem:[#allocation7 + $0x8] sm:$0xff]
    %v793 = vld [vmem:[#allocation7 + $0x10] sm:$0xff]
    %v794 = vld [vmem:[#allocation7 + $0x18] sm:$0xff]
    %v795 = vld [vmem:[#allocation7 + $0x20] sm:$0xff]
    %v796 = vld [vmem:[#allocation7 + $0x28] sm:$0xff]
    %v797 = vld [vmem:[#allocation7 + $0x30] sm:$0xff]
    %v798 = vld [vmem:[#allocation7 + $0x38] sm:$0xff]
    %v799 = vld [vmem:[#allocation7 + $0x40] sm:$0xff]
    %v800 = vld [vmem:[#allocation7 + $0x48] sm:$0xff]
    %v801 = vld [vmem:[#allocation7 + $0x50] sm:$0xff]
    %v802 = vld [vmem:[#allocation7 + $0x58] sm:$0xff]
    %v803 = vld [vmem:[#allocation7 + $0x60] sm:$0xff]
    %v804 = vld [vmem:[#allocation7 + $0x68] sm:$0xff]
    %v805 = vld [vmem:[#allocation7 + $0x70] sm:$0xff]
    %v806 = vld [vmem:[#allocation7 + $0x78] sm:$0xff]
    %807 = vmatprep.subr.mxu0 0.0
    %808 = vmatpush1.msra.mxu0 %v791
    %809 = vmatprep.subr.mxu0 0.0
    %810 = vmatpush1.msra.mxu0 %v792
    %811 = vmatprep.subr.mxu0 0.0
    %812 = vmatpush1.msra.mxu0 %v793
    %813 = vmatprep.subr.mxu0 0.0
    %814 = vmatpush1.msra.mxu0 %v794
    %815 = vmatprep.subr.mxu0 0.0
    %816 = vmatpush1.msra.mxu0 %v795
    %817 = vmatprep.subr.mxu0 0.0
    %818 = vmatpush1.msra.mxu0 %v796
    %819 = vmatprep.subr.mxu0 0.0
    %820 = vmatpush1.msra.mxu0 %v797
    %821 = vmatprep.subr.mxu0 0.0
    %822 = vmatpush1.msra.mxu0 %v798
    %823 = vmatprep.subr.mxu0 0.0
    %824 = vmatpush1.msra.mxu0 %v799
    %825 = vmatprep.subr.mxu0 0.0
    %826 = vmatpush1.msra.mxu0 %v800
    %827 = vmatprep.subr.mxu0 0.0
    %828 = vmatpush1.msra.mxu0 %v801
    %829 = vmatprep.subr.mxu0 0.0
    %830 = vmatpush1.msra.mxu0 %v802
    %831 = vmatprep.subr.mxu0 0.0
    %832 = vmatpush1.msra.mxu0 %v803
    %833 = vmatprep.subr.mxu0 0.0
    %834 = vmatpush1.msra.mxu0 %v804
    %835 = vmatprep.subr.mxu0 0.0
    %836 = vmatpush1.msra.mxu0 %v805
    %837 = vmatprep.subr.mxu0 0.0
    %838 = vmatpush1.msra.mxu0 %v806
    %839 = vmatprep.subr.mxu0 0.0
    %840 = vmatpush1.msra.mxu0 0.0
    %841 = vmatprep.subr.mxu0 0.0
    %842 = vmatpush1.msra.mxu0 0.0
    %843 = vmatprep.subr.mxu0 0.0
    %844 = vmatpush1.msra.mxu0 0.0
    %845 = vmatprep.subr.mxu0 0.0
    %846 = vmatpush1.msra.mxu0 0.0
    %847 = vmatprep.subr.mxu0 0.0
    %848 = vmatpush1.msra.mxu0 0.0
    %849 = vmatprep.subr.mxu0 0.0
    %850 = vmatpush1.msra.mxu0 0.0
    %851 = vmatprep.subr.mxu0 0.0
    %852 = vmatpush1.msra.mxu0 0.0
    %853 = vmatprep.subr.mxu0 0.0
    %854 = vmatpush1.msra.mxu0 0.0
    %855 = vmatprep.subr.mxu0 0.0
    %856 = vmatpush1.msra.mxu0 0.0
    %857 = vmatprep.subr.mxu0 0.0
    %858 = vmatpush1.msra.mxu0 0.0
    %859 = vmatprep.subr.mxu0 0.0
    %860 = vmatpush1.msra.mxu0 0.0
    %861 = vmatprep.subr.mxu0 0.0
    %862 = vmatpush1.msra.mxu0 0.0
    %863 = vmatprep.subr.mxu0 0.0
    %864 = vmatpush1.msra.mxu0 0.0
    %865 = vmatprep.subr.mxu0 0.0
    %866 = vmatpush1.msra.mxu0 0.0
    %867 = vmatprep.subr.mxu0 0.0
    %868 = vmatpush1.msra.mxu0 0.0
    %869 = vmatprep.subr.mxu0 0.0
    %870 = vmatpush1.msra.mxu0 0.0
    %871 = vmatprep.mubr.f32.mxu0 0.0
    %872 = vmatmul.mubr.f32.gmra.mrb[0].mxu0 %v789
    %v873 = vpop.f32.mrb[0].mxu0
    %v874 = vadd.f32 0.0, %v873
    %v875 = vpop.f32.mrb[0].mxu0
    %876 = vdwg.mxu0
    %v877 = vld [vmem:[#allocation2 + $0x20] sm:$0xff]
    %v878 = vadd.f32 %v877, %v874
    %v879 = vxor.u32 %v878, 2147483648
    %v880 = vmul.f32 %v879, 1.442695
    %v881 = vpow.pop %v880
    %v882 = vadd.f32 %v881, 1.0
    %v883 = vrcp.pop %v882
    %v884 = vmul.f32 1.0, %v883
    %v885 = vadd.f32 %v874, %v386
    %887 = vrot.lane.b32.xlu0 %v885, 64
    %v888 = vpop.permute.xlu0 %887
    %v890 = vmul.f32 %v884, %v888
    %892 = vrot.lane.b32.xlu0 %v890, 64
    %v893 = vpop.permute.xlu0 %892
    %v895 = vadd.f32 %v877, %v893
    %v896 = vtanh.pop %v895
    %v897 = vsub.f32 %v784, %v896
    %899 = vrot.lane.b32.xlu0 %v897, 96
    %v900 = vpop.permute.xlu0 %899
    %v902 = vmul.f32 %v884, %v900
    %904 = vrot.lane.b32.xlu0 %v902, 32
    %v905 = vpop.permute.xlu0 %904
    %v907 = vadd.f32 %v896, %v905
    %909 = vrot.lane.b32.xlu0 %v907, 64
    %v910 = vpop.permute.xlu0 %909
    %v912 = vsel %vm419, %v910, 0.0
    %913 = vst [vmem:[#allocation3 + $0x20] sm:$0xff] %v912
    %v914 = vld [vmem:[#allocation7] sm:$0xff]
    %v915 = vld [vmem:[#allocation7 + $0x8] sm:$0xff]
    %v916 = vld [vmem:[#allocation7 + $0x10] sm:$0xff]
    %v917 = vld [vmem:[#allocation7 + $0x18] sm:$0xff]
    %v918 = vld [vmem:[#allocation7 + $0x20] sm:$0xff]
    %v919 = vld [vmem:[#allocation7 + $0x28] sm:$0xff]
    %v920 = vld [vmem:[#allocation7 + $0x30] sm:$0xff]
    %v921 = vld [vmem:[#allocation7 + $0x38] sm:$0xff]
    %v922 = vld [vmem:[#allocation7 + $0x40] sm:$0xff]
    %v923 = vld [vmem:[#allocation7 + $0x48] sm:$0xff]
    %v924 = vld [vmem:[#allocation7 + $0x50] sm:$0xff]
    %v925 = vld [vmem:[#allocation7 + $0x58] sm:$0xff]
    %v926 = vld [vmem:[#allocation7 + $0x60] sm:$0xff]
    %v927 = vld [vmem:[#allocation7 + $0x68] sm:$0xff]
    %v928 = vld [vmem:[#allocation7 + $0x70] sm:$0xff]
    %v929 = vld [vmem:[#allocation7 + $0x78] sm:$0xff]
    %930 = vmatprep.subr.mxu0 0.0
    %931 = vmatpush1.msra.mxu0 %v914
    %932 = vmatprep.subr.mxu0 0.0
    %933 = vmatpush1.msra.mxu0 %v915
    %934 = vmatprep.subr.mxu0 0.0
    %935 = vmatpush1.msra.mxu0 %v916
    %936 = vmatprep.subr.mxu0 0.0
    %937 = vmatpush1.msra.mxu0 %v917
    %938 = vmatprep.subr.mxu0 0.0
    %939 = vmatpush1.msra.mxu0 %v918
    %940 = vmatprep.subr.mxu0 0.0
    %941 = vmatpush1.msra.mxu0 %v919
    %942 = vmatprep.subr.mxu0 0.0
    %943 = vmatpush1.msra.mxu0 %v920
    %944 = vmatprep.subr.mxu0 0.0
    %945 = vmatpush1.msra.mxu0 %v921
    %946 = vmatprep.subr.mxu0 0.0
    %947 = vmatpush1.msra.mxu0 %v922
    %948 = vmatprep.subr.mxu0 0.0
    %949 = vmatpush1.msra.mxu0 %v923
    %950 = vmatprep.subr.mxu0 0.0
    %951 = vmatpush1.msra.mxu0 %v924
    %952 = vmatprep.subr.mxu0 0.0
    %953 = vmatpush1.msra.mxu0 %v925
    %954 = vmatprep.subr.mxu0 0.0
    %955 = vmatpush1.msra.mxu0 %v926
    %956 = vmatprep.subr.mxu0 0.0
    %957 = vmatpush1.msra.mxu0 %v927
    %958 = vmatprep.subr.mxu0 0.0
    %959 = vmatpush1.msra.mxu0 %v928
    %960 = vmatprep.subr.mxu0 0.0
    %961 = vmatpush1.msra.mxu0 %v929
    %962 = vmatprep.subr.mxu0 0.0
    %963 = vmatpush1.msra.mxu0 0.0
    %964 = vmatprep.subr.mxu0 0.0
    %965 = vmatpush1.msra.mxu0 0.0
    %966 = vmatprep.subr.mxu0 0.0
    %967 = vmatpush1.msra.mxu0 0.0
    %968 = vmatprep.subr.mxu0 0.0
    %969 = vmatpush1.msra.mxu0 0.0
    %970 = vmatprep.subr.mxu0 0.0
    %971 = vmatpush1.msra.mxu0 0.0
    %972 = vmatprep.subr.mxu0 0.0
    %973 = vmatpush1.msra.mxu0 0.0
    %974 = vmatprep.subr.mxu0 0.0
    %975 = vmatpush1.msra.mxu0 0.0
    %976 = vmatprep.subr.mxu0 0.0
    %977 = vmatpush1.msra.mxu0 0.0
    %978 = vmatprep.subr.mxu0 0.0
    %979 = vmatpush1.msra.mxu0 0.0
    %980 = vmatprep.subr.mxu0 0.0
    %981 = vmatpush1.msra.mxu0 0.0
    %982 = vmatprep.subr.mxu0 0.0
    %983 = vmatpush1.msra.mxu0 0.0
    %984 = vmatprep.subr.mxu0 0.0
    %985 = vmatpush1.msra.mxu0 0.0
    %986 = vmatprep.subr.mxu0 0.0
    %987 = vmatpush1.msra.mxu0 0.0
    %988 = vmatprep.subr.mxu0 0.0
    %989 = vmatpush1.msra.mxu0 0.0
    %990 = vmatprep.subr.mxu0 0.0
    %991 = vmatpush1.msra.mxu0 0.0
    %992 = vmatprep.subr.mxu0 0.0
    %993 = vmatpush1.msra.mxu0 0.0
    %994 = vmatprep.mubr.f32.mxu0 0.0
    %995 = vmatmul.mubr.f32.gmra.mrb[0].mxu0 %v912
    %v996 = vpop.f32.mrb[0].mxu0
    %v997 = vadd.f32 0.0, %v996
    %v998 = vpop.f32.mrb[0].mxu0
    %999 = vdwg.mxu0
    %v1000 = vld [vmem:[#allocation2 + $0x28] sm:$0xff]
    %v1001 = vadd.f32 %v1000, %v997
    %v1002 = vxor.u32 %v1001, 2147483648
    %v1003 = vmul.f32 %v1002, 1.442695
    %v1004 = vpow.pop %v1003
    %v1005 = vadd.f32 %v1004, 1.0
    %v1006 = vrcp.pop %v1005
    %v1007 = vmul.f32 1.0, %v1006
    %v1008 = vadd.f32 %v997, %v386
    %1010 = vrot.lane.b32.xlu0 %v1008, 64
    %v1011 = vpop.permute.xlu0 %1010
    %v1013 = vmul.f32 %v1007, %v1011
    %1015 = vrot.lane.b32.xlu0 %v1013, 64
    %v1016 = vpop.permute.xlu0 %1015
    %v1018 = vadd.f32 %v1000, %v1016
    %v1019 = vtanh.pop %v1018
    %v1020 = vsub.f32 %v907, %v1019
    %1022 = vrot.lane.b32.xlu0 %v1020, 96
    %v1023 = vpop.permute.xlu0 %1022
    %v1025 = vmul.f32 %v1007, %v1023
    %1027 = vrot.lane.b32.xlu0 %v1025, 32
    %v1028 = vpop.permute.xlu0 %1027
    %v1030 = vadd.f32 %v1019, %v1028
    %1032 = vrot.lane.b32.xlu0 %v1030, 64
    %v1033 = vpop.permute.xlu0 %1032
    %v1035 = vsel %vm419, %v1033, 0.0
    %1036 = vst [vmem:[#allocation3 + $0x28] sm:$0xff] %v1035
    %v1037 = vld [vmem:[#allocation7] sm:$0xff]
    %v1038 = vld [vmem:[#allocation7 + $0x8] sm:$0xff]
    %v1039 = vld [vmem:[#allocation7 + $0x10] sm:$0xff]
    %v1040 = vld [vmem:[#allocation7 + $0x18] sm:$0xff]
    %v1041 = vld [vmem:[#allocation7 + $0x20] sm:$0xff]
    %v1042 = vld [vmem:[#allocation7 + $0x28] sm:$0xff]
    %v1043 = vld [vmem:[#allocation7 + $0x30] sm:$0xff]
    %v1044 = vld [vmem:[#allocation7 + $0x38] sm:$0xff]
    %v1045 = vld [vmem:[#allocation7 + $0x40] sm:$0xff]
    %v1046 = vld [vmem:[#allocation7 + $0x48] sm:$0xff]
    %v1047 = vld [vmem:[#allocation7 + $0x50] sm:$0xff]
    %v1048 = vld [vmem:[#allocation7 + $0x58] sm:$0xff]
    %v1049 = vld [vmem:[#allocation7 + $0x60] sm:$0xff]
    %v1050 = vld [vmem:[#allocation7 + $0x68] sm:$0xff]
    %v1051 = vld [vmem:[#allocation7 + $0x70] sm:$0xff]
    %v1052 = vld [vmem:[#allocation7 + $0x78] sm:$0xff]
    %1053 = vmatprep.subr.mxu0 0.0
    %1054 = vmatpush1.msra.mxu0 %v1037
    %1055 = vmatprep.subr.mxu0 0.0
    %1056 = vmatpush1.msra.mxu0 %v1038
    %1057 = vmatprep.subr.mxu0 0.0
    %1058 = vmatpush1.msra.mxu0 %v1039
    %1059 = vmatprep.subr.mxu0 0.0
    %1060 = vmatpush1.msra.mxu0 %v1040
    %1061 = vmatprep.subr.mxu0 0.0
    %1062 = vmatpush1.msra.mxu0 %v1041
    %1063 = vmatprep.subr.mxu0 0.0
    %1064 = vmatpush1.msra.mxu0 %v1042
    %1065 = vmatprep.subr.mxu0 0.0
    %1066 = vmatpush1.msra.mxu0 %v1043
    %1067 = vmatprep.subr.mxu0 0.0
    %1068 = vmatpush1.msra.mxu0 %v1044
    %1069 = vmatprep.subr.mxu0 0.0
    %1070 = vmatpush1.msra.mxu0 %v1045
    %1071 = vmatprep.subr.mxu0 0.0
    %1072 = vmatpush1.msra.mxu0 %v1046
    %1073 = vmatprep.subr.mxu0 0.0
    %1074 = vmatpush1.msra.mxu0 %v1047
    %1075 = vmatprep.subr.mxu0 0.0
    %1076 = vmatpush1.msra.mxu0 %v1048
    %1077 = vmatprep.subr.mxu0 0.0
    %1078 = vmatpush1.msra.mxu0 %v1049
    %1079 = vmatprep.subr.mxu0 0.0
    %1080 = vmatpush1.msra.mxu0 %v1050
    %1081 = vmatprep.subr.mxu0 0.0
    %1082 = vmatpush1.msra.mxu0 %v1051
    %1083 = vmatprep.subr.mxu0 0.0
    %1084 = vmatpush1.msra.mxu0 %v1052
    %1085 = vmatprep.subr.mxu0 0.0
    %1086 = vmatpush1.msra.mxu0 0.0
    %1087 = vmatprep.subr.mxu0 0.0
    %1088 = vmatpush1.msra.mxu0 0.0
    %1089 = vmatprep.subr.mxu0 0.0
    %1090 = vmatpush1.msra.mxu0 0.0
    %1091 = vmatprep.subr.mxu0 0.0
    %1092 = vmatpush1.msra.mxu0 0.0
    %1093 = vmatprep.subr.mxu0 0.0
    %1094 = vmatpush1.msra.mxu0 0.0
    %1095 = vmatprep.subr.mxu0 0.0
    %1096 = vmatpush1.msra.mxu0 0.0
    %1097 = vmatprep.subr.mxu0 0.0
    %1098 = vmatpush1.msra.mxu0 0.0
    %1099 = vmatprep.subr.mxu0 0.0
    %1100 = vmatpush1.msra.mxu0 0.0
    %1101 = vmatprep.subr.mxu0 0.0
    %1102 = vmatpush1.msra.mxu0 0.0
    %1103 = vmatprep.subr.mxu0 0.0
    %1104 = vmatpush1.msra.mxu0 0.0
    %1105 = vmatprep.subr.mxu0 0.0
    %1106 = vmatpush1.msra.mxu0 0.0
    %1107 = vmatprep.subr.mxu0 0.0
    %1108 = vmatpush1.msra.mxu0 0.0
    %1109 = vmatprep.subr.mxu0 0.0
    %1110 = vmatpush1.msra.mxu0 0.0
    %1111 = vmatprep.subr.mxu0 0.0
    %1112 = vmatpush1.msra.mxu0 0.0
    %1113 = vmatprep.subr.mxu0 0.0
    %1114 = vmatpush1.msra.mxu0 0.0
    %1115 = vmatprep.subr.mxu0 0.0
    %1116 = vmatpush1.msra.mxu0 0.0
    %1117 = vmatprep.mubr.f32.mxu0 0.0
    %1118 = vmatmul.mubr.f32.gmra.mrb[0].mxu0 %v1035
    %v1119 = vpop.f32.mrb[0].mxu0
    %v1120 = vadd.f32 0.0, %v1119
    %v1121 = vpop.f32.mrb[0].mxu0
    %1122 = vdwg.mxu0
    %v1123 = vld [vmem:[#allocation2 + $0x30] sm:$0xff]
    %v1124 = vadd.f32 %v1123, %v1120
    %v1125 = vxor.u32 %v1124, 2147483648
    %v1126 = vmul.f32 %v1125, 1.442695
    %v1127 = vpow.pop %v1126
    %v1128 = vadd.f32 %v1127, 1.0
    %v1129 = vrcp.pop %v1128
    %v1130 = vmul.f32 1.0, %v1129
    %v1131 = vadd.f32 %v1120, %v386
    %1133 = vrot.lane.b32.xlu0 %v1131, 64
    %v1134 = vpop.permute.xlu0 %1133
    %v1136 = vmul.f32 %v1130, %v1134
    %1138 = vrot.lane.b32.xlu0 %v1136, 64
    %v1139 = vpop.permute.xlu0 %1138
    %v1141 = vadd.f32 %v1123, %v1139
    %v1142 = vtanh.pop %v1141
    %v1143 = vsub.f32 %v1030, %v1142
    %1145 = vrot.lane.b32.xlu0 %v1143, 96
    %v1146 = vpop.permute.xlu0 %1145
    %v1148 = vmul.f32 %v1130, %v1146
    %1150 = vrot.lane.b32.xlu0 %v1148, 32
    %v1151 = vpop.permute.xlu0 %1150
    %v1153 = vadd.f32 %v1142, %v1151
    %1155 = vrot.lane.b32.xlu0 %v1153, 64
    %v1156 = vpop.permute.xlu0 %1155
    %v1158 = vsel %vm419, %v1156, 0.0
    %1159 = vst [vmem:[#allocation3 + $0x30] sm:$0xff] %v1158
    %v1160 = vld [vmem:[#allocation7] sm:$0xff]
    %v1161 = vld [vmem:[#allocation7 + $0x8] sm:$0xff]
    %v1162 = vld [vmem:[#allocation7 + $0x10] sm:$0xff]
    %v1163 = vld [vmem:[#allocation7 + $0x18] sm:$0xff]
    %v1164 = vld [vmem:[#allocation7 + $0x20] sm:$0xff]
    %v1165 = vld [vmem:[#allocation7 + $0x28] sm:$0xff]
    %v1166 = vld [vmem:[#allocation7 + $0x30] sm:$0xff]
    %v1167 = vld [vmem:[#allocation7 + $0x38] sm:$0xff]
    %v1168 = vld [vmem:[#allocation7 + $0x40] sm:$0xff]
    %v1169 = vld [vmem:[#allocation7 + $0x48] sm:$0xff]
    %v1170 = vld [vmem:[#allocation7 + $0x50] sm:$0xff]
    %v1171 = vld [vmem:[#allocation7 + $0x58] sm:$0xff]
    %v1172 = vld [vmem:[#allocation7 + $0x60] sm:$0xff]
    %v1173 = vld [vmem:[#allocation7 + $0x68] sm:$0xff]
    %v1174 = vld [vmem:[#allocation7 + $0x70] sm:$0xff]
    %v1175 = vld [vmem:[#allocation7 + $0x78] sm:$0xff]
    %1176 = vmatprep.subr.mxu0 0.0
    %1177 = vmatpush1.msra.mxu0 %v1160
    %1178 = vmatprep.subr.mxu0 0.0
    %1179 = vmatpush1.msra.mxu0 %v1161
    %1180 = vmatprep.subr.mxu0 0.0
    %1181 = vmatpush1.msra.mxu0 %v1162
    %1182 = vmatprep.subr.mxu0 0.0
    %1183 = vmatpush1.msra.mxu0 %v1163
    %1184 = vmatprep.subr.mxu0 0.0
    %1185 = vmatpush1.msra.mxu0 %v1164
    %1186 = vmatprep.subr.mxu0 0.0
    %1187 = vmatpush1.msra.mxu0 %v1165
    %1188 = vmatprep.subr.mxu0 0.0
    %1189 = vmatpush1.msra.mxu0 %v1166
    %1190 = vmatprep.subr.mxu0 0.0
    %1191 = vmatpush1.msra.mxu0 %v1167
    %1192 = vmatprep.subr.mxu0 0.0
    %1193 = vmatpush1.msra.mxu0 %v1168
    %1194 = vmatprep.subr.mxu0 0.0
    %1195 = vmatpush1.msra.mxu0 %v1169
    %1196 = vmatprep.subr.mxu0 0.0
    %1197 = vmatpush1.msra.mxu0 %v1170
    %1198 = vmatprep.subr.mxu0 0.0
    %1199 = vmatpush1.msra.mxu0 %v1171
    %1200 = vmatprep.subr.mxu0 0.0
    %1201 = vmatpush1.msra.mxu0 %v1172
    %1202 = vmatprep.subr.mxu0 0.0
    %1203 = vmatpush1.msra.mxu0 %v1173
    %1204 = vmatprep.subr.mxu0 0.0
    %1205 = vmatpush1.msra.mxu0 %v1174
    %1206 = vmatprep.subr.mxu0 0.0
    %1207 = vmatpush1.msra.mxu0 %v1175
    %1208 = vmatprep.subr.mxu0 0.0
    %1209 = vmatpush1.msra.mxu0 0.0
    %1210 = vmatprep.subr.mxu0 0.0
    %1211 = vmatpush1.msra.mxu0 0.0
    %1212 = vmatprep.subr.mxu0 0.0
    %1213 = vmatpush1.msra.mxu0 0.0
    %1214 = vmatprep.subr.mxu0 0.0
    %1215 = vmatpush1.msra.mxu0 0.0
    %1216 = vmatprep.subr.mxu0 0.0
    %1217 = vmatpush1.msra.mxu0 0.0
    %1218 = vmatprep.subr.mxu0 0.0
    %1219 = vmatpush1.msra.mxu0 0.0
    %1220 = vmatprep.subr.mxu0 0.0
    %1221 = vmatpush1.msra.mxu0 0.0
    %1222 = vmatprep.subr.mxu0 0.0
    %1223 = vmatpush1.msra.mxu0 0.0
    %1224 = vmatprep.subr.mxu0 0.0
    %1225 = vmatpush1.msra.mxu0 0.0
    %1226 = vmatprep.subr.mxu0 0.0
    %1227 = vmatpush1.msra.mxu0 0.0
    %1228 = vmatprep.subr.mxu0 0.0
    %1229 = vmatpush1.msra.mxu0 0.0
    %1230 = vmatprep.subr.mxu0 0.0
    %1231 = vmatpush1.msra.mxu0 0.0
    %1232 = vmatprep.subr.mxu0 0.0
    %1233 = vmatpush1.msra.mxu0 0.0
    %1234 = vmatprep.subr.mxu0 0.0
    %1235 = vmatpush1.msra.mxu0 0.0
    %1236 = vmatprep.subr.mxu0 0.0
    %1237 = vmatpush1.msra.mxu0 0.0
    %1238 = vmatprep.subr.mxu0 0.0
    %1239 = vmatpush1.msra.mxu0 0.0
    %1240 = vmatprep.mubr.f32.mxu0 0.0
    %1241 = vmatmul.mubr.f32.gmra.mrb[0].mxu0 %v1158
    %v1242 = vpop.f32.mrb[0].mxu0
    %v1243 = vadd.f32 0.0, %v1242
    %v1244 = vpop.f32.mrb[0].mxu0
    %1245 = vdwg.mxu0
    %v1246 = vld [vmem:[#allocation2 + $0x38] sm:$0xff]
    %v1247 = vadd.f32 %v1246, %v1243
    %v1248 = vxor.u32 %v1247, 2147483648
    %v1249 = vmul.f32 %v1248, 1.442695
    %v1250 = vpow.pop %v1249
    %v1251 = vadd.f32 %v1250, 1.0
    %v1252 = vrcp.pop %v1251
    %v1253 = vmul.f32 1.0, %v1252
    %v1254 = vadd.f32 %v1243, %v386
    %1256 = vrot.lane.b32.xlu0 %v1254, 64
    %v1257 = vpop.permute.xlu0 %1256
    %v1259 = vmul.f32 %v1253, %v1257
    %1261 = vrot.lane.b32.xlu0 %v1259, 64
    %v1262 = vpop.permute.xlu0 %1261
    %v1264 = vadd.f32 %v1246, %v1262
    %v1265 = vtanh.pop %v1264
    %v1266 = vsub.f32 %v1153, %v1265
    %1268 = vrot.lane.b32.xlu0 %v1266, 96
    %v1269 = vpop.permute.xlu0 %1268
    %v1271 = vmul.f32 %v1253, %v1269
    %1273 = vrot.lane.b32.xlu0 %v1271, 32
    %v1274 = vpop.permute.xlu0 %1273
    %v1276 = vadd.f32 %v1265, %v1274
    %1278 = vrot.lane.b32.xlu0 %v1276, 64
    %v1279 = vpop.permute.xlu0 %1278
    %v1281 = vsel %vm419, %v1279, 0.0
    %1282 = vst [vmem:[#allocation3 + $0x38] sm:$0xff] %v1281
    %1283 = vst [vmem:[%s13] sm:$0xff] %v1281
    %v1284 = vld [vmem:[#allocation3] sm:$0xff]
    %v1285 = vld [vmem:[#allocation3 + $0x8] sm:$0xff]
    %v1286 = vld [vmem:[#allocation3 + $0x10] sm:$0xff]
    %v1287 = vld [vmem:[#allocation3 + $0x18] sm:$0xff]
    %v1288 = vld [vmem:[#allocation3 + $0x20] sm:$0xff]
    %v1289 = vld [vmem:[#allocation3 + $0x28] sm:$0xff]
    %v1290 = vld [vmem:[#allocation3 + $0x30] sm:$0xff]
    %v1291 = vld [vmem:[#allocation3 + $0x38] sm:$0xff]
    %v1292 = vld [vmem:[#allocation9] sm:$0xff]
    %v1293 = vld [vmem:[#allocation9 + $0x8] sm:$0xff]
    %v1294 = vld [vmem:[#allocation9 + $0x10] sm:$0xff]
    %v1295 = vld [vmem:[#allocation9 + $0x18] sm:$0xff]
    %v1296 = vld [vmem:[#allocation9 + $0x20] sm:$0xff]
    %v1297 = vld [vmem:[#allocation9 + $0x28] sm:$0xff]
    %v1298 = vld [vmem:[#allocation9 + $0x30] sm:$0xff]
    %v1299 = vld [vmem:[#allocation9 + $0x38] sm:$0xff]
    %v1300 = vld [vmem:[#allocation9 + $0x40] sm:$0xff]
    %v1301 = vld [vmem:[#allocation9 + $0x48] sm:$0xff]
    %v1302 = vld [vmem:[#allocation9 + $0x50] sm:$0xff]
    %v1303 = vld [vmem:[#allocation9 + $0x58] sm:$0xff]
    %v1304 = vld [vmem:[#allocation9 + $0x60] sm:$0xff]
    %v1305 = vld [vmem:[#allocation9 + $0x68] sm:$0xff]
    %v1306 = vld [vmem:[#allocation9 + $0x70] sm:$0xff]
    %v1307 = vld [vmem:[#allocation9 + $0x78] sm:$0xff]
    %v1308 = vld [vmem:[%s8] sm:$0x1]
    %v1310 = vlaneseq
    %v1311 = vshrl.u32 %v1310, 7
    %v1312 = vsub.s32 0, %v1311
    %v1313 = vrot.slane %v1308, %v1312
    %1315 = vmatprep.subr.mxu0 0.0
    %1316 = vmatpush1.msra.mxu0 %v1292
    %1317 = vmatprep.subr.mxu0 0.0
    %1318 = vmatpush1.msra.mxu0 %v1293
    %1319 = vmatprep.subr.mxu0 0.0
    %1320 = vmatpush1.msra.mxu0 %v1294
    %1321 = vmatprep.subr.mxu0 0.0
    %1322 = vmatpush1.msra.mxu0 %v1295
    %1323 = vmatprep.subr.mxu0 0.0
    %1324 = vmatpush1.msra.mxu0 %v1296
    %1325 = vmatprep.subr.mxu0 0.0
    %1326 = vmatpush1.msra.mxu0 %v1297
    %1327 = vmatprep.subr.mxu0 0.0
    %1328 = vmatpush1.msra.mxu0 %v1298
    %1329 = vmatprep.subr.mxu0 0.0
    %1330 = vmatpush1.msra.mxu0 %v1299
    %1331 = vmatprep.subr.mxu0 0.0
    %1332 = vmatpush1.msra.mxu0 %v1300
    %1333 = vmatprep.subr.mxu0 0.0
    %1334 = vmatpush1.msra.mxu0 %v1301
    %1335 = vmatprep.subr.mxu0 0.0
    %1336 = vmatpush1.msra.mxu0 %v1302
    %1337 = vmatprep.subr.mxu0 0.0
    %1338 = vmatpush1.msra.mxu0 %v1303
    %1339 = vmatprep.subr.mxu0 0.0
    %1340 = vmatpush1.msra.mxu0 %v1304
    %1341 = vmatprep.subr.mxu0 0.0
    %1342 = vmatpush1.msra.mxu0 %v1305
    %1343 = vmatprep.subr.mxu0 0.0
    %1344 = vmatpush1.msra.mxu0 %v1306
    %1345 = vmatprep.subr.mxu0 0.0
    %1346 = vmatpush1.msra.mxu0 %v1307
    %1347 = vmatprep.subr.mxu0 0.0
    %1348 = vmatpush1.msra.mxu0 0.0
    %1349 = vmatprep.subr.mxu0 0.0
    %1350 = vmatpush1.msra.mxu0 0.0
    %1351 = vmatprep.subr.mxu0 0.0
    %1352 = vmatpush1.msra.mxu0 0.0
    %1353 = vmatprep.subr.mxu0 0.0
    %1354 = vmatpush1.msra.mxu0 0.0
    %1355 = vmatprep.subr.mxu0 0.0
    %1356 = vmatpush1.msra.mxu0 0.0
    %1357 = vmatprep.subr.mxu0 0.0
    %1358 = vmatpush1.msra.mxu0 0.0
    %1359 = vmatprep.subr.mxu0 0.0
    %1360 = vmatpush1.msra.mxu0 0.0
    %1361 = vmatprep.subr.mxu0 0.0
    %1362 = vmatpush1.msra.mxu0 0.0
    %1363 = vmatprep.subr.mxu0 0.0
    %1364 = vmatpush1.msra.mxu0 0.0
    %1365 = vmatprep.subr.mxu0 0.0
    %1366 = vmatpush1.msra.mxu0 0.0
    %1367 = vmatprep.subr.mxu0 0.0
    %1368 = vmatpush1.msra.mxu0 0.0
    %1369 = vmatprep.subr.mxu0 0.0
    %1370 = vmatpush1.msra.mxu0 0.0
    %1371 = vmatprep.subr.mxu0 0.0
    %1372 = vmatpush1.msra.mxu0 0.0
    %1373 = vmatprep.subr.mxu0 0.0
    %1374 = vmatpush1.msra.mxu0 0.0
    %1375 = vmatprep.subr.mxu0 0.0
    %1376 = vmatpush1.msra.mxu0 0.0
    %1377 = vmatprep.subr.mxu0 0.0
    %1378 = vmatpush1.msra.mxu0 0.0
    %1379 = vmatprep.mubr.f32.mxu0 0.0
    %1380 = vmatmul.mubr.f32.gmra.mrb[0].mxu0 %v1284
    %v1381 = vpop.f32.mrb[0].mxu0
    %v1382 = vadd.f32 %v1313, %v1381
    %v1383 = vpop.f32.mrb[0].mxu0
    %1384 = vmatprep.mubr.f32.mxu0 0.0
    %1385 = vmatmul.mubr.f32.gmra.mrb[0].mxu0 %v1285
    %v1386 = vpop.f32.mrb[0].mxu0
    %v1387 = vadd.f32 %v1313, %v1386
    %v1388 = vpop.f32.mrb[0].mxu0
    %1389 = vmatprep.mubr.f32.mxu0 0.0
    %1390 = vmatmul.mubr.f32.gmra.mrb[0].mxu0 %v1286
    %v1391 = vpop.f32.mrb[0].mxu0
    %v1392 = vadd.f32 %v1313, %v1391
    %v1393 = vpop.f32.mrb[0].mxu0
    %1394 = vmatprep.mubr.f32.mxu0 0.0
    %1395 = vmatmul.mubr.f32.gmra.mrb[0].mxu0 %v1287
    %v1396 = vpop.f32.mrb[0].mxu0
    %v1397 = vadd.f32 %v1313, %v1396
    %v1398 = vpop.f32.mrb[0].mxu0
    %1399 = vmatprep.mubr.f32.mxu0 0.0
    %1400 = vmatmul.mubr.f32.gmra.mrb[0].mxu0 %v1288
    %v1401 = vpop.f32.mrb[0].mxu0
    %v1402 = vadd.f32 %v1313, %v1401
    %v1403 = vpop.f32.mrb[0].mxu0
    %1404 = vmatprep.mubr.f32.mxu0 0.0
    %1405 = vmatmul.mubr.f32.gmra.mrb[0].mxu0 %v1289
    %v1406 = vpop.f32.mrb[0].mxu0
    %v1407 = vadd.f32 %v1313, %v1406
    %v1408 = vpop.f32.mrb[0].mxu0
    %1409 = vmatprep.mubr.f32.mxu0 0.0
    %1410 = vmatmul.mubr.f32.gmra.mrb[0].mxu0 %v1290
    %v1411 = vpop.f32.mrb[0].mxu0
    %v1412 = vadd.f32 %v1313, %v1411
    %v1413 = vpop.f32.mrb[0].mxu0
    %1414 = vmatprep.mubr.f32.mxu0 0.0
    %1415 = vmatmul.mubr.f32.gmra.mrb[0].mxu0 %v1291
    %v1416 = vpop.f32.mrb[0].mxu0
    %v1417 = vadd.f32 %v1313, %v1416
    %v1418 = vpop.f32.mrb[0].mxu0
    %1419 = vdwg.mxu0
    %1420 = vst [vmem:[#allocation2] sm:$0xff] %v1382
    %1421 = vst [vmem:[#allocation2 + $0x8] sm:$0xff] %v1387
    %1422 = vst [vmem:[#allocation2 + $0x10] sm:$0xff] %v1392
    %1423 = vst [vmem:[#allocation2 + $0x18] sm:$0xff] %v1397
    %1424 = vst [vmem:[#allocation2 + $0x20] sm:$0xff] %v1402
    %1425 = vst [vmem:[#allocation2 + $0x28] sm:$0xff] %v1407
    %1426 = vst [vmem:[#allocation2 + $0x30] sm:$0xff] %v1412
    %1427 = vst [vmem:[#allocation2 + $0x38] sm:$0xff] %v1417
    %v1428 = vld [vmem:[%s9] sm:$0x1]
    %v1430 = vlaneseq
    %v1431 = vshrl.u32 %v1430, 7
    %v1432 = vsub.s32 0, %v1431
    %v1433 = vrot.slane %v1428, %v1432
    %s1434 = scalar_lea.vmem %s1, 8
    %v1435 = vld [vmem:[%s1434] sm:$0xff]
    %v1436 = vld [vmem:[#allocation10] sm:$0xff]
    %v1437 = vld [vmem:[#allocation10 + $0x8] sm:$0xff]
    %v1438 = vld [vmem:[#allocation10 + $0x10] sm:$0xff]
    %v1439 = vld [vmem:[#allocation10 + $0x18] sm:$0xff]
    %v1440 = vld [vmem:[#allocation10 + $0x20] sm:$0xff]
    %v1441 = vld [vmem:[#allocation10 + $0x28] sm:$0xff]
    %v1442 = vld [vmem:[#allocation10 + $0x30] sm:$0xff]
    %v1443 = vld [vmem:[#allocation10 + $0x38] sm:$0xff]
    %v1444 = vld [vmem:[#allocation10 + $0x40] sm:$0xff]
    %v1445 = vld [vmem:[#allocation10 + $0x48] sm:$0xff]
    %v1446 = vld [vmem:[#allocation10 + $0x50] sm:$0xff]
    %v1447 = vld [vmem:[#allocation10 + $0x58] sm:$0xff]
    %v1448 = vld [vmem:[#allocation10 + $0x60] sm:$0xff]
    %v1449 = vld [vmem:[#allocation10 + $0x68] sm:$0xff]
    %v1450 = vld [vmem:[#allocation10 + $0x70] sm:$0xff]
    %v1451 = vld [vmem:[#allocation10 + $0x78] sm:$0xff]
    %1452 = vmatprep.subr.mxu0 0.0
    %1453 = vmatpush1.msra.mxu0 %v1436
    %1454 = vmatprep.subr.mxu0 0.0
    %1455 = vmatpush1.msra.mxu0 %v1437
    %1456 = vmatprep.subr.mxu0 0.0
    %1457 = vmatpush1.msra.mxu0 %v1438
    %1458 = vmatprep.subr.mxu0 0.0
    %1459 = vmatpush1.msra.mxu0 %v1439
    %1460 = vmatprep.subr.mxu0 0.0
    %1461 = vmatpush1.msra.mxu0 %v1440
    %1462 = vmatprep.subr.mxu0 0.0
    %1463 = vmatpush1.msra.mxu0 %v1441
    %1464 = vmatprep.subr.mxu0 0.0
    %1465 = vmatpush1.msra.mxu0 %v1442
    %1466 = vmatprep.subr.mxu0 0.0
    %1467 = vmatpush1.msra.mxu0 %v1443
    %1468 = vmatprep.subr.mxu0 0.0
    %1469 = vmatpush1.msra.mxu0 %v1444
    %1470 = vmatprep.subr.mxu0 0.0
    %1471 = vmatpush1.msra.mxu0 %v1445
    %1472 = vmatprep.subr.mxu0 0.0
    %1473 = vmatpush1.msra.mxu0 %v1446
    %1474 = vmatprep.subr.mxu0 0.0
    %1475 = vmatpush1.msra.mxu0 %v1447
    %1476 = vmatprep.subr.mxu0 0.0
    %1477 = vmatpush1.msra.mxu0 %v1448
    %1478 = vmatprep.subr.mxu0 0.0
    %1479 = vmatpush1.msra.mxu0 %v1449
    %1480 = vmatprep.subr.mxu0 0.0
    %1481 = vmatpush1.msra.mxu0 %v1450
    %1482 = vmatprep.subr.mxu0 0.0
    %1483 = vmatpush1.msra.mxu0 %v1451
    %1484 = vmatprep.subr.mxu0 0.0
    %1485 = vmatpush1.msra.mxu0 0.0
    %1486 = vmatprep.subr.mxu0 0.0
    %1487 = vmatpush1.msra.mxu0 0.0
    %1488 = vmatprep.subr.mxu0 0.0
    %1489 = vmatpush1.msra.mxu0 0.0
    %1490 = vmatprep.subr.mxu0 0.0
    %1491 = vmatpush1.msra.mxu0 0.0
    %1492 = vmatprep.subr.mxu0 0.0
    %1493 = vmatpush1.msra.mxu0 0.0
    %1494 = vmatprep.subr.mxu0 0.0
    %1495 = vmatpush1.msra.mxu0 0.0
    %1496 = vmatprep.subr.mxu0 0.0
    %1497 = vmatpush1.msra.mxu0 0.0
    %1498 = vmatprep.subr.mxu0 0.0
    %1499 = vmatpush1.msra.mxu0 0.0
    %1500 = vmatprep.subr.mxu0 0.0
    %1501 = vmatpush1.msra.mxu0 0.0
    %1502 = vmatprep.subr.mxu0 0.0
    %1503 = vmatpush1.msra.mxu0 0.0
    %1504 = vmatprep.subr.mxu0 0.0
    %1505 = vmatpush1.msra.mxu0 0.0
    %1506 = vmatprep.subr.mxu0 0.0
    %1507 = vmatpush1.msra.mxu0 0.0
    %1508 = vmatprep.subr.mxu0 0.0
    %1509 = vmatpush1.msra.mxu0 0.0
    %1510 = vmatprep.subr.mxu0 0.0
    %1511 = vmatpush1.msra.mxu0 0.0
    %1512 = vmatprep.subr.mxu0 0.0
    %1513 = vmatpush1.msra.mxu0 0.0
    %1514 = vmatprep.subr.mxu0 0.0
    %1515 = vmatpush1.msra.mxu0 0.0
    %1516 = vmatprep.mubr.f32.mxu0 0.0
    %1517 = vmatmul.mubr.f32.gmra.mrb[0].mxu0 %v1435
    %v1518 = vpop.f32.mrb[0].mxu0
    %v1519 = vadd.f32 0.0, %v1518
    %v1520 = vpop.f32.mrb[0].mxu0
    %1521 = vdwg.mxu0
    %v1522 = vld [vmem:[#allocation2] sm:$0xff]
    %v1523 = vadd.f32 %v1522, %v1519
    %v1524 = vxor.u32 %v1523, 2147483648
    %v1525 = vmul.f32 %v1524, 1.442695
    %v1526 = vpow.pop %v1525
    %v1527 = vadd.f32 %v1526, 1.0
    %v1528 = vrcp.pop %v1527
    %v1529 = vmul.f32 1.0, %v1528
    %1530 = vrot.lane.b32.xlu0 %v1433, 64
    %v1531 = vpop.permute.xlu0 %1530
    %v1533 = vadd.f32 %v1519, %v1531
    %1535 = vrot.lane.b32.xlu0 %v1533, 64
    %v1536 = vpop.permute.xlu0 %1535
    %v1538 = vmul.f32 %v1529, %v1536
    %1540 = vrot.lane.b32.xlu0 %v1538, 64
    %v1541 = vpop.permute.xlu0 %1540
    %v1543 = vadd.f32 %v1522, %v1541
    %v1544 = vtanh.pop %v1543
    %1546 = vrot.lane.b32.xlu0 %v1544, 64
    %v1547 = vpop.permute.xlu0 %1546
    %v1549 = vsub.f32 %v1435, %v1547
    %1551 = vrot.lane.b32.xlu0 %v1549, 32
    %v1552 = vpop.permute.xlu0 %1551
    %v1554 = vmul.f32 %v1529, %v1552
    %1556 = vrot.lane.b32.xlu0 %v1554, 32
    %v1557 = vpop.permute.xlu0 %1556
    %v1559 = vadd.f32 %v1544, %v1557
    %1561 = vrot.lane.b32.xlu0 %v1559, 64
    %v1562 = vpop.permute.xlu0 %1561
    %v1564 = vsel %vm419, %v1562, 0.0
    %1565 = vst [vmem:[#allocation4] sm:$0xff] %v1564
    %v1566 = vld [vmem:[#allocation10] sm:$0xff]
    %v1567 = vld [vmem:[#allocation10 + $0x8] sm:$0xff]
    %v1568 = vld [vmem:[#allocation10 + $0x10] sm:$0xff]
    %v1569 = vld [vmem:[#allocation10 + $0x18] sm:$0xff]
    %v1570 = vld [vmem:[#allocation10 + $0x20] sm:$0xff]
    %v1571 = vld [vmem:[#allocation10 + $0x28] sm:$0xff]
    %v1572 = vld [vmem:[#allocation10 + $0x30] sm:$0xff]
    %v1573 = vld [vmem:[#allocation10 + $0x38] sm:$0xff]
    %v1574 = vld [vmem:[#allocation10 + $0x40] sm:$0xff]
    %v1575 = vld [vmem:[#allocation10 + $0x48] sm:$0xff]
    %v1576 = vld [vmem:[#allocation10 + $0x50] sm:$0xff]
    %v1577 = vld [vmem:[#allocation10 + $0x58] sm:$0xff]
    %v1578 = vld [vmem:[#allocation10 + $0x60] sm:$0xff]
    %v1579 = vld [vmem:[#allocation10 + $0x68] sm:$0xff]
    %v1580 = vld [vmem:[#allocation10 + $0x70] sm:$0xff]
    %v1581 = vld [vmem:[#allocation10 + $0x78] sm:$0xff]
    %1582 = vmatprep.subr.mxu0 0.0
    %1583 = vmatpush1.msra.mxu0 %v1566
    %1584 = vmatprep.subr.mxu0 0.0
    %1585 = vmatpush1.msra.mxu0 %v1567
    %1586 = vmatprep.subr.mxu0 0.0
    %1587 = vmatpush1.msra.mxu0 %v1568
    %1588 = vmatprep.subr.mxu0 0.0
    %1589 = vmatpush1.msra.mxu0 %v1569
    %1590 = vmatprep.subr.mxu0 0.0
    %1591 = vmatpush1.msra.mxu0 %v1570
    %1592 = vmatprep.subr.mxu0 0.0
    %1593 = vmatpush1.msra.mxu0 %v1571
    %1594 = vmatprep.subr.mxu0 0.0
    %1595 = vmatpush1.msra.mxu0 %v1572
    %1596 = vmatprep.subr.mxu0 0.0
    %1597 = vmatpush1.msra.mxu0 %v1573
    %1598 = vmatprep.subr.mxu0 0.0
    %1599 = vmatpush1.msra.mxu0 %v1574
    %1600 = vmatprep.subr.mxu0 0.0
    %1601 = vmatpush1.msra.mxu0 %v1575
    %1602 = vmatprep.subr.mxu0 0.0
    %1603 = vmatpush1.msra.mxu0 %v1576
    %1604 = vmatprep.subr.mxu0 0.0
    %1605 = vmatpush1.msra.mxu0 %v1577
    %1606 = vmatprep.subr.mxu0 0.0
    %1607 = vmatpush1.msra.mxu0 %v1578
    %1608 = vmatprep.subr.mxu0 0.0
    %1609 = vmatpush1.msra.mxu0 %v1579
    %1610 = vmatprep.subr.mxu0 0.0
    %1611 = vmatpush1.msra.mxu0 %v1580
    %1612 = vmatprep.subr.mxu0 0.0
    %1613 = vmatpush1.msra.mxu0 %v1581
    %1614 = vmatprep.subr.mxu0 0.0
    %1615 = vmatpush1.msra.mxu0 0.0
    %1616 = vmatprep.subr.mxu0 0.0
    %1617 = vmatpush1.msra.mxu0 0.0
    %1618 = vmatprep.subr.mxu0 0.0
    %1619 = vmatpush1.msra.mxu0 0.0
    %1620 = vmatprep.subr.mxu0 0.0
    %1621 = vmatpush1.msra.mxu0 0.0
    %1622 = vmatprep.subr.mxu0 0.0
    %1623 = vmatpush1.msra.mxu0 0.0
    %1624 = vmatprep.subr.mxu0 0.0
    %1625 = vmatpush1.msra.mxu0 0.0
    %1626 = vmatprep.subr.mxu0 0.0
    %1627 = vmatpush1.msra.mxu0 0.0
    %1628 = vmatprep.subr.mxu0 0.0
    %1629 = vmatpush1.msra.mxu0 0.0
    %1630 = vmatprep.subr.mxu0 0.0
    %1631 = vmatpush1.msra.mxu0 0.0
    %1632 = vmatprep.subr.mxu0 0.0
    %1633 = vmatpush1.msra.mxu0 0.0
    %1634 = vmatprep.subr.mxu0 0.0
    %1635 = vmatpush1.msra.mxu0 0.0
    %1636 = vmatprep.subr.mxu0 0.0
    %1637 = vmatpush1.msra.mxu0 0.0
    %1638 = vmatprep.subr.mxu0 0.0
    %1639 = vmatpush1.msra.mxu0 0.0
    %1640 = vmatprep.subr.mxu0 0.0
    %1641 = vmatpush1.msra.mxu0 0.0
    %1642 = vmatprep.subr.mxu0 0.0
    %1643 = vmatpush1.msra.mxu0 0.0
    %1644 = vmatprep.subr.mxu0 0.0
    %1645 = vmatpush1.msra.mxu0 0.0
    %1646 = vmatprep.mubr.f32.mxu0 0.0
    %1647 = vmatmul.mubr.f32.gmra.mrb[0].mxu0 %v1564
    %v1648 = vpop.f32.mrb[0].mxu0
    %v1649 = vadd.f32 0.0, %v1648
    %v1650 = vpop.f32.mrb[0].mxu0
    %1651 = vdwg.mxu0
    %v1652 = vld [vmem:[#allocation2 + $0x8] sm:$0xff]
    %v1653 = vadd.f32 %v1652, %v1649
    %v1654 = vxor.u32 %v1653, 2147483648
    %v1655 = vmul.f32 %v1654, 1.442695
    %v1656 = vpow.pop %v1655
    %v1657 = vadd.f32 %v1656, 1.0
    %v1658 = vrcp.pop %v1657
    %v1659 = vmul.f32 1.0, %v1658
    %v1660 = vadd.f32 %v1649, %v1531
    %1662 = vrot.lane.b32.xlu0 %v1660, 64
    %v1663 = vpop.permute.xlu0 %1662
    %v1665 = vmul.f32 %v1659, %v1663
    %1667 = vrot.lane.b32.xlu0 %v1665, 64
    %v1668 = vpop.permute.xlu0 %1667
    %v1670 = vadd.f32 %v1652, %v1668
    %v1671 = vtanh.pop %v1670
    %v1672 = vsub.f32 %v1559, %v1671
    %1674 = vrot.lane.b32.xlu0 %v1672, 96
    %v1675 = vpop.permute.xlu0 %1674
    %v1677 = vmul.f32 %v1659, %v1675
    %1679 = vrot.lane.b32.xlu0 %v1677, 32
    %v1680 = vpop.permute.xlu0 %1679
    %v1682 = vadd.f32 %v1671, %v1680
    %1684 = vrot.lane.b32.xlu0 %v1682, 64
    %v1685 = vpop.permute.xlu0 %1684
    %v1687 = vsel %vm419, %v1685, 0.0
    %1688 = vst [vmem:[#allocation4 + $0x8] sm:$0xff] %v1687
    %v1689 = vld [vmem:[#allocation10] sm:$0xff]
    %v1690 = vld [vmem:[#allocation10 + $0x8] sm:$0xff]
    %v1691 = vld [vmem:[#allocation10 + $0x10] sm:$0xff]
    %v1692 = vld [vmem:[#allocation10 + $0x18] sm:$0xff]
    %v1693 = vld [vmem:[#allocation10 + $0x20] sm:$0xff]
    %v1694 = vld [vmem:[#allocation10 + $0x28] sm:$0xff]
    %v1695 = vld [vmem:[#allocation10 + $0x30] sm:$0xff]
    %v1696 = vld [vmem:[#allocation10 + $0x38] sm:$0xff]
    %v1697 = vld [vmem:[#allocation10 + $0x40] sm:$0xff]
    %v1698 = vld [vmem:[#allocation10 + $0x48] sm:$0xff]
    %v1699 = vld [vmem:[#allocation10 + $0x50] sm:$0xff]
    %v1700 = vld [vmem:[#allocation10 + $0x58] sm:$0xff]
    %v1701 = vld [vmem:[#allocation10 + $0x60] sm:$0xff]
    %v1702 = vld [vmem:[#allocation10 + $0x68] sm:$0xff]
    %v1703 = vld [vmem:[#allocation10 + $0x70] sm:$0xff]
    %v1704 = vld [vmem:[#allocation10 + $0x78] sm:$0xff]
    %1705 = vmatprep.subr.mxu0 0.0
    %1706 = vmatpush1.msra.mxu0 %v1689
    %1707 = vmatprep.subr.mxu0 0.0
    %1708 = vmatpush1.msra.mxu0 %v1690
    %1709 = vmatprep.subr.mxu0 0.0
    %1710 = vmatpush1.msra.mxu0 %v1691
    %1711 = vmatprep.subr.mxu0 0.0
    %1712 = vmatpush1.msra.mxu0 %v1692
    %1713 = vmatprep.subr.mxu0 0.0
    %1714 = vmatpush1.msra.mxu0 %v1693
    %1715 = vmatprep.subr.mxu0 0.0
    %1716 = vmatpush1.msra.mxu0 %v1694
    %1717 = vmatprep.subr.mxu0 0.0
    %1718 = vmatpush1.msra.mxu0 %v1695
    %1719 = vmatprep.subr.mxu0 0.0
    %1720 = vmatpush1.msra.mxu0 %v1696
    %1721 = vmatprep.subr.mxu0 0.0
    %1722 = vmatpush1.msra.mxu0 %v1697
    %1723 = vmatprep.subr.mxu0 0.0
    %1724 = vmatpush1.msra.mxu0 %v1698
    %1725 = vmatprep.subr.mxu0 0.0
    %1726 = vmatpush1.msra.mxu0 %v1699
    %1727 = vmatprep.subr.mxu0 0.0
    %1728 = vmatpush1.msra.mxu0 %v1700
    %1729 = vmatprep.subr.mxu0 0.0
    %1730 = vmatpush1.msra.mxu0 %v1701
    %1731 = vmatprep.subr.mxu0 0.0
    %1732 = vmatpush1.msra.mxu0 %v1702
    %1733 = vmatprep.subr.mxu0 0.0
    %1734 = vmatpush1.msra.mxu0 %v1703
    %1735 = vmatprep.subr.mxu0 0.0
    %1736 = vmatpush1.msra.mxu0 %v1704
    %1737 = vmatprep.subr.mxu0 0.0
    %1738 = vmatpush1.msra.mxu0 0.0
    %1739 = vmatprep.subr.mxu0 0.0
    %1740 = vmatpush1.msra.mxu0 0.0
    %1741 = vmatprep.subr.mxu0 0.0
    %1742 = vmatpush1.msra.mxu0 0.0
    %1743 = vmatprep.subr.mxu0 0.0
    %1744 = vmatpush1.msra.mxu0 0.0
    %1745 = vmatprep.subr.mxu0 0.0
    %1746 = vmatpush1.msra.mxu0 0.0
    %1747 = vmatprep.subr.mxu0 0.0
    %1748 = vmatpush1.msra.mxu0 0.0
    %1749 = vmatprep.subr.mxu0 0.0
    %1750 = vmatpush1.msra.mxu0 0.0
    %1751 = vmatprep.subr.mxu0 0.0
    %1752 = vmatpush1.msra.mxu0 0.0
    %1753 = vmatprep.subr.mxu0 0.0
    %1754 = vmatpush1.msra.mxu0 0.0
    %1755 = vmatprep.subr.mxu0 0.0
    %1756 = vmatpush1.msra.mxu0 0.0
    %1757 = vmatprep.subr.mxu0 0.0
    %1758 = vmatpush1.msra.mxu0 0.0
    %1759 = vmatprep.subr.mxu0 0.0
    %1760 = vmatpush1.msra.mxu0 0.0
    %1761 = vmatprep.subr.mxu0 0.0
    %1762 = vmatpush1.msra.mxu0 0.0
    %1763 = vmatprep.subr.mxu0 0.0
    %1764 = vmatpush1.msra.mxu0 0.0
    %1765 = vmatprep.subr.mxu0 0.0
    %1766 = vmatpush1.msra.mxu0 0.0
    %1767 = vmatprep.subr.mxu0 0.0
    %1768 = vmatpush1.msra.mxu0 0.0
    %1769 = vmatprep.mubr.f32.mxu0 0.0
    %1770 = vmatmul.mubr.f32.gmra.mrb[0].mxu0 %v1687
    %v1771 = vpop.f32.mrb[0].mxu0
    %v1772 = vadd.f32 0.0, %v1771
    %v1773 = vpop.f32.mrb[0].mxu0
    %1774 = vdwg.mxu0
    %v1775 = vld [vmem:[#allocation2 + $0x10] sm:$0xff]
    %v1776 = vadd.f32 %v1775, %v1772
    %v1777 = vxor.u32 %v1776, 2147483648
    %v1778 = vmul.f32 %v1777, 1.442695
    %v1779 = vpow.pop %v1778
    %v1780 = vadd.f32 %v1779, 1.0
    %v1781 = vrcp.pop %v1780
    %v1782 = vmul.f32 1.0, %v1781
    %v1783 = vadd.f32 %v1772, %v1531
    %1785 = vrot.lane.b32.xlu0 %v1783, 64
    %v1786 = vpop.permute.xlu0 %1785
    %v1788 = vmul.f32 %v1782, %v1786
    %1790 = vrot.lane.b32.xlu0 %v1788, 64
    %v1791 = vpop.permute.xlu0 %1790
    %v1793 = vadd.f32 %v1775, %v1791
    %v1794 = vtanh.pop %v1793
    %v1795 = vsub.f32 %v1682, %v1794
    %1797 = vrot.lane.b32.xlu0 %v1795, 96
    %v1798 = vpop.permute.xlu0 %1797
    %v1800 = vmul.f32 %v1782, %v1798
    %1802 = vrot.lane.b32.xlu0 %v1800, 32
    %v1803 = vpop.permute.xlu0 %1802
    %v1805 = vadd.f32 %v1794, %v1803
    %1807 = vrot.lane.b32.xlu0 %v1805, 64
    %v1808 = vpop.permute.xlu0 %1807
    %v1810 = vsel %vm419, %v1808, 0.0
    %1811 = vst [vmem:[#allocation4 + $0x10] sm:$0xff] %v1810
    %v1812 = vld [vmem:[#allocation10] sm:$0xff]
    %v1813 = vld [vmem:[#allocation10 + $0x8] sm:$0xff]
    %v1814 = vld [vmem:[#allocation10 + $0x10] sm:$0xff]
    %v1815 = vld [vmem:[#allocation10 + $0x18] sm:$0xff]
    %v1816 = vld [vmem:[#allocation10 + $0x20] sm:$0xff]
    %v1817 = vld [vmem:[#allocation10 + $0x28] sm:$0xff]
    %v1818 = vld [vmem:[#allocation10 + $0x30] sm:$0xff]
    %v1819 = vld [vmem:[#allocation10 + $0x38] sm:$0xff]
    %v1820 = vld [vmem:[#allocation10 + $0x40] sm:$0xff]
    %v1821 = vld [vmem:[#allocation10 + $0x48] sm:$0xff]
    %v1822 = vld [vmem:[#allocation10 + $0x50] sm:$0xff]
    %v1823 = vld [vmem:[#allocation10 + $0x58] sm:$0xff]
    %v1824 = vld [vmem:[#allocation10 + $0x60] sm:$0xff]
    %v1825 = vld [vmem:[#allocation10 + $0x68] sm:$0xff]
    %v1826 = vld [vmem:[#allocation10 + $0x70] sm:$0xff]
    %v1827 = vld [vmem:[#allocation10 + $0x78] sm:$0xff]
    %1828 = vmatprep.subr.mxu0 0.0
    %1829 = vmatpush1.msra.mxu0 %v1812
    %1830 = vmatprep.subr.mxu0 0.0
    %1831 = vmatpush1.msra.mxu0 %v1813
    %1832 = vmatprep.subr.mxu0 0.0
    %1833 = vmatpush1.msra.mxu0 %v1814
    %1834 = vmatprep.subr.mxu0 0.0
    %1835 = vmatpush1.msra.mxu0 %v1815
    %1836 = vmatprep.subr.mxu0 0.0
    %1837 = vmatpush1.msra.mxu0 %v1816
    %1838 = vmatprep.subr.mxu0 0.0
    %1839 = vmatpush1.msra.mxu0 %v1817
    %1840 = vmatprep.subr.mxu0 0.0
    %1841 = vmatpush1.msra.mxu0 %v1818
    %1842 = vmatprep.subr.mxu0 0.0
    %1843 = vmatpush1.msra.mxu0 %v1819
    %1844 = vmatprep.subr.mxu0 0.0
    %1845 = vmatpush1.msra.mxu0 %v1820
    %1846 = vmatprep.subr.mxu0 0.0
    %1847 = vmatpush1.msra.mxu0 %v1821
    %1848 = vmatprep.subr.mxu0 0.0
    %1849 = vmatpush1.msra.mxu0 %v1822
    %1850 = vmatprep.subr.mxu0 0.0
    %1851 = vmatpush1.msra.mxu0 %v1823
    %1852 = vmatprep.subr.mxu0 0.0
    %1853 = vmatpush1.msra.mxu0 %v1824
    %1854 = vmatprep.subr.mxu0 0.0
    %1855 = vmatpush1.msra.mxu0 %v1825
    %1856 = vmatprep.subr.mxu0 0.0
    %1857 = vmatpush1.msra.mxu0 %v1826
    %1858 = vmatprep.subr.mxu0 0.0
    %1859 = vmatpush1.msra.mxu0 %v1827
    %1860 = vmatprep.subr.mxu0 0.0
    %1861 = vmatpush1.msra.mxu0 0.0
    %1862 = vmatprep.subr.mxu0 0.0
    %1863 = vmatpush1.msra.mxu0 0.0
    %1864 = vmatprep.subr.mxu0 0.0
    %1865 = vmatpush1.msra.mxu0 0.0
    %1866 = vmatprep.subr.mxu0 0.0
    %1867 = vmatpush1.msra.mxu0 0.0
    %1868 = vmatprep.subr.mxu0 0.0
    %1869 = vmatpush1.msra.mxu0 0.0
    %1870 = vmatprep.subr.mxu0 0.0
    %1871 = vmatpush1.msra.mxu0 0.0
    %1872 = vmatprep.subr.mxu0 0.0
    %1873 = vmatpush1.msra.mxu0 0.0
    %1874 = vmatprep.subr.mxu0 0.0
    %1875 = vmatpush1.msra.mxu0 0.0
    %1876 = vmatprep.subr.mxu0 0.0
    %1877 = vmatpush1.msra.mxu0 0.0
    %1878 = vmatprep.subr.mxu0 0.0
    %1879 = vmatpush1.msra.mxu0 0.0
    %1880 = vmatprep.subr.mxu0 0.0
    %1881 = vmatpush1.msra.mxu0 0.0
    %1882 = vmatprep.subr.mxu0 0.0
    %1883 = vmatpush1.msra.mxu0 0.0
    %1884 = vmatprep.subr.mxu0 0.0
    %1885 = vmatpush1.msra.mxu0 0.0
    %1886 = vmatprep.subr.mxu0 0.0
    %1887 = vmatpush1.msra.mxu0 0.0
    %1888 = vmatprep.subr.mxu0 0.0
    %1889 = vmatpush1.msra.mxu0 0.0
    %1890 = vmatprep.subr.mxu0 0.0
    %1891 = vmatpush1.msra.mxu0 0.0
    %1892 = vmatprep.mubr.f32.mxu0 0.0
    %1893 = vmatmul.mubr.f32.gmra.mrb[0].mxu0 %v1810
    %v1894 = vpop.f32.mrb[0].mxu0
    %v1895 = vadd.f32 0.0, %v1894
    %v1896 = vpop.f32.mrb[0].mxu0
    %1897 = vdwg.mxu0
    %v1898 = vld [vmem:[#allocation2 + $0x18] sm:$0xff]
    %v1899 = vadd.f32 %v1898, %v1895
    %v1900 = vxor.u32 %v1899, 2147483648
    %v1901 = vmul.f32 %v1900, 1.442695
    %v1902 = vpow.pop %v1901
    %v1903 = vadd.f32 %v1902, 1.0
    %v1904 = vrcp.pop %v1903
    %v1905 = vmul.f32 1.0, %v1904
    %v1906 = vadd.f32 %v1895, %v1531
    %1908 = vrot.lane.b32.xlu0 %v1906, 64
    %v1909 = vpop.permute.xlu0 %1908
    %v1911 = vmul.f32 %v1905, %v1909
    %1913 = vrot.lane.b32.xlu0 %v1911, 64
    %v1914 = vpop.permute.xlu0 %1913
    %v1916 = vadd.f32 %v1898, %v1914
    %v1917 = vtanh.pop %v1916
    %v1918 = vsub.f32 %v1805, %v1917
    %1920 = vrot.lane.b32.xlu0 %v1918, 96
    %v1921 = vpop.permute.xlu0 %1920
    %v1923 = vmul.f32 %v1905, %v1921
    %1925 = vrot.lane.b32.xlu0 %v1923, 32
    %v1926 = vpop.permute.xlu0 %1925
    %v1928 = vadd.f32 %v1917, %v1926
    %1930 = vrot.lane.b32.xlu0 %v1928, 64
    %v1931 = vpop.permute.xlu0 %1930
    %v1933 = vsel %vm419, %v1931, 0.0
    %1934 = vst [vmem:[#allocation4 + $0x18] sm:$0xff] %v1933
    %v1935 = vld [vmem:[#allocation10] sm:$0xff]
    %v1936 = vld [vmem:[#allocation10 + $0x8] sm:$0xff]
    %v1937 = vld [vmem:[#allocation10 + $0x10] sm:$0xff]
    %v1938 = vld [vmem:[#allocation10 + $0x18] sm:$0xff]
    %v1939 = vld [vmem:[#allocation10 + $0x20] sm:$0xff]
    %v1940 = vld [vmem:[#allocation10 + $0x28] sm:$0xff]
    %v1941 = vld [vmem:[#allocation10 + $0x30] sm:$0xff]
    %v1942 = vld [vmem:[#allocation10 + $0x38] sm:$0xff]
    %v1943 = vld [vmem:[#allocation10 + $0x40] sm:$0xff]
    %v1944 = vld [vmem:[#allocation10 + $0x48] sm:$0xff]
    %v1945 = vld [vmem:[#allocation10 + $0x50] sm:$0xff]
    %v1946 = vld [vmem:[#allocation10 + $0x58] sm:$0xff]
    %v1947 = vld [vmem:[#allocation10 + $0x60] sm:$0xff]
    %v1948 = vld [vmem:[#allocation10 + $0x68] sm:$0xff]
    %v1949 = vld [vmem:[#allocation10 + $0x70] sm:$0xff]
    %v1950 = vld [vmem:[#allocation10 + $0x78] sm:$0xff]
    %1951 = vmatprep.subr.mxu0 0.0
    %1952 = vmatpush1.msra.mxu0 %v1935
    %1953 = vmatprep.subr.mxu0 0.0
    %1954 = vmatpush1.msra.mxu0 %v1936
    %1955 = vmatprep.subr.mxu0 0.0
    %1956 = vmatpush1.msra.mxu0 %v1937
    %1957 = vmatprep.subr.mxu0 0.0
    %1958 = vmatpush1.msra.mxu0 %v1938
    %1959 = vmatprep.subr.mxu0 0.0
    %1960 = vmatpush1.msra.mxu0 %v1939
    %1961 = vmatprep.subr.mxu0 0.0
    %1962 = vmatpush1.msra.mxu0 %v1940
    %1963 = vmatprep.subr.mxu0 0.0
    %1964 = vmatpush1.msra.mxu0 %v1941
    %1965 = vmatprep.subr.mxu0 0.0
    %1966 = vmatpush1.msra.mxu0 %v1942
    %1967 = vmatprep.subr.mxu0 0.0
    %1968 = vmatpush1.msra.mxu0 %v1943
    %1969 = vmatprep.subr.mxu0 0.0
    %1970 = vmatpush1.msra.mxu0 %v1944
    %1971 = vmatprep.subr.mxu0 0.0
    %1972 = vmatpush1.msra.mxu0 %v1945
    %1973 = vmatprep.subr.mxu0 0.0
    %1974 = vmatpush1.msra.mxu0 %v1946
    %1975 = vmatprep.subr.mxu0 0.0
    %1976 = vmatpush1.msra.mxu0 %v1947
    %1977 = vmatprep.subr.mxu0 0.0
    %1978 = vmatpush1.msra.mxu0 %v1948
    %1979 = vmatprep.subr.mxu0 0.0
    %1980 = vmatpush1.msra.mxu0 %v1949
    %1981 = vmatprep.subr.mxu0 0.0
    %1982 = vmatpush1.msra.mxu0 %v1950
    %1983 = vmatprep.subr.mxu0 0.0
    %1984 = vmatpush1.msra.mxu0 0.0
    %1985 = vmatprep.subr.mxu0 0.0
    %1986 = vmatpush1.msra.mxu0 0.0
    %1987 = vmatprep.subr.mxu0 0.0
    %1988 = vmatpush1.msra.mxu0 0.0
    %1989 = vmatprep.subr.mxu0 0.0
    %1990 = vmatpush1.msra.mxu0 0.0
    %1991 = vmatprep.subr.mxu0 0.0
    %1992 = vmatpush1.msra.mxu0 0.0
    %1993 = vmatprep.subr.mxu0 0.0
    %1994 = vmatpush1.msra.mxu0 0.0
    %1995 = vmatprep.subr.mxu0 0.0
    %1996 = vmatpush1.msra.mxu0 0.0
    %1997 = vmatprep.subr.mxu0 0.0
    %1998 = vmatpush1.msra.mxu0 0.0
    %1999 = vmatprep.subr.mxu0 0.0
    %2000 = vmatpush1.msra.mxu0 0.0
    %2001 = vmatprep.subr.mxu0 0.0
    %2002 = vmatpush1.msra.mxu0 0.0
    %2003 = vmatprep.subr.mxu0 0.0
    %2004 = vmatpush1.msra.mxu0 0.0
    %2005 = vmatprep.subr.mxu0 0.0
    %2006 = vmatpush1.msra.mxu0 0.0
    %2007 = vmatprep.subr.mxu0 0.0
    %2008 = vmatpush1.msra.mxu0 0.0
    %2009 = vmatprep.subr.mxu0 0.0
    %2010 = vmatpush1.msra.mxu0 0.0
    %2011 = vmatprep.subr.mxu0 0.0
    %2012 = vmatpush1.msra.mxu0 0.0
    %2013 = vmatprep.subr.mxu0 0.0
    %2014 = vmatpush1.msra.mxu0 0.0
    %2015 = vmatprep.mubr.f32.mxu0 0.0
    %2016 = vmatmul.mubr.f32.gmra.mrb[0].mxu0 %v1933
    %v2017 = vpop.f32.mrb[0].mxu0
    %v2018 = vadd.f32 0.0, %v2017
    %v2019 = vpop.f32.mrb[0].mxu0
    %2020 = vdwg.mxu0
    %v2021 = vld [vmem:[#allocation2 + $0x20] sm:$0xff]
    %v2022 = vadd.f32 %v2021, %v2018
    %v2023 = vxor.u32 %v2022, 2147483648
    %v2024 = vmul.f32 %v2023, 1.442695
    %v2025 = vpow.pop %v2024
    %v2026 = vadd.f32 %v2025, 1.0
    %v2027 = vrcp.pop %v2026
    %v2028 = vmul.f32 1.0, %v2027
    %v2029 = vadd.f32 %v2018, %v1531
    %2031 = vrot.lane.b32.xlu0 %v2029, 64
    %v2032 = vpop.permute.xlu0 %2031
    %v2034 = vmul.f32 %v2028, %v2032
    %2036 = vrot.lane.b32.xlu0 %v2034, 64
    %v2037 = vpop.permute.xlu0 %2036
    %v2039 = vadd.f32 %v2021, %v2037
    %v2040 = vtanh.pop %v2039
    %v2041 = vsub.f32 %v1928, %v2040
    %2043 = vrot.lane.b32.xlu0 %v2041, 96
    %v2044 = vpop.permute.xlu0 %2043
    %v2046 = vmul.f32 %v2028, %v2044
    %2048 = vrot.lane.b32.xlu0 %v2046, 32
    %v2049 = vpop.permute.xlu0 %2048
    %v2051 = vadd.f32 %v2040, %v2049
    %2053 = vrot.lane.b32.xlu0 %v2051, 64
    %v2054 = vpop.permute.xlu0 %2053
    %v2056 = vsel %vm419, %v2054, 0.0
    %2057 = vst [vmem:[#allocation4 + $0x20] sm:$0xff] %v2056
    %v2058 = vld [vmem:[#allocation10] sm:$0xff]
    %v2059 = vld [vmem:[#allocation10 + $0x8] sm:$0xff]
    %v2060 = vld [vmem:[#allocation10 + $0x10] sm:$0xff]
    %v2061 = vld [vmem:[#allocation10 + $0x18] sm:$0xff]
    %v2062 = vld [vmem:[#allocation10 + $0x20] sm:$0xff]
    %v2063 = vld [vmem:[#allocation10 + $0x28] sm:$0xff]
    %v2064 = vld [vmem:[#allocation10 + $0x30] sm:$0xff]
    %v2065 = vld [vmem:[#allocation10 + $0x38] sm:$0xff]
    %v2066 = vld [vmem:[#allocation10 + $0x40] sm:$0xff]
    %v2067 = vld [vmem:[#allocation10 + $0x48] sm:$0xff]
    %v2068 = vld [vmem:[#allocation10 + $0x50] sm:$0xff]
    %v2069 = vld [vmem:[#allocation10 + $0x58] sm:$0xff]
    %v2070 = vld [vmem:[#allocation10 + $0x60] sm:$0xff]
    %v2071 = vld [vmem:[#allocation10 + $0x68] sm:$0xff]
    %v2072 = vld [vmem:[#allocation10 + $0x70] sm:$0xff]
    %v2073 = vld [vmem:[#allocation10 + $0x78] sm:$0xff]
    %2074 = vmatprep.subr.mxu0 0.0
    %2075 = vmatpush1.msra.mxu0 %v2058
    %2076 = vmatprep.subr.mxu0 0.0
    %2077 = vmatpush1.msra.mxu0 %v2059
    %2078 = vmatprep.subr.mxu0 0.0
    %2079 = vmatpush1.msra.mxu0 %v2060
    %2080 = vmatprep.subr.mxu0 0.0
    %2081 = vmatpush1.msra.mxu0 %v2061
    %2082 = vmatprep.subr.mxu0 0.0
    %2083 = vmatpush1.msra.mxu0 %v2062
    %2084 = vmatprep.subr.mxu0 0.0
    %2085 = vmatpush1.msra.mxu0 %v2063
    %2086 = vmatprep.subr.mxu0 0.0
    %2087 = vmatpush1.msra.mxu0 %v2064
    %2088 = vmatprep.subr.mxu0 0.0
    %2089 = vmatpush1.msra.mxu0 %v2065
    %2090 = vmatprep.subr.mxu0 0.0
    %2091 = vmatpush1.msra.mxu0 %v2066
    %2092 = vmatprep.subr.mxu0 0.0
    %2093 = vmatpush1.msra.mxu0 %v2067
    %2094 = vmatprep.subr.mxu0 0.0
    %2095 = vmatpush1.msra.mxu0 %v2068
    %2096 = vmatprep.subr.mxu0 0.0
    %2097 = vmatpush1.msra.mxu0 %v2069
    %2098 = vmatprep.subr.mxu0 0.0
    %2099 = vmatpush1.msra.mxu0 %v2070
    %2100 = vmatprep.subr.mxu0 0.0
    %2101 = vmatpush1.msra.mxu0 %v2071
    %2102 = vmatprep.subr.mxu0 0.0
    %2103 = vmatpush1.msra.mxu0 %v2072
    %2104 = vmatprep.subr.mxu0 0.0
    %2105 = vmatpush1.msra.mxu0 %v2073
    %2106 = vmatprep.subr.mxu0 0.0
    %2107 = vmatpush1.msra.mxu0 0.0
    %2108 = vmatprep.subr.mxu0 0.0
    %2109 = vmatpush1.msra.mxu0 0.0
    %2110 = vmatprep.subr.mxu0 0.0
    %2111 = vmatpush1.msra.mxu0 0.0
    %2112 = vmatprep.subr.mxu0 0.0
    %2113 = vmatpush1.msra.mxu0 0.0
    %2114 = vmatprep.subr.mxu0 0.0
    %2115 = vmatpush1.msra.mxu0 0.0
    %2116 = vmatprep.subr.mxu0 0.0
    %2117 = vmatpush1.msra.mxu0 0.0
    %2118 = vmatprep.subr.mxu0 0.0
    %2119 = vmatpush1.msra.mxu0 0.0
    %2120 = vmatprep.subr.mxu0 0.0
    %2121 = vmatpush1.msra.mxu0 0.0
    %2122 = vmatprep.subr.mxu0 0.0
    %2123 = vmatpush1.msra.mxu0 0.0
    %2124 = vmatprep.subr.mxu0 0.0
    %2125 = vmatpush1.msra.mxu0 0.0
    %2126 = vmatprep.subr.mxu0 0.0
    %2127 = vmatpush1.msra.mxu0 0.0
    %2128 = vmatprep.subr.mxu0 0.0
    %2129 = vmatpush1.msra.mxu0 0.0
    %2130 = vmatprep.subr.mxu0 0.0
    %2131 = vmatpush1.msra.mxu0 0.0
    %2132 = vmatprep.subr.mxu0 0.0
    %2133 = vmatpush1.msra.mxu0 0.0
    %2134 = vmatprep.subr.mxu0 0.0
    %2135 = vmatpush1.msra.mxu0 0.0
    %2136 = vmatprep.subr.mxu0 0.0
    %2137 = vmatpush1.msra.mxu0 0.0
    %2138 = vmatprep.mubr.f32.mxu0 0.0
    %2139 = vmatmul.mubr.f32.gmra.mrb[0].mxu0 %v2056
    %v2140 = vpop.f32.mrb[0].mxu0
    %v2141 = vadd.f32 0.0, %v2140
    %v2142 = vpop.f32.mrb[0].mxu0
    %2143 = vdwg.mxu0
    %v2144 = vld [vmem:[#allocation2 + $0x28] sm:$0xff]
    %v2145 = vadd.f32 %v2144, %v2141
    %v2146 = vxor.u32 %v2145, 2147483648
    %v2147 = vmul.f32 %v2146, 1.442695
    %v2148 = vpow.pop %v2147
    %v2149 = vadd.f32 %v2148, 1.0
    %v2150 = vrcp.pop %v2149
    %v2151 = vmul.f32 1.0, %v2150
    %v2152 = vadd.f32 %v2141, %v1531
    %2154 = vrot.lane.b32.xlu0 %v2152, 64
    %v2155 = vpop.permute.xlu0 %2154
    %v2157 = vmul.f32 %v2151, %v2155
    %2159 = vrot.lane.b32.xlu0 %v2157, 64
    %v2160 = vpop.permute.xlu0 %2159
    %v2162 = vadd.f32 %v2144, %v2160
    %v2163 = vtanh.pop %v2162
    %v2164 = vsub.f32 %v2051, %v2163
    %2166 = vrot.lane.b32.xlu0 %v2164, 96
    %v2167 = vpop.permute.xlu0 %2166
    %v2169 = vmul.f32 %v2151, %v2167
    %2171 = vrot.lane.b32.xlu0 %v2169, 32
    %v2172 = vpop.permute.xlu0 %2171
    %v2174 = vadd.f32 %v2163, %v2172
    %2176 = vrot.lane.b32.xlu0 %v2174, 64
    %v2177 = vpop.permute.xlu0 %2176
    %v2179 = vsel %vm419, %v2177, 0.0
    %2180 = vst [vmem:[#allocation4 + $0x28] sm:$0xff] %v2179
    %v2181 = vld [vmem:[#allocation10] sm:$0xff]
    %v2182 = vld [vmem:[#allocation10 + $0x8] sm:$0xff]
    %v2183 = vld [vmem:[#allocation10 + $0x10] sm:$0xff]
    %v2184 = vld [vmem:[#allocation10 + $0x18] sm:$0xff]
    %v2185 = vld [vmem:[#allocation10 + $0x20] sm:$0xff]
    %v2186 = vld [vmem:[#allocation10 + $0x28] sm:$0xff]
    %v2187 = vld [vmem:[#allocation10 + $0x30] sm:$0xff]
    %v2188 = vld [vmem:[#allocation10 + $0x38] sm:$0xff]
    %v2189 = vld [vmem:[#allocation10 + $0x40] sm:$0xff]
    %v2190 = vld [vmem:[#allocation10 + $0x48] sm:$0xff]
    %v2191 = vld [vmem:[#allocation10 + $0x50] sm:$0xff]
    %v2192 = vld [vmem:[#allocation10 + $0x58] sm:$0xff]
    %v2193 = vld [vmem:[#allocation10 + $0x60] sm:$0xff]
    %v2194 = vld [vmem:[#allocation10 + $0x68] sm:$0xff]
    %v2195 = vld [vmem:[#allocation10 + $0x70] sm:$0xff]
    %v2196 = vld [vmem:[#allocation10 + $0x78] sm:$0xff]
    %2197 = vmatprep.subr.mxu0 0.0
    %2198 = vmatpush1.msra.mxu0 %v2181
    %2199 = vmatprep.subr.mxu0 0.0
    %2200 = vmatpush1.msra.mxu0 %v2182
    %2201 = vmatprep.subr.mxu0 0.0
    %2202 = vmatpush1.msra.mxu0 %v2183
    %2203 = vmatprep.subr.mxu0 0.0
    %2204 = vmatpush1.msra.mxu0 %v2184
    %2205 = vmatprep.subr.mxu0 0.0
    %2206 = vmatpush1.msra.mxu0 %v2185
    %2207 = vmatprep.subr.mxu0 0.0
    %2208 = vmatpush1.msra.mxu0 %v2186
    %2209 = vmatprep.subr.mxu0 0.0
    %2210 = vmatpush1.msra.mxu0 %v2187
    %2211 = vmatprep.subr.mxu0 0.0
    %2212 = vmatpush1.msra.mxu0 %v2188
    %2213 = vmatprep.subr.mxu0 0.0
    %2214 = vmatpush1.msra.mxu0 %v2189
    %2215 = vmatprep.subr.mxu0 0.0
    %2216 = vmatpush1.msra.mxu0 %v2190
    %2217 = vmatprep.subr.mxu0 0.0
    %2218 = vmatpush1.msra.mxu0 %v2191
    %2219 = vmatprep.subr.mxu0 0.0
    %2220 = vmatpush1.msra.mxu0 %v2192
    %2221 = vmatprep.subr.mxu0 0.0
    %2222 = vmatpush1.msra.mxu0 %v2193
    %2223 = vmatprep.subr.mxu0 0.0
    %2224 = vmatpush1.msra.mxu0 %v2194
    %2225 = vmatprep.subr.mxu0 0.0
    %2226 = vmatpush1.msra.mxu0 %v2195
    %2227 = vmatprep.subr.mxu0 0.0
    %2228 = vmatpush1.msra.mxu0 %v2196
    %2229 = vmatprep.subr.mxu0 0.0
    %2230 = vmatpush1.msra.mxu0 0.0
    %2231 = vmatprep.subr.mxu0 0.0
    %2232 = vmatpush1.msra.mxu0 0.0
    %2233 = vmatprep.subr.mxu0 0.0
    %2234 = vmatpush1.msra.mxu0 0.0
    %2235 = vmatprep.subr.mxu0 0.0
    %2236 = vmatpush1.msra.mxu0 0.0
    %2237 = vmatprep.subr.mxu0 0.0
    %2238 = vmatpush1.msra.mxu0 0.0
    %2239 = vmatprep.subr.mxu0 0.0
    %2240 = vmatpush1.msra.mxu0 0.0
    %2241 = vmatprep.subr.mxu0 0.0
    %2242 = vmatpush1.msra.mxu0 0.0
    %2243 = vmatprep.subr.mxu0 0.0
    %2244 = vmatpush1.msra.mxu0 0.0
    %2245 = vmatprep.subr.mxu0 0.0
    %2246 = vmatpush1.msra.mxu0 0.0
    %2247 = vmatprep.subr.mxu0 0.0
    %2248 = vmatpush1.msra.mxu0 0.0
    %2249 = vmatprep.subr.mxu0 0.0
    %2250 = vmatpush1.msra.mxu0 0.0
    %2251 = vmatprep.subr.mxu0 0.0
    %2252 = vmatpush1.msra.mxu0 0.0
    %2253 = vmatprep.subr.mxu0 0.0
    %2254 = vmatpush1.msra.mxu0 0.0
    %2255 = vmatprep.subr.mxu0 0.0
    %2256 = vmatpush1.msra.mxu0 0.0
    %2257 = vmatprep.subr.mxu0 0.0
    %2258 = vmatpush1.msra.mxu0 0.0
    %2259 = vmatprep.subr.mxu0 0.0
    %2260 = vmatpush1.msra.mxu0 0.0
    %2261 = vmatprep.mubr.f32.mxu0 0.0
    %2262 = vmatmul.mubr.f32.gmra.mrb[0].mxu0 %v2179
    %v2263 = vpop.f32.mrb[0].mxu0
    %v2264 = vadd.f32 0.0, %v2263
    %v2265 = vpop.f32.mrb[0].mxu0
    %2266 = vdwg.mxu0
    %v2267 = vld [vmem:[#allocation2 + $0x30] sm:$0xff]
    %v2268 = vadd.f32 %v2267, %v2264
    %v2269 = vxor.u32 %v2268, 2147483648
    %v2270 = vmul.f32 %v2269, 1.442695
    %v2271 = vpow.pop %v2270
    %v2272 = vadd.f32 %v2271, 1.0
    %v2273 = vrcp.pop %v2272
    %v2274 = vmul.f32 1.0, %v2273
    %v2275 = vadd.f32 %v2264, %v1531
    %2277 = vrot.lane.b32.xlu0 %v2275, 64
    %v2278 = vpop.permute.xlu0 %2277
    %v2280 = vmul.f32 %v2274, %v2278
    %2282 = vrot.lane.b32.xlu0 %v2280, 64
    %v2283 = vpop.permute.xlu0 %2282
    %v2285 = vadd.f32 %v2267, %v2283
    %v2286 = vtanh.pop %v2285
    %v2287 = vsub.f32 %v2174, %v2286
    %2289 = vrot.lane.b32.xlu0 %v2287, 96
    %v2290 = vpop.permute.xlu0 %2289
    %v2292 = vmul.f32 %v2274, %v2290
    %2294 = vrot.lane.b32.xlu0 %v2292, 32
    %v2295 = vpop.permute.xlu0 %2294
    %v2297 = vadd.f32 %v2286, %v2295
    %2299 = vrot.lane.b32.xlu0 %v2297, 64
    %v2300 = vpop.permute.xlu0 %2299
    %v2302 = vsel %vm419, %v2300, 0.0
    %2303 = vst [vmem:[#allocation4 + $0x30] sm:$0xff] %v2302
    %v2304 = vld [vmem:[#allocation10] sm:$0xff]
    %v2305 = vld [vmem:[#allocation10 + $0x8] sm:$0xff]
    %v2306 = vld [vmem:[#allocation10 + $0x10] sm:$0xff]
    %v2307 = vld [vmem:[#allocation10 + $0x18] sm:$0xff]
    %v2308 = vld [vmem:[#allocation10 + $0x20] sm:$0xff]
    %v2309 = vld [vmem:[#allocation10 + $0x28] sm:$0xff]
    %v2310 = vld [vmem:[#allocation10 + $0x30] sm:$0xff]
    %v2311 = vld [vmem:[#allocation10 + $0x38] sm:$0xff]
    %v2312 = vld [vmem:[#allocation10 + $0x40] sm:$0xff]
    %v2313 = vld [vmem:[#allocation10 + $0x48] sm:$0xff]
    %v2314 = vld [vmem:[#allocation10 + $0x50] sm:$0xff]
    %v2315 = vld [vmem:[#allocation10 + $0x58] sm:$0xff]
    %v2316 = vld [vmem:[#allocation10 + $0x60] sm:$0xff]
    %v2317 = vld [vmem:[#allocation10 + $0x68] sm:$0xff]
    %v2318 = vld [vmem:[#allocation10 + $0x70] sm:$0xff]
    %v2319 = vld [vmem:[#allocation10 + $0x78] sm:$0xff]
    %2320 = vmatprep.subr.mxu0 0.0
    %2321 = vmatpush1.msra.mxu0 %v2304
    %2322 = vmatprep.subr.mxu0 0.0
    %2323 = vmatpush1.msra.mxu0 %v2305
    %2324 = vmatprep.subr.mxu0 0.0
    %2325 = vmatpush1.msra.mxu0 %v2306
    %2326 = vmatprep.subr.mxu0 0.0
    %2327 = vmatpush1.msra.mxu0 %v2307
    %2328 = vmatprep.subr.mxu0 0.0
    %2329 = vmatpush1.msra.mxu0 %v2308
    %2330 = vmatprep.subr.mxu0 0.0
    %2331 = vmatpush1.msra.mxu0 %v2309
    %2332 = vmatprep.subr.mxu0 0.0
    %2333 = vmatpush1.msra.mxu0 %v2310
    %2334 = vmatprep.subr.mxu0 0.0
    %2335 = vmatpush1.msra.mxu0 %v2311
    %2336 = vmatprep.subr.mxu0 0.0
    %2337 = vmatpush1.msra.mxu0 %v2312
    %2338 = vmatprep.subr.mxu0 0.0
    %2339 = vmatpush1.msra.mxu0 %v2313
    %2340 = vmatprep.subr.mxu0 0.0
    %2341 = vmatpush1.msra.mxu0 %v2314
    %2342 = vmatprep.subr.mxu0 0.0
    %2343 = vmatpush1.msra.mxu0 %v2315
    %2344 = vmatprep.subr.mxu0 0.0
    %2345 = vmatpush1.msra.mxu0 %v2316
    %2346 = vmatprep.subr.mxu0 0.0
    %2347 = vmatpush1.msra.mxu0 %v2317
    %2348 = vmatprep.subr.mxu0 0.0
    %2349 = vmatpush1.msra.mxu0 %v2318
    %2350 = vmatprep.subr.mxu0 0.0
    %2351 = vmatpush1.msra.mxu0 %v2319
    %2352 = vmatprep.subr.mxu0 0.0
    %2353 = vmatpush1.msra.mxu0 0.0
    %2354 = vmatprep.subr.mxu0 0.0
    %2355 = vmatpush1.msra.mxu0 0.0
    %2356 = vmatprep.subr.mxu0 0.0
    %2357 = vmatpush1.msra.mxu0 0.0
    %2358 = vmatprep.subr.mxu0 0.0
    %2359 = vmatpush1.msra.mxu0 0.0
    %2360 = vmatprep.subr.mxu0 0.0
    %2361 = vmatpush1.msra.mxu0 0.0
    %2362 = vmatprep.subr.mxu0 0.0
    %2363 = vmatpush1.msra.mxu0 0.0
    %2364 = vmatprep.subr.mxu0 0.0
    %2365 = vmatpush1.msra.mxu0 0.0
    %2366 = vmatprep.subr.mxu0 0.0
    %2367 = vmatpush1.msra.mxu0 0.0
    %2368 = vmatprep.subr.mxu0 0.0
    %2369 = vmatpush1.msra.mxu0 0.0
    %2370 = vmatprep.subr.mxu0 0.0
    %2371 = vmatpush1.msra.mxu0 0.0
    %2372 = vmatprep.subr.mxu0 0.0
    %2373 = vmatpush1.msra.mxu0 0.0
    %2374 = vmatprep.subr.mxu0 0.0
    %2375 = vmatpush1.msra.mxu0 0.0
    %2376 = vmatprep.subr.mxu0 0.0
    %2377 = vmatpush1.msra.mxu0 0.0
    %2378 = vmatprep.subr.mxu0 0.0
    %2379 = vmatpush1.msra.mxu0 0.0
    %2380 = vmatprep.subr.mxu0 0.0
    %2381 = vmatpush1.msra.mxu0 0.0
    %2382 = vmatprep.subr.mxu0 0.0
    %2383 = vmatpush1.msra.mxu0 0.0
    %2384 = vmatprep.mubr.f32.mxu0 0.0
    %2385 = vmatmul.mubr.f32.gmra.mrb[0].mxu0 %v2302
    %v2386 = vpop.f32.mrb[0].mxu0
    %v2387 = vadd.f32 0.0, %v2386
    %v2388 = vpop.f32.mrb[0].mxu0
    %2389 = vdwg.mxu0
    %v2390 = vld [vmem:[#allocation2 + $0x38] sm:$0xff]
    %v2391 = vadd.f32 %v2390, %v2387
    %v2392 = vxor.u32 %v2391, 2147483648
    %v2393 = vmul.f32 %v2392, 1.442695
    %v2394 = vpow.pop %v2393
    %v2395 = vadd.f32 %v2394, 1.0
    %v2396 = vrcp.pop %v2395
    %v2397 = vmul.f32 1.0, %v2396
    %v2398 = vadd.f32 %v2387, %v1531
    %2400 = vrot.lane.b32.xlu0 %v2398, 64
    %v2401 = vpop.permute.xlu0 %2400
    %v2403 = vmul.f32 %v2397, %v2401
    %2405 = vrot.lane.b32.xlu0 %v2403, 64
    %v2406 = vpop.permute.xlu0 %2405
    %v2408 = vadd.f32 %v2390, %v2406
    %v2409 = vtanh.pop %v2408
    %v2410 = vsub.f32 %v2297, %v2409
    %2412 = vrot.lane.b32.xlu0 %v2410, 96
    %v2413 = vpop.permute.xlu0 %2412
    %v2415 = vmul.f32 %v2397, %v2413
    %2417 = vrot.lane.b32.xlu0 %v2415, 32
    %v2418 = vpop.permute.xlu0 %2417
    %v2420 = vadd.f32 %v2409, %v2418
    %2422 = vrot.lane.b32.xlu0 %v2420, 64
    %v2423 = vpop.permute.xlu0 %2422
    %v2425 = vsel %vm419, %v2423, 0.0
    %2426 = vst [vmem:[#allocation4 + $0x38] sm:$0xff] %v2425
    %s2427 = scalar_lea.vmem %s13, 8
    %2428 = vst [vmem:[%s2427] sm:$0xff] %v2425
    %v2429 = vld [vmem:[#allocation4] sm:$0xff]
    %v2430 = vld [vmem:[#allocation4 + $0x8] sm:$0xff]
    %v2431 = vld [vmem:[#allocation4 + $0x10] sm:$0xff]
    %v2432 = vld [vmem:[#allocation4 + $0x18] sm:$0xff]
    %v2433 = vld [vmem:[#allocation4 + $0x20] sm:$0xff]
    %v2434 = vld [vmem:[#allocation4 + $0x28] sm:$0xff]
    %v2435 = vld [vmem:[#allocation4 + $0x30] sm:$0xff]
    %v2436 = vld [vmem:[#allocation4 + $0x38] sm:$0xff]
    %v2437 = vld [vmem:[%s10] sm:$0xff]
    %v2438 = vld [vmem:[%s10 + $0x8] sm:$0xff]
    %v2439 = vld [vmem:[%s10 + $0x10] sm:$0xff]
    %v2440 = vld [vmem:[%s10 + $0x18] sm:$0xff]
    %v2441 = vld [vmem:[%s10 + $0x20] sm:$0xff]
    %v2442 = vld [vmem:[%s10 + $0x28] sm:$0xff]
    %v2443 = vld [vmem:[%s10 + $0x30] sm:$0xff]
    %v2444 = vld [vmem:[%s10 + $0x38] sm:$0xff]
    %v2445 = vld [vmem:[%s10 + $0x40] sm:$0xff]
    %v2446 = vld [vmem:[%s10 + $0x48] sm:$0xff]
    %v2447 = vld [vmem:[%s10 + $0x50] sm:$0xff]
    %v2448 = vld [vmem:[%s10 + $0x58] sm:$0xff]
    %v2449 = vld [vmem:[%s10 + $0x60] sm:$0xff]
    %v2450 = vld [vmem:[%s10 + $0x68] sm:$0xff]
    %v2451 = vld [vmem:[%s10 + $0x70] sm:$0xff]
    %v2452 = vld [vmem:[%s10 + $0x78] sm:$0xff]
    %v2453 = vld [vmem:[%s11] sm:$0x1]
    %v2455 = vlaneseq
    %v2456 = vshrl.u32 %v2455, 7
    %v2457 = vsub.s32 0, %v2456
    %v2458 = vrot.slane %v2453, %v2457
    %2460 = vmatprep.subr.mxu0 0.0
    %2461 = vmatpush1.msra.mxu0 %v2437
    %2462 = vmatprep.subr.mxu0 0.0
    %2463 = vmatpush1.msra.mxu0 %v2438
    %2464 = vmatprep.subr.mxu0 0.0
    %2465 = vmatpush1.msra.mxu0 %v2439
    %2466 = vmatprep.subr.mxu0 0.0
    %2467 = vmatpush1.msra.mxu0 %v2440
    %2468 = vmatprep.subr.mxu0 0.0
    %2469 = vmatpush1.msra.mxu0 %v2441
    %2470 = vmatprep.subr.mxu0 0.0
    %2471 = vmatpush1.msra.mxu0 %v2442
    %2472 = vmatprep.subr.mxu0 0.0
    %2473 = vmatpush1.msra.mxu0 %v2443
    %2474 = vmatprep.subr.mxu0 0.0
    %2475 = vmatpush1.msra.mxu0 %v2444
    %2476 = vmatprep.subr.mxu0 0.0
    %2477 = vmatpush1.msra.mxu0 %v2445
    %2478 = vmatprep.subr.mxu0 0.0
    %2479 = vmatpush1.msra.mxu0 %v2446
    %2480 = vmatprep.subr.mxu0 0.0
    %2481 = vmatpush1.msra.mxu0 %v2447
    %2482 = vmatprep.subr.mxu0 0.0
    %2483 = vmatpush1.msra.mxu0 %v2448
    %2484 = vmatprep.subr.mxu0 0.0
    %2485 = vmatpush1.msra.mxu0 %v2449
    %2486 = vmatprep.subr.mxu0 0.0
    %2487 = vmatpush1.msra.mxu0 %v2450
    %2488 = vmatprep.subr.mxu0 0.0
    %2489 = vmatpush1.msra.mxu0 %v2451
    %2490 = vmatprep.subr.mxu0 0.0
    %2491 = vmatpush1.msra.mxu0 %v2452
    %2492 = vmatprep.subr.mxu0 0.0
    %2493 = vmatpush1.msra.mxu0 0.0
    %2494 = vmatprep.subr.mxu0 0.0
    %2495 = vmatpush1.msra.mxu0 0.0
    %2496 = vmatprep.subr.mxu0 0.0
    %2497 = vmatpush1.msra.mxu0 0.0
    %2498 = vmatprep.subr.mxu0 0.0
    %2499 = vmatpush1.msra.mxu0 0.0
    %2500 = vmatprep.subr.mxu0 0.0
    %2501 = vmatpush1.msra.mxu0 0.0
    %2502 = vmatprep.subr.mxu0 0.0
    %2503 = vmatpush1.msra.mxu0 0.0
    %2504 = vmatprep.subr.mxu0 0.0
    %2505 = vmatpush1.msra.mxu0 0.0
    %2506 = vmatprep.subr.mxu0 0.0
    %2507 = vmatpush1.msra.mxu0 0.0
    %2508 = vmatprep.subr.mxu0 0.0
    %2509 = vmatpush1.msra.mxu0 0.0
    %2510 = vmatprep.subr.mxu0 0.0
    %2511 = vmatpush1.msra.mxu0 0.0
    %2512 = vmatprep.subr.mxu0 0.0
    %2513 = vmatpush1.msra.mxu0 0.0
    %2514 = vmatprep.subr.mxu0 0.0
    %2515 = vmatpush1.msra.mxu0 0.0
    %2516 = vmatprep.subr.mxu0 0.0
    %2517 = vmatpush1.msra.mxu0 0.0
    %2518 = vmatprep.subr.mxu0 0.0
    %2519 = vmatpush1.msra.mxu0 0.0
    %2520 = vmatprep.subr.mxu0 0.0
    %2521 = vmatpush1.msra.mxu0 0.0
    %2522 = vmatprep.subr.mxu0 0.0
    %2523 = vmatpush1.msra.mxu0 0.0
    %2524 = vmatprep.mubr.f32.mxu0 0.0
    %2525 = vmatmul.mubr.f32.gmra.mrb[0].mxu0 %v2429
    %v2526 = vpop.f32.mrb[0].mxu0
    %v2527 = vadd.f32 %v2458, %v2526
    %v2528 = vpop.f32.mrb[0].mxu0
    %2529 = vmatprep.mubr.f32.mxu0 0.0
    %2530 = vmatmul.mubr.f32.gmra.mrb[0].mxu0 %v2430
    %v2531 = vpop.f32.mrb[0].mxu0
    %v2532 = vadd.f32 %v2458, %v2531
    %v2533 = vpop.f32.mrb[0].mxu0
    %2534 = vmatprep.mubr.f32.mxu0 0.0
    %2535 = vmatmul.mubr.f32.gmra.mrb[0].mxu0 %v2431
    %v2536 = vpop.f32.mrb[0].mxu0
    %v2537 = vadd.f32 %v2458, %v2536
    %v2538 = vpop.f32.mrb[0].mxu0
    %2539 = vmatprep.mubr.f32.mxu0 0.0
    %2540 = vmatmul.mubr.f32.gmra.mrb[0].mxu0 %v2432
    %v2541 = vpop.f32.mrb[0].mxu0
    %v2542 = vadd.f32 %v2458, %v2541
    %v2543 = vpop.f32.mrb[0].mxu0
    %2544 = vmatprep.mubr.f32.mxu0 0.0
    %2545 = vmatmul.mubr.f32.gmra.mrb[0].mxu0 %v2433
    %v2546 = vpop.f32.mrb[0].mxu0
    %v2547 = vadd.f32 %v2458, %v2546
    %v2548 = vpop.f32.mrb[0].mxu0
    %2549 = vmatprep.mubr.f32.mxu0 0.0
    %2550 = vmatmul.mubr.f32.gmra.mrb[0].mxu0 %v2434
    %v2551 = vpop.f32.mrb[0].mxu0
    %v2552 = vadd.f32 %v2458, %v2551
    %v2553 = vpop.f32.mrb[0].mxu0
    %2554 = vmatprep.mubr.f32.mxu0 0.0
    %2555 = vmatmul.mubr.f32.gmra.mrb[0].mxu0 %v2435
    %v2556 = vpop.f32.mrb[0].mxu0
    %v2557 = vadd.f32 %v2458, %v2556
    %v2558 = vpop.f32.mrb[0].mxu0
    %2559 = vmatprep.mubr.f32.mxu0 0.0
    %2560 = vmatmul.mubr.f32.gmra.mrb[0].mxu0 %v2436
    %v2561 = vpop.f32.mrb[0].mxu0
    %v2562 = vadd.f32 %v2458, %v2561
    %v2563 = vpop.f32.mrb[0].mxu0
    %2564 = vdwg.mxu0
    %2565 = vst [vmem:[%s12] sm:$0xff] %v2527
    %2566 = vst [vmem:[%s12 + $0x8] sm:$0xff] %v2532
    %2567 = vst [vmem:[%s12 + $0x10] sm:$0xff] %v2537
    %2568 = vst [vmem:[%s12 + $0x18] sm:$0xff] %v2542
    %2569 = vst [vmem:[%s12 + $0x20] sm:$0xff] %v2547
    %2570 = vst [vmem:[%s12 + $0x28] sm:$0xff] %v2552
    %2571 = vst [vmem:[%s12 + $0x30] sm:$0xff] %v2557
    %2572 = vst [vmem:[%s12 + $0x38] sm:$0xff] %v2562
    // Predicated region
    $region66: #{gru_forward.1} parent=1 // pred_check
      _
    $region67: #{gru_forward.1} parent=1 // pred_check_branch
      %2574 = sbr.rel (0) target = $region69
    $region68: #{gru_forward.1} parent=1 // pred_region
      _
    $region69: #{gru_forward.1} parent=1 // pred_fallthru
      _
    // Predicated region
    $region70: #{gru_forward.1} parent=1 // pred_check
      _
    $region71: #{gru_forward.1} parent=1 // pred_check_branch
      %2576 = sbr.rel (0) target = $region73
    $region72: #{gru_forward.1} parent=1 // pred_region
      _
    $region73: #{gru_forward.1} parent=1 // pred_fallthru
      _
    // Predicated region
    $region74: #{gru_forward.1} parent=1 // pred_check
      _
    $region75: #{gru_forward.1} parent=1 // pred_check_branch
      %2578 = sbr.rel (0) target = $region77
    $region76: #{gru_forward.1} parent=1 // pred_region
      _
    $region77: #{gru_forward.1} parent=1 // pred_fallthru
      _
    // Predicated region
    $region78: #{gru_forward.1} parent=1 // pred_check
      _
    $region79: #{gru_forward.1} parent=1 // pred_check_branch
      %2580 = sbr.rel (0) target = $region81
    $region80: #{gru_forward.1} parent=1 // pred_region
      _
    $region81: #{gru_forward.1} parent=1 // pred_fallthru
      _
    %2581 = vsyncpa [#allocation6], 1
    %2582 = vsyncpa [#allocation8], 1
    %2583 = vsyncpa [#allocation11], 1

</llo_original>
